<compile_context>
chip_gen: v6e
topology: v6e:2x2x1
jax: 0.10.0
libtpu: 0.0.40
codegen_flags: <defaults>
</compile_context>

<pallas_src>
import math
import jax
import jax.numpy as jnp
from jax import lax
from jax.experimental import pallas as pl
from jax.experimental.pallas import tpu as pltpu


# ------------------------------ small helpers --------------------------------

def _pad_rows_to(a, mult, axis):
    """Zero-pad `axis` of `a` up to a multiple of `mult`."""
    pad = (-a.shape[axis]) % mult
    if pad == 0:
        return a
    widths = [(0, 0)] * a.ndim
    widths[axis] = (0, pad)
    return jnp.pad(a, widths)


# ------------------------------ in_proj kernel --------------------------------
# One M-tiled kernel, two outputs (x-part and z) -> no XLA slice pass afterwards.

def _in_proj_kernel(x_ref, wx_ref, wz_ref, xo_ref, zo_ref):
    xb = x_ref[...].astype(jnp.bfloat16)          # bf16 MXU operands, f32 accumulate
    xo_ref[...] = jnp.dot(xb, wx_ref[...], preferred_element_type=jnp.float32)
    zo_ref[...] = jnp.dot(xb, wz_ref[...], preferred_element_type=jnp.float32)


def in_proj(x, wx_bf16, wz_bf16):
    M0, Kin = x.shape
    x = _pad_rows_to(x, 128, 0)
    M = x.shape[0]
    d = wx_bf16.shape[1]
    tm = 128
    xo, zo = pl.pallas_call(
        _in_proj_kernel,
        out_shape=(jax.ShapeDtypeStruct((M, d), jnp.float32),
                   jax.ShapeDtypeStruct((M, d), jnp.float32)),
        grid=(M // tm,),
        in_specs=[pl.BlockSpec((tm, Kin), lambda i: (i, 0)),
                  pl.BlockSpec((Kin, d), lambda i: (0, 0)),
                  pl.BlockSpec((Kin, d), lambda i: (0, 0))],
        out_specs=(pl.BlockSpec((tm, d), lambda i: (i, 0)),
                   pl.BlockSpec((tm, d), lambda i: (i, 0))),
        compiler_params=pltpu.CompilerParams(
            dimension_semantics=("parallel",)),
    )(x, wx_bf16, wz_bf16)
    return xo[:M0], zo[:M0]


# ---------------------- fused x_proj + dt_proj kernel --------------------------
# Per direction k: dt = x @ Wdt, bc = x @ Wbc (B/C columns interleaved so the
# caller's reshape to [K, B, L, N, 2] is a free metadata reshape).

def _xproj_kernel(x_ref, wdt_ref, wbc_ref, dt_ref, bc_ref):
    xb = x_ref[...].astype(jnp.bfloat16)
    dt_ref[...] = jnp.dot(xb, wdt_ref[...], preferred_element_type=jnp.float32)
    bc_ref[...] = jnp.dot(xb, wbc_ref[...], preferred_element_type=jnp.float32)


def x_proj(xs, wdt_bf16, wbc_bf16):
    K, M0, d = xs.shape
    xs = _pad_rows_to(xs, 128, 1)
    M = xs.shape[1]
    nbc = wbc_bf16.shape[2]
    tm = 128
    dts, bcs = pl.pallas_call(
        _xproj_kernel,
        out_shape=(jax.ShapeDtypeStruct((K, M, d), jnp.float32),
                   jax.ShapeDtypeStruct((K, M, nbc), jnp.float32)),
        grid=(K, M // tm),
        in_specs=[pl.BlockSpec((None, tm, d), lambda k, i: (k, i, 0)),
                  pl.BlockSpec((None, d, d), lambda k, i: (k, 0, 0)),
                  pl.BlockSpec((None, d, nbc), lambda k, i: (k, 0, 0))],
        out_specs=(pl.BlockSpec((None, tm, d), lambda k, i: (k, i, 0)),
                   pl.BlockSpec((None, tm, nbc), lambda k, i: (k, i, 0))),
        compiler_params=pltpu.CompilerParams(
            dimension_semantics=("parallel", "parallel")),
    )(xs, wdt_bf16, wbc_bf16)
    return dts[:, :M0], bcs[:, :M0]


# ---------------------- depthwise 3x3 conv + SiLU (NHWC) ----------------------
# No HBM pad pass: the 1-px halo is built in-register from zero rows/columns.
# Channel-tiled (lane axis) so the per-step VMEM block stays small on v7x.

def _dwconv_silu_kernel(x_ref, w_ref, b_ref, o_ref):
    H, W, C = o_ref.shape
    x = x_ref[...]                      # [H, W, C]
    w = w_ref[...]                      # [3, 3, C]
    zrow = jnp.zeros((1, W, C), jnp.float32)
    zcol = jnp.zeros((H, 1, C), jnp.float32)
    acc = jnp.zeros((H, W, C), jnp.float32)
    # TODO(synk): for very large H*W with d_inner % 128 != 0, add H-row tiling with a
    # 1-row halo (manual DMA) and move the W shifts onto pltpu.roll (XLU slot).
    for i in range(3):                  # tap row: needs x[h + i - 1]
        if i == 0:
            xr = jnp.concatenate([zrow, x[:H - 1]], axis=0)
        elif i == 1:
            xr = x
        else:
            xr = jnp.concatenate([x[1:], zrow], axis=0)
        for j in range(3):              # tap col: needs xr[:, w + j - 1]
            if j == 0:
                term = jnp.concatenate([zcol, xr[:, :W - 1, :]], axis=1)
            elif j == 1:
                term = xr
            else:
                term = jnp.concatenate([xr[:, 1:, :], zcol], axis=1)
            acc = acc + term * w[i, j, :]
    acc = acc + b_ref[0, :]
    o_ref[...] = acc * jax.nn.sigmoid(acc)      # SiLU


def dwconv3x3_silu(x_nhwc, w33c, bias_c):
    B, H, W, C = x_nhwc.shape
    TC = 128 if C % 128 == 0 else C
    return pl.pallas_call(
        _dwconv_silu_kernel,
        out_shape=jax.ShapeDtypeStruct((B, H, W, C), jnp.float32),
        grid=(B, C // TC),
        in_specs=[pl.BlockSpec((None, H, W, TC), lambda b, c: (b, 0, 0, c)),
                  pl.BlockSpec((3, 3, TC), lambda b, c: (0, 0, c)),
                  pl.BlockSpec((1, TC), lambda b, c: (0, c))],
        out_specs=pl.BlockSpec((None, H, W, TC), lambda b, c: (b, 0, 0, c)),
        compiler_params=pltpu.CompilerParams(
            dimension_semantics=("parallel", "parallel"),
            vmem_limit_bytes=64 << 20),
    )(x_nhwc, w33c, bias_c.reshape(1, C))


# ------------------------------ selective scan --------------------------------
# grid = (K, B, L/LT); per grid step (one direction, one batch element, one L tile):
#   u, dt, y : [LT, d_inner]      (d_inner on the lane axis)
#   bc       : [LT, N, 2]         (B/C values, N already on the sublane axis)
#   A        : [N, d_inner],  Ds / dt_bias : [1, d_inner]
#   h        : VMEM scratch [N, d_inner], carried across the L grid axis

def _scan_kernel(u_ref, dt_ref, bc_ref, A_ref, db_ref, Ds_ref, y_ref,
                 h_ref, dl_ref):
    T, D = u_ref.shape
    N = A_ref.shape[0]
    if T % 8 == 0:
        CH = 8
    elif T % 4 == 0:
        CH = 4
    elif T % 2 == 0:
        CH = 2
    else:
        CH = 1
    n_chunks = T // CH

    # reset the carried state at the first L-tile of every (direction, batch) pair
    @pl.when(pl.program_id(2) == 0)
    def _():
        h_ref[...] = jnp.zeros_like(h_ref)

    # vectorized pre-pass: softplus(dt + bias) hoisted off the serial chain
    dl_ref[...] = jax.nn.softplus(dt_ref[...] + db_ref[0, :])     # [T, D]

    A = A_ref[...]                       # [N, D]  (hoisted, reused every step)
    Ds_row = Ds_ref[...]                 # [1, D]

    def chunk(ci, h):
        base = pl.multiple_of(ci * CH, CH)
        rows = []
        for j in range(CH):              # static unroll -> scheduler visibility
            t = base + j
            u_t = u_ref[pl.ds(t, 1), :]                   # [1, D]
            dl_t = dl_ref[pl.ds(t, 1), :]                 # [1, D]
            bc_t = bc_ref[t]                              # [N, 2]
            b_t = jnp.broadcast_to(bc_t[:, 0:1], (N, D))  # lane splat (off-chain)
            c_t = jnp.broadcast_to(bc_t[:, 1:2], (N, D))
            dA_t = jnp.exp(A * dl_t)                      # [N, D], input-only
            h = dA_t * h + (dl_t * u_t) * b_t             # recurrence: VPU only
            rows.append(jnp.sum(h * c_t, axis=0, keepdims=True) + u_t * Ds_row)
        # one aligned (CH, D) store per chunk instead of CH masked row stores
        y_ref[pl.ds(base, CH), :] = jnp.concatenate(rows, axis=0)
        return h

    h_ref[...] = lax.fori_loop(0, n_chunks, chunk, h_ref[...])


def selective_scan(u, dt, bc, A_knd, db_k, Ds_k):
    K, B, L, d = u.shape
    N = A_knd.shape[1]
    LT = L
    for cand in (128, 64, 32, 16, 8):
        if L % cand == 0:
            LT = cand
            break
    return pl.pallas_call(
        _scan_kernel,
        out_shape=jax.ShapeDtypeStruct((K, B, L, d), jnp.float32),
        grid=(K, B, L // LT),
        in_specs=[
            pl.BlockSpec((None, None, LT, d), lambda k, b, l: (k, b, l, 0)),
            pl.BlockSpec((None, None, LT, d), lambda k, b, l: (k, b, l, 0)),
            pl.BlockSpec((None, None, LT, N, 2), lambda k, b, l: (k, b, l, 0, 0)),
            pl.BlockSpec((None, N, d), lambda k, b, l: (k, 0, 0)),
            pl.BlockSpec((None, 1, d), lambda k, b, l: (k, 0, 0)),
            pl.BlockSpec((None, 1, d), lambda k, b, l: (k, 0, 0)),
        ],
        out_specs=pl.BlockSpec((None, None, LT, d), lambda k, b, l: (k, b, l, 0)),
        scratch_shapes=[pltpu.VMEM((N, d), jnp.float32),    # carried state h
                        pltpu.VMEM((LT, d), jnp.float32)],  # softplus(dt + bias)
        compiler_params=pltpu.CompilerParams(
            dimension_semantics=("parallel", "parallel", "arbitrary"),
            vmem_limit_bytes=64 << 20),
    )(u, dt, bc, A_knd, db_k, Ds_k)


# --------------------- fused LayerNorm * SiLU(z) + out_proj --------------------

def _ln_gate_proj_kernel(y_ref, z_ref, g_ref, b_ref, w_ref, o_ref):
    y = y_ref[...]
    mu = jnp.mean(y, axis=-1, keepdims=True)
    var = jnp.mean(jnp.square(y - mu), axis=-1, keepdims=True)     # biased, like torch
    yn = (y - mu) * lax.rsqrt(var + 1e-5) * g_ref[0, :] + b_ref[0, :]
    z = z_ref[...]
    g = yn * (z * jax.nn.sigmoid(z))
    o_ref[...] = jnp.dot(g.astype(jnp.bfloat16), w_ref[...],
                         preferred_element_type=jnp.float32)


def ln_gate_proj(y, z, gamma, beta, w_t_bf16):
    M0, Din = y.shape
    y = _pad_rows_to(y, 128, 0)
    z = _pad_rows_to(z, 128, 0)
    M = y.shape[0]
    Nout = w_t_bf16.shape[1]
    tm = 128
    out = pl.pallas_call(
        _ln_gate_proj_kernel,
        out_shape=jax.ShapeDtypeStruct((M, Nout), jnp.float32),
        grid=(M // tm,),
        in_specs=[pl.BlockSpec((tm, Din), lambda i: (i, 0)),
                  pl.BlockSpec((tm, Din), lambda i: (i, 0)),
                  pl.BlockSpec((1, Din), lambda i: (0, 0)),
                  pl.BlockSpec((1, Din), lambda i: (0, 0)),
                  pl.BlockSpec((Din, Nout), lambda i: (0, 0))],
        out_specs=pl.BlockSpec((tm, Nout), lambda i: (i, 0)),
        compiler_params=pltpu.CompilerParams(
            dimension_semantics=("parallel",)),
    )(y, z, gamma.reshape(1, Din), beta.reshape(1, Din), w_t_bf16)
    return out[:M0]


# ------------------------------- glue (JAX) ----------------------------------

def local_scan_nhwc(x, H, W, win, flip=False, column_first=False):
    """x: [B, H, W, C] -> [B, L, C]  (windowed scan of LocalMamba, channel-last)."""
    B = x.shape[0]
    C = x.shape[-1]
    Hg, Wg = H // win, W // win
    x = x[:, :Hg * win, :Wg * win, :]
    x = x.reshape(B, Hg, win, Wg, win, C)
    if column_first:
        x = x.transpose(0, 3, 1, 4, 2, 5)    # [B, Wg, Hg, wc, wr, C]
    else:
        x = x.transpose(0, 1, 3, 2, 4, 5)    # [B, Hg, Wg, wr, wc, C]
    x = x.reshape(B, -1, C)
    if flip:
        x = x[:, ::-1, :]
    return x


def ss2d_local_forward(params, x):
    # x: [B, H, W, d_model]
    B, H, W, Cm = x.shape
    d_inner = params['conv_b'].shape[0]
    d_state = params['A_logs'].shape[1]
    dt_rank = params['dt_w'].shape[2]
    K = params['x_proj_w'].shape[0]
    N = d_state
    L = H * W
    M = B * L

    # ---- weight prep (tiny, parameter-only ops): split / fuse / transpose / bf16 ----
    W_in_x = params['W_in'][:d_inner].T.astype(jnp.bfloat16)        # [d_model, d_inner]
    W_in_z = params['W_in'][d_inner:].T.astype(jnp.bfloat16)        # [d_model, d_inner]
    W_out_t = params['W_out'].T.astype(jnp.bfloat16)                # [d_inner, d_model]
    # dt_proj fused into x_proj, pre-transposed to [K, d_in(in), d_in(out)]
    W_dt_t = jnp.einsum('kdr,krc->kcd',
                        params['dt_w'],
                        params['x_proj_w'][:, :dt_rank, :]).astype(jnp.bfloat16)
    # B/C weight columns interleaved so the output reshapes to [..., N, 2] for free
    W_b_t = params['x_proj_w'][:, dt_rank:dt_rank + N, :].transpose(0, 2, 1)
    W_c_t = params['x_proj_w'][:, dt_rank + N:, :].transpose(0, 2, 1)
    W_bc_t = jnp.stack([W_b_t, W_c_t], axis=-1).reshape(K, d_inner, 2 * N)
    W_bc_t = W_bc_t.astype(jnp.bfloat16)
    A_knd = (-jnp.exp(params['A_logs'])).reshape(K, d_inner, N).transpose(0, 2, 1)
    Ds_k = params['Ds'].reshape(K, 1, d_inner)
    db_k = params['dt_bias'].reshape(K, 1, d_inner)
    conv_w = params['conv_w'].transpose(1, 2, 0)                    # [3, 3, d_inner]

    # ---- in_proj (two outputs: conv input and gate z; no XLA slicing) ----
    x_in, z = in_proj(x.reshape(M, Cm), W_in_x, W_in_z)             # [M, d_inner] each
    x_in = x_in.reshape(B, H, W, d_inner)

    # ---- depthwise conv 3x3 + SiLU (NHWC, halo built in-kernel) ----
    x_conv = dwconv3x3_silu(x_in, conv_w, params['conv_b'])

    # ---- four local scans (XLA gather/transpose glue), channel-last layout ----
    win = H // 4
    xs = jnp.stack([
        local_scan_nhwc(x_conv, H, W, win),
        local_scan_nhwc(x_conv, H, W, win, column_first=True),
        local_scan_nhwc(x_conv, H, W, win, flip=True),
        local_scan_nhwc(x_conv, H, W, win, column_first=True, flip=True),
    ], axis=0)                                                      # [K, B, L, d_inner]

    # ---- fused x_proj + dt_proj; outputs already in the scan's layout ----
    dts, bcs = x_proj(xs.reshape(K, M, d_inner), W_dt_t, W_bc_t)
    u = xs                                                          # [K, B, L, d_inner]
    dt = dts.reshape(K, B, L, d_inner)
    bc = bcs.reshape(K, B, L, N, 2)                                 # metadata reshape

    # ---- selective scan (per-direction, L-tiled, carried state) ----
    y = selective_scan(u, dt, bc, A_knd, db_k, Ds_k)                # [K, B, L, d_inner]

    # ---- four-direction recombination (matches the reference forward_core) ----
    y1 = y[0]                                                       # [B, L, d_inner]
    y2 = y[2][:, ::-1, :]
    y3 = y[1].reshape(B, W, H, d_inner).transpose(0, 2, 1, 3).reshape(B, L, d_inner)
    y4 = y[3][:, ::-1, :].reshape(B, W, H, d_inner
                                  ).transpose(0, 2, 1, 3).reshape(B, L, d_inner)
    y_sum = (y1 + y2 + y3 + y4).reshape(M, d_inner)

    # ---- fused out_norm (LayerNorm) * SiLU(z) + out_proj ----
    out = ln_gate_proj(y_sum, z, params['ln_g'], params['ln_b'], W_out_t)
    # TODO(synk): dropout is identity here since the module default is dropout=0.0
    return out.reshape(B, H, W, Cm)


# --------------------------------- main ---------------------------------------

if __name__ == "__main__":
    B, H, W = 2, 16, 16
    d_model, d_state, expand = 4, 16, 2
    d_inner = expand * d_model
    dt_rank = math.ceil(d_model / 16)
    K = 4

    key = jax.random.PRNGKey(0)
    ks = jax.random.split(key, 8)

    dt_min, dt_max, dt_init_floor = 0.001, 0.1, 1e-4
    dt_init_std = dt_rank ** -0.5

    dt = jnp.exp(jax.random.uniform(ks[5], (K, d_inner), jnp.float32) *
                 (math.log(dt_max) - math.log(dt_min)) + math.log(dt_min))
    dt = jnp.maximum(dt, dt_init_floor)
    dt_bias = dt + jnp.log(-jnp.expm1(-dt))          # inverse-softplus init

    params = dict(
        W_in=jax.random.normal(ks[0], (2 * d_inner, d_model), jnp.float32) * 0.2,
        conv_w=jax.random.normal(ks[1], (d_inner, 3, 3), jnp.float32) * 0.2,
        conv_b=jax.random.normal(ks[2], (d_inner,), jnp.float32) * 0.1,
        x_proj_w=jax.random.normal(ks[3], (K, dt_rank + 2 * d_state, d_inner),
                                   jnp.float32) * (d_inner ** -0.5),
        dt_w=jax.random.uniform(ks[4], (K, d_inner, dt_rank), jnp.float32,
                                minval=-dt_init_std, maxval=dt_init_std),
        dt_bias=dt_bias,
        A_logs=jnp.log(jnp.tile(jnp.arange(1, d_state + 1, dtype=jnp.float32),
                                (K * d_inner, 1))),
        Ds=jnp.ones((K * d_inner,), jnp.float32),
        ln_g=jnp.ones((d_inner,), jnp.float32),
        ln_b=jnp.zeros((d_inner,), jnp.float32),
        W_out=jax.random.normal(ks[6], (d_model, d_inner), jnp.float32) * 0.2,
    )

    x = jax.random.normal(ks[7], (B, H, W, d_model), jnp.float32)

    out = jax.jit(ss2d_local_forward)(params, x)
    out = jax.block_until_ready(out)
    assert out.shape == (B, H, W, d_model)
    assert out.dtype == jnp.float32
    print("KERNEL_OK")
</pallas_src>

<mosaic_0001>
module attributes {stable_mosaic.version = 11 : i64} {
  func.func @_in_proj_kernel(%arg0: i32, %arg1: memref<128x4xf32, #tpu.memory_space<vmem>>, %arg2: memref<4x8xbf16, #tpu.memory_space<vmem>>, %arg3: memref<4x8xbf16, #tpu.memory_space<vmem>>, %arg4: memref<128x8xf32, #tpu.memory_space<vmem>>, %arg5: memref<128x8xf32, #tpu.memory_space<vmem>>) attributes {dimension_semantics = [#tpu.dimension_semantics<parallel>], iteration_bounds = array<i64: 4>, scalar_prefetch = 0 : i64, scratch_operands = 0 : i64, tpu.core_type = #tpu.core_type<tc>, window_params = [{transform_indices = @transform_0, window_bounds = array<i64: 128, 4>}, {pipeline_mode = #tpu.pipeline_mode<synchronous>, transform_indices = @transform_1, window_bounds = array<i64: 4, 8>}, {pipeline_mode = #tpu.pipeline_mode<synchronous>, transform_indices = @transform_2, window_bounds = array<i64: 4, 8>}, {transform_indices = @transform_3, window_bounds = array<i64: 128, 8>}, {transform_indices = @transform_4, window_bounds = array<i64: 128, 8>}]} {
    %c0 = arith.constant 0 : index
    %c0_0 = arith.constant 0 : index
    %0 = vector.load %arg1[%c0, %c0_0] : memref<128x4xf32, #tpu.memory_space<vmem>>, vector<128x4xf32>
    %1 = arith.truncf %0 : vector<128x4xf32> to vector<128x4xbf16>
    %c0_1 = arith.constant 0 : index
    %c0_2 = arith.constant 0 : index
    %2 = vector.load %arg2[%c0_1, %c0_2] : memref<4x8xbf16, #tpu.memory_space<vmem>>, vector<4x8xbf16>
    %cst = arith.constant dense<0.000000e+00> : vector<128x8xf32>
    %3 = tpu.matmul %1, %2, %cst {dimension_numbers = #tpu.dot_dimension_numbers<[1], [0], [0], [1], [0, 0, 1, 1], [], []>} : vector<128x4xbf16>, vector<4x8xbf16>, vector<128x8xf32> -> vector<128x8xf32>
    %c0_3 = arith.constant 0 : index
    %c0_4 = arith.constant 0 : index
    %4 = vector.load %arg4[%c0_3, %c0_4] : memref<128x8xf32, #tpu.memory_space<vmem>>, vector<128x8xf32>
    tpu.vector_store %arg4[%c0_3, %c0_4], %3 {strides = array<i32>} : memref<128x8xf32, #tpu.memory_space<vmem>>, vector<128x8xf32>,
    %c0_5 = arith.constant 0 : index
    %c0_6 = arith.constant 0 : index
    %5 = vector.load %arg3[%c0_5, %c0_6] : memref<4x8xbf16, #tpu.memory_space<vmem>>, vector<4x8xbf16>
    %cst_7 = arith.constant dense<0.000000e+00> : vector<128x8xf32>
    %6 = tpu.matmul %1, %5, %cst_7 {dimension_numbers = #tpu.dot_dimension_numbers<[1], [0], [0], [1], [0, 0, 1, 1], [], []>} : vector<128x4xbf16>, vector<4x8xbf16>, vector<128x8xf32> -> vector<128x8xf32>
    %c0_8 = arith.constant 0 : index
    %c0_9 = arith.constant 0 : index
    %7 = vector.load %arg5[%c0_8, %c0_9] : memref<128x8xf32, #tpu.memory_space<vmem>>, vector<128x8xf32>
    tpu.vector_store %arg5[%c0_8, %c0_9], %6 {strides = array<i32>} : memref<128x8xf32, #tpu.memory_space<vmem>>, vector<128x8xf32>,
    return
  }
  func.func @transform_0(%arg0: i32) -> (i32, i32) {
    %c0_i32 = arith.constant 0 : i32
    %c0_i32_0 = arith.constant 0 : i32
    return %arg0, %c0_i32 : i32, i32
  }
  func.func @transform_1(%arg0: i32) -> (i32, i32) {
    %c0_i32 = arith.constant 0 : i32
    %c0_i32_0 = arith.constant 0 : i32
    %c0_i32_1 = arith.constant 0 : i32
    return %c0_i32, %c0_i32_0 : i32, i32
  }
  func.func @transform_2(%arg0: i32) -> (i32, i32) {
    %c0_i32 = arith.constant 0 : i32
    %c0_i32_0 = arith.constant 0 : i32
    %c0_i32_1 = arith.constant 0 : i32
    return %c0_i32, %c0_i32_0 : i32, i32
  }
  func.func @transform_3(%arg0: i32) -> (i32, i32) {
    %c0_i32 = arith.constant 0 : i32
    %c0_i32_0 = arith.constant 0 : i32
    return %arg0, %c0_i32 : i32, i32
  }
  func.func @transform_4(%arg0: i32) -> (i32, i32) {
    %c0_i32 = arith.constant 0 : i32
    %c0_i32_0 = arith.constant 0 : i32
    return %arg0, %c0_i32 : i32, i32
  }
}

module attributes {stable_mosaic.version = 11 : i64} {
  func.func @_dwconv_silu_kernel(%arg0: i32, %arg1: i32, %arg2: memref<1x16x16x8xf32, #tpu.memory_space<vmem>>, %arg3: memref<3x3x8xf32, #tpu.memory_space<vmem>>, %arg4: memref<1x8xf32, #tpu.memory_space<vmem>>, %arg5: memref<1x16x16x8xf32, #tpu.memory_space<vmem>>) attributes {dimension_semantics = [#tpu.dimension_semantics<parallel>, #tpu.dimension_semantics<parallel>], iteration_bounds = array<i64: 2, 1>, scalar_prefetch = 0 : i64, scratch_operands = 0 : i64, tpu.core_type = #tpu.core_type<tc>, window_params = [{transform_indices = @transform_0, window_bounds = array<i64: 1, 16, 16, 8>}, {transform_indices = @transform_1, window_bounds = array<i64: 3, 3, 8>}, {transform_indices = @transform_2, window_bounds = array<i64: 1, 8>}, {transform_indices = @transform_3, window_bounds = array<i64: 1, 16, 16, 8>}]} {
    %c0 = arith.constant 0 : index
    %c0_0 = arith.constant 0 : index
    %c0_1 = arith.constant 0 : index
    %c0_2 = arith.constant 0 : index
    %0 = vector.load %arg2[%c0, %c0_0, %c0_1, %c0_2] : memref<1x16x16x8xf32, #tpu.memory_space<vmem>>, vector<1x16x16x8xf32>
    %1 = vector.shape_cast %0 : vector<1x16x16x8xf32> to vector<16x16x8xf32>
    %c0_3 = arith.constant 0 : index
    %c0_4 = arith.constant 0 : index
    %c0_5 = arith.constant 0 : index
    %2 = vector.load %arg3[%c0_3, %c0_4, %c0_5] : memref<3x3x8xf32, #tpu.memory_space<vmem>>, vector<3x3x8xf32>
    %cst = arith.constant 0.000000e+00 : f32
    %3 = vector.broadcast %cst : f32 to vector<1x16x8xf32>
    %cst_6 = arith.constant 0.000000e+00 : f32
    %4 = vector.broadcast %cst_6 : f32 to vector<16x1x8xf32>
    %cst_7 = arith.constant 0.000000e+00 : f32
    %5 = vector.broadcast %cst_7 : f32 to vector<16x16x8xf32>
    %6 = vector.extract_strided_slice %1 {offsets = [0, 0, 0], sizes = [15, 16, 8], strides = [1, 1, 1]} : vector<16x16x8xf32> to vector<15x16x8xf32>
    %7 = tpu.concatenate %3, %6 in 0 : vector<1x16x8xf32>, vector<15x16x8xf32> -> vector<16x16x8xf32>
    %8 = vector.extract_strided_slice %7 {offsets = [0, 0, 0], sizes = [16, 15, 8], strides = [1, 1, 1]} : vector<16x16x8xf32> to vector<16x15x8xf32>
    %9 = tpu.concatenate %4, %8 in 1 : vector<16x1x8xf32>, vector<16x15x8xf32> -> vector<16x16x8xf32>
    %10 = vector.extract_strided_slice %2 {offsets = [0, 0, 0], sizes = [1, 1, 8], strides = [1, 1, 1]} : vector<3x3x8xf32> to vector<1x1x8xf32>
    %11 = vector.shape_cast %10 : vector<1x1x8xf32> to vector<8xf32>
    %12 = vector.shape_cast %11 : vector<8xf32> to vector<1x1x8xf32>
    %13 = vector.broadcast %12 : vector<1x1x8xf32> to vector<16x16x8xf32>
    %14 = arith.mulf %9, %13 : vector<16x16x8xf32>
    %15 = arith.addf %5, %14 : vector<16x16x8xf32>
    %16 = vector.extract_strided_slice %2 {offsets = [0, 1, 0], sizes = [1, 1, 8], strides = [1, 1, 1]} : vector<3x3x8xf32> to vector<1x1x8xf32>
    %17 = vector.shape_cast %16 : vector<1x1x8xf32> to vector<8xf32>
    %18 = vector.shape_cast %17 : vector<8xf32> to vector<1x1x8xf32>
    %19 = vector.broadcast %18 : vector<1x1x8xf32> to vector<16x16x8xf32>
    %20 = arith.mulf %7, %19 : vector<16x16x8xf32>
    %21 = arith.addf %15, %20 : vector<16x16x8xf32>
    %22 = vector.extract_strided_slice %7 {offsets = [0, 1, 0], sizes = [16, 15, 8], strides = [1, 1, 1]} : vector<16x16x8xf32> to vector<16x15x8xf32>
    %23 = tpu.concatenate %22, %4 in 1 : vector<16x15x8xf32>, vector<16x1x8xf32> -> vector<16x16x8xf32>
    %24 = vector.extract_strided_slice %2 {offsets = [0, 2, 0], sizes = [1, 1, 8], strides = [1, 1, 1]} : vector<3x3x8xf32> to vector<1x1x8xf32>
    %25 = vector.shape_cast %24 : vector<1x1x8xf32> to vector<8xf32>
    %26 = vector.shape_cast %25 : vector<8xf32> to vector<1x1x8xf32>
    %27 = vector.broadcast %26 : vector<1x1x8xf32> to vector<16x16x8xf32>
    %28 = arith.mulf %23, %27 : vector<16x16x8xf32>
    %29 = arith.addf %21, %28 : vector<16x16x8xf32>
    %30 = vector.extract_strided_slice %1 {offsets = [0, 0, 0], sizes = [16, 15, 8], strides = [1, 1, 1]} : vector<16x16x8xf32> to vector<16x15x8xf32>
    %31 = tpu.concatenate %4, %30 in 1 : vector<16x1x8xf32>, vector<16x15x8xf32> -> vector<16x16x8xf32>
    %32 = vector.extract_strided_slice %2 {offsets = [1, 0, 0], sizes = [1, 1, 8], strides = [1, 1, 1]} : vector<3x3x8xf32> to vector<1x1x8xf32>
    %33 = vector.shape_cast %32 : vector<1x1x8xf32> to vector<8xf32>
    %34 = vector.shape_cast %33 : vector<8xf32> to vector<1x1x8xf32>
    %35 = vector.broadcast %34 : vector<1x1x8xf32> to vector<16x16x8xf32>
    %36 = arith.mulf %31, %35 : vector<16x16x8xf32>
    %37 = arith.addf %29, %36 : vector<16x16x8xf32>
    %38 = vector.extract_strided_slice %2 {offsets = [1, 1, 0], sizes = [1, 1, 8], strides = [1, 1, 1]} : vector<3x3x8xf32> to vector<1x1x8xf32>
    %39 = vector.shape_cast %38 : vector<1x1x8xf32> to vector<8xf32>
    %40 = vector.shape_cast %39 : vector<8xf32> to vector<1x1x8xf32>
    %41 = vector.broadcast %40 : vector<1x1x8xf32> to vector<16x16x8xf32>
    %42 = arith.mulf %1, %41 : vector<16x16x8xf32>
    %43 = arith.addf %37, %42 : vector<16x16x8xf32>
    %44 = vector.extract_strided_slice %1 {offsets = [0, 1, 0], sizes = [16, 15, 8], strides = [1, 1, 1]} : vector<16x16x8xf32> to vector<16x15x8xf32>
    %45 = tpu.concatenate %44, %4 in 1 : vector<16x15x8xf32>, vector<16x1x8xf32> -> vector<16x16x8xf32>
    %46 = vector.extract_strided_slice %2 {offsets = [1, 2, 0], sizes = [1, 1, 8], strides = [1, 1, 1]} : vector<3x3x8xf32> to vector<1x1x8xf32>
    %47 = vector.shape_cast %46 : vector<1x1x8xf32> to vector<8xf32>
    %48 = vector.shape_cast %47 : vector<8xf32> to vector<1x1x8xf32>
    %49 = vector.broadcast %48 : vector<1x1x8xf32> to vector<16x16x8xf32>
    %50 = arith.mulf %45, %49 : vector<16x16x8xf32>
    %51 = arith.addf %43, %50 : vector<16x16x8xf32>
    %52 = vector.extract_strided_slice %1 {offsets = [1, 0, 0], sizes = [15, 16, 8], strides = [1, 1, 1]} : vector<16x16x8xf32> to vector<15x16x8xf32>
    %53 = tpu.concatenate %52, %3 in 0 : vector<15x16x8xf32>, vector<1x16x8xf32> -> vector<16x16x8xf32>
    %54 = vector.extract_strided_slice %53 {offsets = [0, 0, 0], sizes = [16, 15, 8], strides = [1, 1, 1]} : vector<16x16x8xf32> to vector<16x15x8xf32>
    %55 = tpu.concatenate %4, %54 in 1 : vector<16x1x8xf32>, vector<16x15x8xf32> -> vector<16x16x8xf32>
    %56 = vector.extract_strided_slice %2 {offsets = [2, 0, 0], sizes = [1, 1, 8], strides = [1, 1, 1]} : vector<3x3x8xf32> to vector<1x1x8xf32>
    %57 = vector.shape_cast %56 : vector<1x1x8xf32> to vector<8xf32>
    %58 = vector.shape_cast %57 : vector<8xf32> to vector<1x1x8xf32>
    %59 = vector.broadcast %58 : vector<1x1x8xf32> to vector<16x16x8xf32>
    %60 = arith.mulf %55, %59 : vector<16x16x8xf32>
    %61 = arith.addf %51, %60 : vector<16x16x8xf32>
    %62 = vector.extract_strided_slice %2 {offsets = [2, 1, 0], sizes = [1, 1, 8], strides = [1, 1, 1]} : vector<3x3x8xf32> to vector<1x1x8xf32>
    %63 = vector.shape_cast %62 : vector<1x1x8xf32> to vector<8xf32>
    %64 = vector.shape_cast %63 : vector<8xf32> to vector<1x1x8xf32>
    %65 = vector.broadcast %64 : vector<1x1x8xf32> to vector<16x16x8xf32>
    %66 = arith.mulf %53, %65 : vector<16x16x8xf32>
    %67 = arith.addf %61, %66 : vector<16x16x8xf32>
    %68 = vector.extract_strided_slice %53 {offsets = [0, 1, 0], sizes = [16, 15, 8], strides = [1, 1, 1]} : vector<16x16x8xf32> to vector<16x15x8xf32>
    %69 = tpu.concatenate %68, %4 in 1 : vector<16x15x8xf32>, vector<16x1x8xf32> -> vector<16x16x8xf32>
    %70 = vector.extract_strided_slice %2 {offsets = [2, 2, 0], sizes = [1, 1, 8], strides = [1, 1, 1]} : vector<3x3x8xf32> to vector<1x1x8xf32>
    %71 = vector.shape_cast %70 : vector<1x1x8xf32> to vector<8xf32>
    %72 = vector.shape_cast %71 : vector<8xf32> to vector<1x1x8xf32>
    %73 = vector.broadcast %72 : vector<1x1x8xf32> to vector<16x16x8xf32>
    %74 = arith.mulf %69, %73 : vector<16x16x8xf32>
    %75 = arith.addf %67, %74 : vector<16x16x8xf32>
    %c0_8 = arith.constant 0 : index
    %c0_9 = arith.constant 0 : index
    %76 = vector.load %arg4[%c0_8, %c0_9] : memref<1x8xf32, #tpu.memory_space<vmem>>, vector<1x8xf32>
    %77 = vector.shape_cast %76 : vector<1x8xf32> to vector<8xf32>
    %78 = vector.shape_cast %77 : vector<8xf32> to vector<1x1x8xf32>
    %79 = vector.broadcast %78 : vector<1x1x8xf32> to vector<16x16x8xf32>
    %80 = arith.addf %75, %79 : vector<16x16x8xf32>
    %81 = arith.negf %80 : vector<16x16x8xf32>
    %82 = math.exp %81 : vector<16x16x8xf32>
    %cst_10 = arith.constant 1.000000e+00 : f32
    %83 = vector.broadcast %cst_10 : f32 to vector<16x16x8xf32>
    %84 = arith.addf %83, %82 : vector<16x16x8xf32>
    %85 = arith.divf %83, %84 : vector<16x16x8xf32>
    %86 = arith.mulf %80, %85 : vector<16x16x8xf32>
    %c0_11 = arith.constant 0 : index
    %c0_12 = arith.constant 0 : index
    %c0_13 = arith.constant 0 : index
    %c0_14 = arith.constant 0 : index
    %87 = vector.load %arg5[%c0_11, %c0_12, %c0_13, %c0_14] : memref<1x16x16x8xf32, #tpu.memory_space<vmem>>, vector<1x16x16x8xf32>
    %88 = vector.shape_cast %87 : vector<1x16x16x8xf32> to vector<16x16x8xf32>
    %89 = vector.shape_cast %86 : vector<16x16x8xf32> to vector<1x16x16x8xf32>
    tpu.vector_store %arg5[%c0_11, %c0_12, %c0_13, %c0_14], %89 {strides = array<i32>} : memref<1x16x16x8xf32, #tpu.memory_space<vmem>>, vector<1x16x16x8xf32>,
    return
  }
  func.func @transform_0(%arg0: i32, %arg1: i32) -> (i32, i32, i32, i32) {
    %c0_i32 = arith.constant 0 : i32
    %c0_i32_0 = arith.constant 0 : i32
    %c0_i32_1 = arith.constant 0 : i32
    return %arg0, %c0_i32, %c0_i32_0, %arg1 : i32, i32, i32, i32
  }
  func.func @transform_1(%arg0: i32, %arg1: i32) -> (i32, i32, i32) {
    %c0_i32 = arith.constant 0 : i32
    %c0_i32_0 = arith.constant 0 : i32
    %c0_i32_1 = arith.constant 0 : i32
    return %c0_i32, %c0_i32_0, %arg1 : i32, i32, i32
  }
  func.func @transform_2(%arg0: i32, %arg1: i32) -> (i32, i32) {
    %c0_i32 = arith.constant 0 : i32
    %c0_i32_0 = arith.constant 0 : i32
    return %c0_i32, %arg1 : i32, i32
  }
  func.func @transform_3(%arg0: i32, %arg1: i32) -> (i32, i32, i32, i32) {
    %c0_i32 = arith.constant 0 : i32
    %c0_i32_0 = arith.constant 0 : i32
    %c0_i32_1 = arith.constant 0 : i32
    return %arg0, %c0_i32, %c0_i32_0, %arg1 : i32, i32, i32, i32
  }
}

module attributes {stable_mosaic.version = 11 : i64} {
  func.func @_xproj_kernel(%arg0: i32, %arg1: i32, %arg2: memref<1x128x8xf32, #tpu.memory_space<vmem>>, %arg3: memref<1x8x8xbf16, #tpu.memory_space<vmem>>, %arg4: memref<1x8x32xbf16, #tpu.memory_space<vmem>>, %arg5: memref<1x128x8xf32, #tpu.memory_space<vmem>>, %arg6: memref<1x128x32xf32, #tpu.memory_space<vmem>>) attributes {dimension_semantics = [#tpu.dimension_semantics<parallel>, #tpu.dimension_semantics<parallel>], iteration_bounds = array<i64: 4, 4>, scalar_prefetch = 0 : i64, scratch_operands = 0 : i64, tpu.core_type = #tpu.core_type<tc>, window_params = [{transform_indices = @transform_0, window_bounds = array<i64: 1, 128, 8>}, {transform_indices = @transform_1, window_bounds = array<i64: 1, 8, 8>}, {transform_indices = @transform_2, window_bounds = array<i64: 1, 8, 32>}, {transform_indices = @transform_3, window_bounds = array<i64: 1, 128, 8>}, {transform_indices = @transform_4, window_bounds = array<i64: 1, 128, 32>}]} {
    %c0 = arith.constant 0 : index
    %c0_0 = arith.constant 0 : index
    %c0_1 = arith.constant 0 : index
    %0 = vector.load %arg2[%c0, %c0_0, %c0_1] : memref<1x128x8xf32, #tpu.memory_space<vmem>>, vector<1x128x8xf32>
    %1 = vector.shape_cast %0 : vector<1x128x8xf32> to vector<128x8xf32>
    %2 = arith.truncf %1 : vector<128x8xf32> to vector<128x8xbf16>
    %c0_2 = arith.constant 0 : index
    %c0_3 = arith.constant 0 : index
    %c0_4 = arith.constant 0 : index
    %3 = vector.load %arg3[%c0_2, %c0_3, %c0_4] : memref<1x8x8xbf16, #tpu.memory_space<vmem>>, vector<1x8x8xbf16>
    %4 = vector.shape_cast %3 : vector<1x8x8xbf16> to vector<8x8xbf16>
    %cst = arith.constant dense<0.000000e+00> : vector<128x8xf32>
    %5 = tpu.matmul %2, %4, %cst {dimension_numbers = #tpu.dot_dimension_numbers<[1], [0], [0], [1], [0, 0, 1, 1], [], []>} : vector<128x8xbf16>, vector<8x8xbf16>, vector<128x8xf32> -> vector<128x8xf32>
    %c0_5 = arith.constant 0 : index
    %c0_6 = arith.constant 0 : index
    %c0_7 = arith.constant 0 : index
    %6 = vector.load %arg5[%c0_5, %c0_6, %c0_7] : memref<1x128x8xf32, #tpu.memory_space<vmem>>, vector<1x128x8xf32>
    %7 = vector.shape_cast %6 : vector<1x128x8xf32> to vector<128x8xf32>
    %8 = vector.shape_cast %5 : vector<128x8xf32> to vector<1x128x8xf32>
    tpu.vector_store %arg5[%c0_5, %c0_6, %c0_7], %8 {strides = array<i32>} : memref<1x128x8xf32, #tpu.memory_space<vmem>>, vector<1x128x8xf32>,
    %c0_8 = arith.constant 0 : index
    %c0_9 = arith.constant 0 : index
    %c0_10 = arith.constant 0 : index
    %9 = vector.load %arg4[%c0_8, %c0_9, %c0_10] : memref<1x8x32xbf16, #tpu.memory_space<vmem>>, vector<1x8x32xbf16>
    %10 = vector.shape_cast %9 : vector<1x8x32xbf16> to vector<8x32xbf16>
    %cst_11 = arith.constant dense<0.000000e+00> : vector<128x32xf32>
    %11 = tpu.matmul %2, %10, %cst_11 {dimension_numbers = #tpu.dot_dimension_numbers<[1], [0], [0], [1], [0, 0, 1, 1], [], []>} : vector<128x8xbf16>, vector<8x32xbf16>, vector<128x32xf32> -> vector<128x32xf32>
    %c0_12 = arith.constant 0 : index
    %c0_13 = arith.constant 0 : index
    %c0_14 = arith.constant 0 : index
    %12 = vector.load %arg6[%c0_12, %c0_13, %c0_14] : memref<1x128x32xf32, #tpu.memory_space<vmem>>, vector<1x128x32xf32>
    %13 = vector.shape_cast %12 : vector<1x128x32xf32> to vector<128x32xf32>
    %14 = vector.shape_cast %11 : vector<128x32xf32> to vector<1x128x32xf32>
    tpu.vector_store %arg6[%c0_12, %c0_13, %c0_14], %14 {strides = array<i32>} : memref<1x128x32xf32, #tpu.memory_space<vmem>>, vector<1x128x32xf32>,
    return
  }
  func.func @transform_0(%arg0: i32, %arg1: i32) -> (i32, i32, i32) {
    %c0_i32 = arith.constant 0 : i32
    %c0_i32_0 = arith.constant 0 : i32
    return %arg0, %arg1, %c0_i32 : i32, i32, i32
  }
  func.func @transform_1(%arg0: i32, %arg1: i32) -> (i32, i32, i32) {
    %c0_i32 = arith.constant 0 : i32
    %c0_i32_0 = arith.constant 0 : i32
    %c0_i32_1 = arith.constant 0 : i32
    return %arg0, %c0_i32, %c0_i32_0 : i32, i32, i32
  }
  func.func @transform_2(%arg0: i32, %arg1: i32) -> (i32, i32, i32) {
    %c0_i32 = arith.constant 0 : i32
    %c0_i32_0 = arith.constant 0 : i32
    %c0_i32_1 = arith.constant 0 : i32
    return %arg0, %c0_i32, %c0_i32_0 : i32, i32, i32
  }
  func.func @transform_3(%arg0: i32, %arg1: i32) -> (i32, i32, i32) {
    %c0_i32 = arith.constant 0 : i32
    %c0_i32_0 = arith.constant 0 : i32
    return %arg0, %arg1, %c0_i32 : i32, i32, i32
  }
  func.func @transform_4(%arg0: i32, %arg1: i32) -> (i32, i32, i32) {
    %c0_i32 = arith.constant 0 : i32
    %c0_i32_0 = arith.constant 0 : i32
    return %arg0, %arg1, %c0_i32 : i32, i32, i32
  }
}

module attributes {stable_mosaic.version = 11 : i64} {
  func.func @_scan_kernel(%arg0: i32, %arg1: i32, %arg2: i32, %arg3: memref<1x1x128x8xf32, #tpu.memory_space<vmem>>, %arg4: memref<1x1x128x8xf32, #tpu.memory_space<vmem>>, %arg5: memref<1x1x128x16x2xf32, #tpu.memory_space<vmem>>, %arg6: memref<1x16x8xf32, #tpu.memory_space<vmem>>, %arg7: memref<1x1x8xf32, #tpu.memory_space<vmem>>, %arg8: memref<1x1x8xf32, #tpu.memory_space<vmem>>, %arg9: memref<1x1x128x8xf32, #tpu.memory_space<vmem>>, %arg10: memref<16x8xf32, #tpu.memory_space<vmem>>, %arg11: memref<128x8xf32, #tpu.memory_space<vmem>>) attributes {dimension_semantics = [#tpu.dimension_semantics<parallel>, #tpu.dimension_semantics<parallel>, #tpu.dimension_semantics<arbitrary>], iteration_bounds = array<i64: 4, 2, 2>, scalar_prefetch = 0 : i64, scratch_operands = 2 : i64, tpu.core_type = #tpu.core_type<tc>, window_params = [{transform_indices = @transform_0, window_bounds = array<i64: 1, 1, 128, 8>}, {transform_indices = @transform_1, window_bounds = array<i64: 1, 1, 128, 8>}, {transform_indices = @transform_2, window_bounds = array<i64: 1, 1, 128, 16, 2>}, {transform_indices = @transform_3, window_bounds = array<i64: 1, 16, 8>}, {transform_indices = @transform_4, window_bounds = array<i64: 1, 1, 8>}, {transform_indices = @transform_5, window_bounds = array<i64: 1, 1, 8>}, {transform_indices = @transform_6, window_bounds = array<i64: 1, 1, 128, 8>}]} {
    %c0_i32 = arith.constant 0 : i32
    %0 = arith.cmpi eq, %arg2, %c0_i32 : i32
    %1 = arith.extui %0 : i1 to i32
    %c0_i32_0 = arith.constant 0 : i32
    %2 = arith.cmpi ne, %1, %c0_i32_0 : i32
    scf.if %2 {
      %cst_22 = arith.constant 0.000000e+00 : f32
      %33 = vector.broadcast %cst_22 : f32 to vector<16x8xf32>
      %c0_23 = arith.constant 0 : index
      %c0_24 = arith.constant 0 : index
      %34 = vector.load %arg10[%c0_23, %c0_24] : memref<16x8xf32, #tpu.memory_space<vmem>>, vector<16x8xf32>
      tpu.vector_store %arg10[%c0_23, %c0_24], %33 {strides = array<i32>} : memref<16x8xf32, #tpu.memory_space<vmem>>, vector<16x8xf32>,
    } else {
    }
    %c0 = arith.constant 0 : index
    %c0_1 = arith.constant 0 : index
    %c0_2 = arith.constant 0 : index
    %c0_3 = arith.constant 0 : index
    %3 = vector.load %arg4[%c0, %c0_1, %c0_2, %c0_3] : memref<1x1x128x8xf32, #tpu.memory_space<vmem>>, vector<1x1x128x8xf32>
    %4 = vector.shape_cast %3 : vector<1x1x128x8xf32> to vector<128x8xf32>
    %c0_4 = arith.constant 0 : index
    %c0_5 = arith.constant 0 : index
    %c0_6 = arith.constant 0 : index
    %5 = vector.load %arg7[%c0_4, %c0_5, %c0_6] : memref<1x1x8xf32, #tpu.memory_space<vmem>>, vector<1x1x8xf32>
    %6 = vector.shape_cast %5 : vector<1x1x8xf32> to vector<8xf32>
    %7 = vector.shape_cast %6 : vector<8xf32> to vector<1x8xf32>
    %8 = vector.broadcast %7 : vector<1x8xf32> to vector<128x8xf32>
    %9 = arith.addf %4, %8 : vector<128x8xf32>
    %cst = arith.constant 0.000000e+00 : f32
    %10 = vector.broadcast %cst : f32 to vector<128x8xf32>
    %11 = arith.maximumf %9, %10 : vector<128x8xf32>
    %12 = vector.broadcast %cst : f32 to vector<128x8xf32>
    %13 = arith.subf %9, %12 : vector<128x8xf32>
    %14 = arith.cmpf one, %13, %13 : vector<128x8xf32>
    %15 = vector.broadcast %cst : f32 to vector<128x8xf32>
    %16 = arith.addf %9, %15 : vector<128x8xf32>
    %17 = math.absf %13 : vector<128x8xf32>
    %cst_7 = arith.constant 0.000000e+00 : f32
    %18 = vector.broadcast %cst_7 : f32 to vector<128x8xf32>
    %19 = arith.subf %18, %17 : vector<128x8xf32>
    %20 = math.exp %19 : vector<128x8xf32>
    %21 = math.log1p %20 : vector<128x8xf32>
    %22 = arith.addf %11, %21 : vector<128x8xf32>
    %23 = arith.select %14, %16, %22 : vector<128x8xi1>, vector<128x8xf32>
    %c0_8 = arith.constant 0 : index
    %c0_9 = arith.constant 0 : index
    %24 = vector.load %arg11[%c0_8, %c0_9] : memref<128x8xf32, #tpu.memory_space<vmem>>, vector<128x8xf32>
    tpu.vector_store %arg11[%c0_8, %c0_9], %23 {strides = array<i32>} : memref<128x8xf32, #tpu.memory_space<vmem>>, vector<128x8xf32>,
    %c0_10 = arith.constant 0 : index
    %c0_11 = arith.constant 0 : index
    %c0_12 = arith.constant 0 : index
    %25 = vector.load %arg6[%c0_10, %c0_11, %c0_12] : memref<1x16x8xf32, #tpu.memory_space<vmem>>, vector<1x16x8xf32>
    %26 = vector.shape_cast %25 : vector<1x16x8xf32> to vector<16x8xf32>
    %c0_13 = arith.constant 0 : index
    %c0_14 = arith.constant 0 : index
    %c0_15 = arith.constant 0 : index
    %27 = vector.load %arg8[%c0_13, %c0_14, %c0_15] : memref<1x1x8xf32, #tpu.memory_space<vmem>>, vector<1x1x8xf32>
    %28 = vector.shape_cast %27 : vector<1x1x8xf32> to vector<1x8xf32>
    %c0_16 = arith.constant 0 : index
    %c0_17 = arith.constant 0 : index
    %29 = vector.load %arg10[%c0_16, %c0_17] : memref<16x8xf32, #tpu.memory_space<vmem>>, vector<16x8xf32>
    %c0_i32_18 = arith.constant 0 : i32
    %c16_i32 = arith.constant 16 : i32
    %30 = arith.addi %c0_i32_18, %c16_i32 : i32
    %c1_i32 = arith.constant 1 : i32
    %31 = scf.for %arg12 = %c0_i32_18 to %30 step %c1_i32 iter_args(%arg13 = %29) -> (vector<16x8xf32>)  : i32 {
      %c8_i32 = arith.constant 8 : i32
      %33 = arith.muli %arg12, %c8_i32 : i32
      %34 = tpu.assume_multiple %33, 8 : i32
      %c0_i32_22 = arith.constant 0 : i32
      %35 = arith.addi %34, %c0_i32_22 : i32
      %c0_23 = arith.constant 0 : index
      %c0_24 = arith.constant 0 : index
      %36 = arith.index_cast %35 : i32 to index
      %c0_25 = arith.constant 0 : index
      %37 = vector.load %arg3[%c0_23, %c0_24, %36, %c0_25] : memref<1x1x128x8xf32, #tpu.memory_space<vmem>>, vector<1x1x1x8xf32>
      %38 = vector.shape_cast %37 : vector<1x1x1x8xf32> to vector<1x8xf32>
      %39 = arith.index_cast %35 : i32 to index
      %c0_26 = arith.constant 0 : index
      %40 = vector.load %arg11[%39, %c0_26] : memref<128x8xf32, #tpu.memory_space<vmem>>, vector<1x8xf32>
      %c0_27 = arith.constant 0 : index
      %c0_28 = arith.constant 0 : index
      %41 = arith.index_cast %35 : i32 to index
      %c0_29 = arith.constant 0 : index
      %c0_30 = arith.constant 0 : index
      %42 = vector.load %arg5[%c0_27, %c0_28, %41, %c0_29, %c0_30] : memref<1x1x128x16x2xf32, #tpu.memory_space<vmem>>, vector<1x1x1x16x2xf32>
      %43 = vector.shape_cast %42 : vector<1x1x1x16x2xf32> to vector<16x2xf32>
      %44 = vector.extract_strided_slice %43 {offsets = [0, 0], sizes = [16, 1], strides = [1, 1]} : vector<16x2xf32> to vector<16x1xf32>
      %45 = vector.shape_cast %44 : vector<16x1xf32> to vector<16x1xf32>
      %46 = vector.broadcast %45 : vector<16x1xf32> to vector<16x8xf32>
      %47 = vector.extract_strided_slice %43 {offsets = [0, 1], sizes = [16, 1], strides = [1, 1]} : vector<16x2xf32> to vector<16x1xf32>
      %48 = vector.shape_cast %47 : vector<16x1xf32> to vector<16x1xf32>
      %49 = vector.broadcast %48 : vector<16x1xf32> to vector<16x8xf32>
      %50 = vector.broadcast %40 : vector<1x8xf32> to vector<16x8xf32>
      %51 = arith.mulf %26, %50 : vector<16x8xf32>
      %52 = math.exp %51 : vector<16x8xf32>
      %53 = arith.mulf %52, %arg13 : vector<16x8xf32>
      %54 = arith.mulf %40, %38 : vector<1x8xf32>
      %55 = vector.broadcast %54 : vector<1x8xf32> to vector<16x8xf32>
      %56 = arith.mulf %55, %46 : vector<16x8xf32>
      %57 = arith.addf %53, %56 : vector<16x8xf32>
      %58 = arith.mulf %57, %49 : vector<16x8xf32>
      %cst_31 = arith.constant dense<0.000000e+00> : vector<8xf32>
      %59 = vector.multi_reduction <add>, %58, %cst_31 [0] : vector<16x8xf32> to vector<8xf32>
      %60 = vector.shape_cast %59 : vector<8xf32> to vector<1x8xf32>
      %61 = arith.mulf %38, %28 : vector<1x8xf32>
      %62 = arith.addf %60, %61 : vector<1x8xf32>
      %c1_i32_32 = arith.constant 1 : i32
      %63 = arith.addi %34, %c1_i32_32 : i32
      %c0_33 = arith.constant 0 : index
      %c0_34 = arith.constant 0 : index
      %64 = arith.index_cast %63 : i32 to index
      %c0_35 = arith.constant 0 : index
      %65 = vector.load %arg3[%c0_33, %c0_34, %64, %c0_35] : memref<1x1x128x8xf32, #tpu.memory_space<vmem>>, vector<1x1x1x8xf32>
      %66 = vector.shape_cast %65 : vector<1x1x1x8xf32> to vector<1x8xf32>
      %67 = arith.index_cast %63 : i32 to index
      %c0_36 = arith.constant 0 : index
      %68 = vector.load %arg11[%67, %c0_36] : memref<128x8xf32, #tpu.memory_space<vmem>>, vector<1x8xf32>
      %c0_37 = arith.constant 0 : index
      %c0_38 = arith.constant 0 : index
      %69 = arith.index_cast %63 : i32 to index
      %c0_39 = arith.constant 0 : index
      %c0_40 = arith.constant 0 : index
      %70 = vector.load %arg5[%c0_37, %c0_38, %69, %c0_39, %c0_40] : memref<1x1x128x16x2xf32, #tpu.memory_space<vmem>>, vector<1x1x1x16x2xf32>
      %71 = vector.shape_cast %70 : vector<1x1x1x16x2xf32> to vector<16x2xf32>
      %72 = vector.extract_strided_slice %71 {offsets = [0, 0], sizes = [16, 1], strides = [1, 1]} : vector<16x2xf32> to vector<16x1xf32>
      %73 = vector.shape_cast %72 : vector<16x1xf32> to vector<16x1xf32>
      %74 = vector.broadcast %73 : vector<16x1xf32> to vector<16x8xf32>
      %75 = vector.extract_strided_slice %71 {offsets = [0, 1], sizes = [16, 1], strides = [1, 1]} : vector<16x2xf32> to vector<16x1xf32>
      %76 = vector.shape_cast %75 : vector<16x1xf32> to vector<16x1xf32>
      %77 = vector.broadcast %76 : vector<16x1xf32> to vector<16x8xf32>
      %78 = vector.broadcast %68 : vector<1x8xf32> to vector<16x8xf32>
      %79 = arith.mulf %26, %78 : vector<16x8xf32>
      %80 = math.exp %79 : vector<16x8xf32>
      %81 = arith.mulf %80, %57 : vector<16x8xf32>
      %82 = arith.mulf %68, %66 : vector<1x8xf32>
      %83 = vector.broadcast %82 : vector<1x8xf32> to vector<16x8xf32>
      %84 = arith.mulf %83, %74 : vector<16x8xf32>
      %85 = arith.addf %81, %84 : vector<16x8xf32>
      %86 = arith.mulf %85, %77 : vector<16x8xf32>
      %cst_41 = arith.constant dense<0.000000e+00> : vector<8xf32>
      %87 = vector.multi_reduction <add>, %86, %cst_41 [0] : vector<16x8xf32> to vector<8xf32>
      %88 = vector.shape_cast %87 : vector<8xf32> to vector<1x8xf32>
      %89 = arith.mulf %66, %28 : vector<1x8xf32>
      %90 = arith.addf %88, %89 : vector<1x8xf32>
      %c2_i32 = arith.constant 2 : i32
      %91 = arith.addi %34, %c2_i32 : i32
      %c0_42 = arith.constant 0 : index
      %c0_43 = arith.constant 0 : index
      %92 = arith.index_cast %91 : i32 to index
      %c0_44 = arith.constant 0 : index
      %93 = vector.load %arg3[%c0_42, %c0_43, %92, %c0_44] : memref<1x1x128x8xf32, #tpu.memory_space<vmem>>, vector<1x1x1x8xf32>
      %94 = vector.shape_cast %93 : vector<1x1x1x8xf32> to vector<1x8xf32>
      %95 = arith.index_cast %91 : i32 to index
      %c0_45 = arith.constant 0 : index
      %96 = vector.load %arg11[%95, %c0_45] : memref<128x8xf32, #tpu.memory_space<vmem>>, vector<1x8xf32>
      %c0_46 = arith.constant 0 : index
      %c0_47 = arith.constant 0 : index
      %97 = arith.index_cast %91 : i32 to index
      %c0_48 = arith.constant 0 : index
      %c0_49 = arith.constant 0 : index
      %98 = vector.load %arg5[%c0_46, %c0_47, %97, %c0_48, %c0_49] : memref<1x1x128x16x2xf32, #tpu.memory_space<vmem>>, vector<1x1x1x16x2xf32>
      %99 = vector.shape_cast %98 : vector<1x1x1x16x2xf32> to vector<16x2xf32>
      %100 = vector.extract_strided_slice %99 {offsets = [0, 0], sizes = [16, 1], strides = [1, 1]} : vector<16x2xf32> to vector<16x1xf32>
      %101 = vector.shape_cast %100 : vector<16x1xf32> to vector<16x1xf32>
      %102 = vector.broadcast %101 : vector<16x1xf32> to vector<16x8xf32>
      %103 = vector.extract_strided_slice %99 {offsets = [0, 1], sizes = [16, 1], strides = [1, 1]} : vector<16x2xf32> to vector<16x1xf32>
      %104 = vector.shape_cast %103 : vector<16x1xf32> to vector<16x1xf32>
      %105 = vector.broadcast %104 : vector<16x1xf32> to vector<16x8xf32>
      %106 = vector.broadcast %96 : vector<1x8xf32> to vector<16x8xf32>
      %107 = arith.mulf %26, %106 : vector<16x8xf32>
      %108 = math.exp %107 : vector<16x8xf32>
      %109 = arith.mulf %108, %85 : vector<16x8xf32>
      %110 = arith.mulf %96, %94 : vector<1x8xf32>
      %111 = vector.broadcast %110 : vector<1x8xf32> to vector<16x8xf32>
      %112 = arith.mulf %111, %102 : vector<16x8xf32>
      %113 = arith.addf %109, %112 : vector<16x8xf32>
      %114 = arith.mulf %113, %105 : vector<16x8xf32>
      %cst_50 = arith.constant dense<0.000000e+00> : vector<8xf32>
      %115 = vector.multi_reduction <add>, %114, %cst_50 [0] : vector<16x8xf32> to vector<8xf32>
      %116 = vector.shape_cast %115 : vector<8xf32> to vector<1x8xf32>
      %117 = arith.mulf %94, %28 : vector<1x8xf32>
      %118 = arith.addf %116, %117 : vector<1x8xf32>
      %c3_i32 = arith.constant 3 : i32
      %119 = arith.addi %34, %c3_i32 : i32
      %c0_51 = arith.constant 0 : index
      %c0_52 = arith.constant 0 : index
      %120 = arith.index_cast %119 : i32 to index
      %c0_53 = arith.constant 0 : index
      %121 = vector.load %arg3[%c0_51, %c0_52, %120, %c0_53] : memref<1x1x128x8xf32, #tpu.memory_space<vmem>>, vector<1x1x1x8xf32>
      %122 = vector.shape_cast %121 : vector<1x1x1x8xf32> to vector<1x8xf32>
      %123 = arith.index_cast %119 : i32 to index
      %c0_54 = arith.constant 0 : index
      %124 = vector.load %arg11[%123, %c0_54] : memref<128x8xf32, #tpu.memory_space<vmem>>, vector<1x8xf32>
      %c0_55 = arith.constant 0 : index
      %c0_56 = arith.constant 0 : index
      %125 = arith.index_cast %119 : i32 to index
      %c0_57 = arith.constant 0 : index
      %c0_58 = arith.constant 0 : index
      %126 = vector.load %arg5[%c0_55, %c0_56, %125, %c0_57, %c0_58] : memref<1x1x128x16x2xf32, #tpu.memory_space<vmem>>, vector<1x1x1x16x2xf32>
      %127 = vector.shape_cast %126 : vector<1x1x1x16x2xf32> to vector<16x2xf32>
      %128 = vector.extract_strided_slice %127 {offsets = [0, 0], sizes = [16, 1], strides = [1, 1]} : vector<16x2xf32> to vector<16x1xf32>
      %129 = vector.shape_cast %128 : vector<16x1xf32> to vector<16x1xf32>
      %130 = vector.broadcast %129 : vector<16x1xf32> to vector<16x8xf32>
      %131 = vector.extract_strided_slice %127 {offsets = [0, 1], sizes = [16, 1], strides = [1, 1]} : vector<16x2xf32> to vector<16x1xf32>
      %132 = vector.shape_cast %131 : vector<16x1xf32> to vector<16x1xf32>
      %133 = vector.broadcast %132 : vector<16x1xf32> to vector<16x8xf32>
      %134 = vector.broadcast %124 : vector<1x8xf32> to vector<16x8xf32>
      %135 = arith.mulf %26, %134 : vector<16x8xf32>
      %136 = math.exp %135 : vector<16x8xf32>
      %137 = arith.mulf %136, %113 : vector<16x8xf32>
      %138 = arith.mulf %124, %122 : vector<1x8xf32>
      %139 = vector.broadcast %138 : vector<1x8xf32> to vector<16x8xf32>
      %140 = arith.mulf %139, %130 : vector<16x8xf32>
      %141 = arith.addf %137, %140 : vector<16x8xf32>
      %142 = arith.mulf %141, %133 : vector<16x8xf32>
      %cst_59 = arith.constant dense<0.000000e+00> : vector<8xf32>
      %143 = vector.multi_reduction <add>, %142, %cst_59 [0] : vector<16x8xf32> to vector<8xf32>
      %144 = vector.shape_cast %143 : vector<8xf32> to vector<1x8xf32>
      %145 = arith.mulf %122, %28 : vector<1x8xf32>
      %146 = arith.addf %144, %145 : vector<1x8xf32>
      %c4_i32 = arith.constant 4 : i32
      %147 = arith.addi %34, %c4_i32 : i32
      %c0_60 = arith.constant 0 : index
      %c0_61 = arith.constant 0 : index
      %148 = arith.index_cast %147 : i32 to index
      %c0_62 = arith.constant 0 : index
      %149 = vector.load %arg3[%c0_60, %c0_61, %148, %c0_62] : memref<1x1x128x8xf32, #tpu.memory_space<vmem>>, vector<1x1x1x8xf32>
      %150 = vector.shape_cast %149 : vector<1x1x1x8xf32> to vector<1x8xf32>
      %151 = arith.index_cast %147 : i32 to index
      %c0_63 = arith.constant 0 : index
      %152 = vector.load %arg11[%151, %c0_63] : memref<128x8xf32, #tpu.memory_space<vmem>>, vector<1x8xf32>
      %c0_64 = arith.constant 0 : index
      %c0_65 = arith.constant 0 : index
      %153 = arith.index_cast %147 : i32 to index
      %c0_66 = arith.constant 0 : index
      %c0_67 = arith.constant 0 : index
      %154 = vector.load %arg5[%c0_64, %c0_65, %153, %c0_66, %c0_67] : memref<1x1x128x16x2xf32, #tpu.memory_space<vmem>>, vector<1x1x1x16x2xf32>
      %155 = vector.shape_cast %154 : vector<1x1x1x16x2xf32> to vector<16x2xf32>
      %156 = vector.extract_strided_slice %155 {offsets = [0, 0], sizes = [16, 1], strides = [1, 1]} : vector<16x2xf32> to vector<16x1xf32>
      %157 = vector.shape_cast %156 : vector<16x1xf32> to vector<16x1xf32>
      %158 = vector.broadcast %157 : vector<16x1xf32> to vector<16x8xf32>
      %159 = vector.extract_strided_slice %155 {offsets = [0, 1], sizes = [16, 1], strides = [1, 1]} : vector<16x2xf32> to vector<16x1xf32>
      %160 = vector.shape_cast %159 : vector<16x1xf32> to vector<16x1xf32>
      %161 = vector.broadcast %160 : vector<16x1xf32> to vector<16x8xf32>
      %162 = vector.broadcast %152 : vector<1x8xf32> to vector<16x8xf32>
      %163 = arith.mulf %26, %162 : vector<16x8xf32>
      %164 = math.exp %163 : vector<16x8xf32>
      %165 = arith.mulf %164, %141 : vector<16x8xf32>
      %166 = arith.mulf %152, %150 : vector<1x8xf32>
      %167 = vector.broadcast %166 : vector<1x8xf32> to vector<16x8xf32>
      %168 = arith.mulf %167, %158 : vector<16x8xf32>
      %169 = arith.addf %165, %168 : vector<16x8xf32>
      %170 = arith.mulf %169, %161 : vector<16x8xf32>
      %cst_68 = arith.constant dense<0.000000e+00> : vector<8xf32>
      %171 = vector.multi_reduction <add>, %170, %cst_68 [0] : vector<16x8xf32> to vector<8xf32>
      %172 = vector.shape_cast %171 : vector<8xf32> to vector<1x8xf32>
      %173 = arith.mulf %150, %28 : vector<1x8xf32>
      %174 = arith.addf %172, %173 : vector<1x8xf32>
      %c5_i32 = arith.constant 5 : i32
      %175 = arith.addi %34, %c5_i32 : i32
      %c0_69 = arith.constant 0 : index
      %c0_70 = arith.constant 0 : index
      %176 = arith.index_cast %175 : i32 to index
      %c0_71 = arith.constant 0 : index
      %177 = vector.load %arg3[%c0_69, %c0_70, %176, %c0_71] : memref<1x1x128x8xf32, #tpu.memory_space<vmem>>, vector<1x1x1x8xf32>
      %178 = vector.shape_cast %177 : vector<1x1x1x8xf32> to vector<1x8xf32>
      %179 = arith.index_cast %175 : i32 to index
      %c0_72 = arith.constant 0 : index
      %180 = vector.load %arg11[%179, %c0_72] : memref<128x8xf32, #tpu.memory_space<vmem>>, vector<1x8xf32>
      %c0_73 = arith.constant 0 : index
      %c0_74 = arith.constant 0 : index
      %181 = arith.index_cast %175 : i32 to index
      %c0_75 = arith.constant 0 : index
      %c0_76 = arith.constant 0 : index
      %182 = vector.load %arg5[%c0_73, %c0_74, %181, %c0_75, %c0_76] : memref<1x1x128x16x2xf32, #tpu.memory_space<vmem>>, vector<1x1x1x16x2xf32>
      %183 = vector.shape_cast %182 : vector<1x1x1x16x2xf32> to vector<16x2xf32>
      %184 = vector.extract_strided_slice %183 {offsets = [0, 0], sizes = [16, 1], strides = [1, 1]} : vector<16x2xf32> to vector<16x1xf32>
      %185 = vector.shape_cast %184 : vector<16x1xf32> to vector<16x1xf32>
      %186 = vector.broadcast %185 : vector<16x1xf32> to vector<16x8xf32>
      %187 = vector.extract_strided_slice %183 {offsets = [0, 1], sizes = [16, 1], strides = [1, 1]} : vector<16x2xf32> to vector<16x1xf32>
      %188 = vector.shape_cast %187 : vector<16x1xf32> to vector<16x1xf32>
      %189 = vector.broadcast %188 : vector<16x1xf32> to vector<16x8xf32>
      %190 = vector.broadcast %180 : vector<1x8xf32> to vector<16x8xf32>
      %191 = arith.mulf %26, %190 : vector<16x8xf32>
      %192 = math.exp %191 : vector<16x8xf32>
      %193 = arith.mulf %192, %169 : vector<16x8xf32>
      %194 = arith.mulf %180, %178 : vector<1x8xf32>
      %195 = vector.broadcast %194 : vector<1x8xf32> to vector<16x8xf32>
      %196 = arith.mulf %195, %186 : vector<16x8xf32>
      %197 = arith.addf %193, %196 : vector<16x8xf32>
      %198 = arith.mulf %197, %189 : vector<16x8xf32>
      %cst_77 = arith.constant dense<0.000000e+00> : vector<8xf32>
      %199 = vector.multi_reduction <add>, %198, %cst_77 [0] : vector<16x8xf32> to vector<8xf32>
      %200 = vector.shape_cast %199 : vector<8xf32> to vector<1x8xf32>
      %201 = arith.mulf %178, %28 : vector<1x8xf32>
      %202 = arith.addf %200, %201 : vector<1x8xf32>
      %c6_i32 = arith.constant 6 : i32
      %203 = arith.addi %34, %c6_i32 : i32
      %c0_78 = arith.constant 0 : index
      %c0_79 = arith.constant 0 : index
      %204 = arith.index_cast %203 : i32 to index
      %c0_80 = arith.constant 0 : index
      %205 = vector.load %arg3[%c0_78, %c0_79, %204, %c0_80] : memref<1x1x128x8xf32, #tpu.memory_space<vmem>>, vector<1x1x1x8xf32>
      %206 = vector.shape_cast %205 : vector<1x1x1x8xf32> to vector<1x8xf32>
      %207 = arith.index_cast %203 : i32 to index
      %c0_81 = arith.constant 0 : index
      %208 = vector.load %arg11[%207, %c0_81] : memref<128x8xf32, #tpu.memory_space<vmem>>, vector<1x8xf32>
      %c0_82 = arith.constant 0 : index
      %c0_83 = arith.constant 0 : index
      %209 = arith.index_cast %203 : i32 to index
      %c0_84 = arith.constant 0 : index
      %c0_85 = arith.constant 0 : index
      %210 = vector.load %arg5[%c0_82, %c0_83, %209, %c0_84, %c0_85] : memref<1x1x128x16x2xf32, #tpu.memory_space<vmem>>, vector<1x1x1x16x2xf32>
      %211 = vector.shape_cast %210 : vector<1x1x1x16x2xf32> to vector<16x2xf32>
      %212 = vector.extract_strided_slice %211 {offsets = [0, 0], sizes = [16, 1], strides = [1, 1]} : vector<16x2xf32> to vector<16x1xf32>
      %213 = vector.shape_cast %212 : vector<16x1xf32> to vector<16x1xf32>
      %214 = vector.broadcast %213 : vector<16x1xf32> to vector<16x8xf32>
      %215 = vector.extract_strided_slice %211 {offsets = [0, 1], sizes = [16, 1], strides = [1, 1]} : vector<16x2xf32> to vector<16x1xf32>
      %216 = vector.shape_cast %215 : vector<16x1xf32> to vector<16x1xf32>
      %217 = vector.broadcast %216 : vector<16x1xf32> to vector<16x8xf32>
      %218 = vector.broadcast %208 : vector<1x8xf32> to vector<16x8xf32>
      %219 = arith.mulf %26, %218 : vector<16x8xf32>
      %220 = math.exp %219 : vector<16x8xf32>
      %221 = arith.mulf %220, %197 : vector<16x8xf32>
      %222 = arith.mulf %208, %206 : vector<1x8xf32>
      %223 = vector.broadcast %222 : vector<1x8xf32> to vector<16x8xf32>
      %224 = arith.mulf %223, %214 : vector<16x8xf32>
      %225 = arith.addf %221, %224 : vector<16x8xf32>
      %226 = arith.mulf %225, %217 : vector<16x8xf32>
      %cst_86 = arith.constant dense<0.000000e+00> : vector<8xf32>
      %227 = vector.multi_reduction <add>, %226, %cst_86 [0] : vector<16x8xf32> to vector<8xf32>
      %228 = vector.shape_cast %227 : vector<8xf32> to vector<1x8xf32>
      %229 = arith.mulf %206, %28 : vector<1x8xf32>
      %230 = arith.addf %228, %229 : vector<1x8xf32>
      %c7_i32 = arith.constant 7 : i32
      %231 = arith.addi %34, %c7_i32 : i32
      %c0_87 = arith.constant 0 : index
      %c0_88 = arith.constant 0 : index
      %232 = arith.index_cast %231 : i32 to index
      %c0_89 = arith.constant 0 : index
      %233 = vector.load %arg3[%c0_87, %c0_88, %232, %c0_89] : memref<1x1x128x8xf32, #tpu.memory_space<vmem>>, vector<1x1x1x8xf32>
      %234 = vector.shape_cast %233 : vector<1x1x1x8xf32> to vector<1x8xf32>
      %235 = arith.index_cast %231 : i32 to index
      %c0_90 = arith.constant 0 : index
      %236 = vector.load %arg11[%235, %c0_90] : memref<128x8xf32, #tpu.memory_space<vmem>>, vector<1x8xf32>
      %c0_91 = arith.constant 0 : index
      %c0_92 = arith.constant 0 : index
      %237 = arith.index_cast %231 : i32 to index
      %c0_93 = arith.constant 0 : index
      %c0_94 = arith.constant 0 : index
      %238 = vector.load %arg5[%c0_91, %c0_92, %237, %c0_93, %c0_94] : memref<1x1x128x16x2xf32, #tpu.memory_space<vmem>>, vector<1x1x1x16x2xf32>
      %239 = vector.shape_cast %238 : vector<1x1x1x16x2xf32> to vector<16x2xf32>
      %240 = vector.extract_strided_slice %239 {offsets = [0, 0], sizes = [16, 1], strides = [1, 1]} : vector<16x2xf32> to vector<16x1xf32>
      %241 = vector.shape_cast %240 : vector<16x1xf32> to vector<16x1xf32>
      %242 = vector.broadcast %241 : vector<16x1xf32> to vector<16x8xf32>
      %243 = vector.extract_strided_slice %239 {offsets = [0, 1], sizes = [16, 1], strides = [1, 1]} : vector<16x2xf32> to vector<16x1xf32>
      %244 = vector.shape_cast %243 : vector<16x1xf32> to vector<16x1xf32>
      %245 = vector.broadcast %244 : vector<16x1xf32> to vector<16x8xf32>
      %246 = vector.broadcast %236 : vector<1x8xf32> to vector<16x8xf32>
      %247 = arith.mulf %26, %246 : vector<16x8xf32>
      %248 = math.exp %247 : vector<16x8xf32>
      %249 = arith.mulf %248, %225 : vector<16x8xf32>
      %250 = arith.mulf %236, %234 : vector<1x8xf32>
      %251 = vector.broadcast %250 : vector<1x8xf32> to vector<16x8xf32>
      %252 = arith.mulf %251, %242 : vector<16x8xf32>
      %253 = arith.addf %249, %252 : vector<16x8xf32>
      %254 = arith.mulf %253, %245 : vector<16x8xf32>
      %cst_95 = arith.constant dense<0.000000e+00> : vector<8xf32>
      %255 = vector.multi_reduction <add>, %254, %cst_95 [0] : vector<16x8xf32> to vector<8xf32>
      %256 = vector.shape_cast %255 : vector<8xf32> to vector<1x8xf32>
      %257 = arith.mulf %234, %28 : vector<1x8xf32>
      %258 = arith.addf %256, %257 : vector<1x8xf32>
      %259 = tpu.concatenate %62, %90, %118, %146, %174, %202, %230, %258 in 0 : vector<1x8xf32>, vector<1x8xf32>, vector<1x8xf32>, vector<1x8xf32>, vector<1x8xf32>, vector<1x8xf32>, vector<1x8xf32>, vector<1x8xf32> -> vector<8x8xf32>
      %c0_96 = arith.constant 0 : index
      %c0_97 = arith.constant 0 : index
      %260 = arith.index_cast %34 : i32 to index
      %c0_98 = arith.constant 0 : index
      %261 = vector.load %arg9[%c0_96, %c0_97, %260, %c0_98] : memref<1x1x128x8xf32, #tpu.memory_space<vmem>>, vector<1x1x8x8xf32>
      %262 = vector.shape_cast %261 : vector<1x1x8x8xf32> to vector<8x8xf32>
      %263 = vector.shape_cast %259 : vector<8x8xf32> to vector<1x1x8x8xf32>
      tpu.vector_store %arg9[%c0_96, %c0_97, %260, %c0_98], %263 {strides = array<i32>} : memref<1x1x128x8xf32, #tpu.memory_space<vmem>>, vector<1x1x8x8xf32>,
      scf.yield %253 : vector<16x8xf32>
    }
    %c16_i32_19 = arith.constant 16 : i32
    %c0_20 = arith.constant 0 : index
    %c0_21 = arith.constant 0 : index
    %32 = vector.load %arg10[%c0_20, %c0_21] : memref<16x8xf32, #tpu.memory_space<vmem>>, vector<16x8xf32>
    tpu.vector_store %arg10[%c0_20, %c0_21], %31 {strides = array<i32>} : memref<16x8xf32, #tpu.memory_space<vmem>>, vector<16x8xf32>,
    return
  }
  func.func @transform_0(%arg0: i32, %arg1: i32, %arg2: i32) -> (i32, i32, i32, i32) {
    %c0_i32 = arith.constant 0 : i32
    %c0_i32_0 = arith.constant 0 : i32
    return %arg0, %arg1, %arg2, %c0_i32 : i32, i32, i32, i32
  }
  func.func @transform_1(%arg0: i32, %arg1: i32, %arg2: i32) -> (i32, i32, i32, i32) {
    %c0_i32 = arith.constant 0 : i32
    %c0_i32_0 = arith.constant 0 : i32
    return %arg0, %arg1, %arg2, %c0_i32 : i32, i32, i32, i32
  }
  func.func @transform_2(%arg0: i32, %arg1: i32, %arg2: i32) -> (i32, i32, i32, i32, i32) {
    %c0_i32 = arith.constant 0 : i32
    %c0_i32_0 = arith.constant 0 : i32
    %c0_i32_1 = arith.constant 0 : i32
    return %arg0, %arg1, %arg2, %c0_i32, %c0_i32_0 : i32, i32, i32, i32, i32
  }
  func.func @transform_3(%arg0: i32, %arg1: i32, %arg2: i32) -> (i32, i32, i32) {
    %c0_i32 = arith.constant 0 : i32
    %c0_i32_0 = arith.constant 0 : i32
    %c0_i32_1 = arith.constant 0 : i32
    return %arg0, %c0_i32, %c0_i32_0 : i32, i32, i32
  }
  func.func @transform_4(%arg0: i32, %arg1: i32, %arg2: i32) -> (i32, i32, i32) {
    %c0_i32 = arith.constant 0 : i32
    %c0_i32_0 = arith.constant 0 : i32
    %c0_i32_1 = arith.constant 0 : i32
    return %arg0, %c0_i32, %c0_i32_0 : i32, i32, i32
  }
  func.func @transform_5(%arg0: i32, %arg1: i32, %arg2: i32) -> (i32, i32, i32) {
    %c0_i32 = arith.constant 0 : i32
    %c0_i32_0 = arith.constant 0 : i32
    %c0_i32_1 = arith.constant 0 : i32
    return %arg0, %c0_i32, %c0_i32_0 : i32, i32, i32
  }
  func.func @transform_6(%arg0: i32, %arg1: i32, %arg2: i32) -> (i32, i32, i32, i32) {
    %c0_i32 = arith.constant 0 : i32
    %c0_i32_0 = arith.constant 0 : i32
    return %arg0, %arg1, %arg2, %c0_i32 : i32, i32, i32, i32
  }
}

module attributes {stable_mosaic.version = 11 : i64} {
  func.func @_ln_gate_proj_kernel(%arg0: i32, %arg1: memref<128x8xf32, #tpu.memory_space<vmem>>, %arg2: memref<128x8xf32, #tpu.memory_space<vmem>>, %arg3: memref<1x8xf32, #tpu.memory_space<vmem>>, %arg4: memref<1x8xf32, #tpu.memory_space<vmem>>, %arg5: memref<8x4xbf16, #tpu.memory_space<vmem>>, %arg6: memref<128x4xf32, #tpu.memory_space<vmem>>) attributes {dimension_semantics = [#tpu.dimension_semantics<parallel>], iteration_bounds = array<i64: 4>, scalar_prefetch = 0 : i64, scratch_operands = 0 : i64, tpu.core_type = #tpu.core_type<tc>, window_params = [{transform_indices = @transform_0, window_bounds = array<i64: 128, 8>}, {transform_indices = @transform_1, window_bounds = array<i64: 128, 8>}, {pipeline_mode = #tpu.pipeline_mode<synchronous>, transform_indices = @transform_2, window_bounds = array<i64: 1, 8>}, {pipeline_mode = #tpu.pipeline_mode<synchronous>, transform_indices = @transform_3, window_bounds = array<i64: 1, 8>}, {pipeline_mode = #tpu.pipeline_mode<synchronous>, transform_indices = @transform_4, window_bounds = array<i64: 8, 4>}, {transform_indices = @transform_5, window_bounds = array<i64: 128, 4>}]} {
    %c0 = arith.constant 0 : index
    %c0_0 = arith.constant 0 : index
    %0 = vector.load %arg1[%c0, %c0_0] : memref<128x8xf32, #tpu.memory_space<vmem>>, vector<128x8xf32>
    %cst = arith.constant dense<0.000000e+00> : vector<128xf32>
    %1 = vector.multi_reduction <add>, %0, %cst [1] : vector<128x8xf32> to vector<128xf32>
    %2 = vector.shape_cast %1 : vector<128xf32> to vector<128x1xf32>
    %cst_1 = arith.constant 8.000000e+00 : f32
    %3 = vector.broadcast %cst_1 : f32 to vector<128x1xf32>
    %4 = arith.divf %2, %3 : vector<128x1xf32>
    %5 = vector.broadcast %4 : vector<128x1xf32> to vector<128x8xf32>
    %6 = arith.subf %0, %5 : vector<128x8xf32>
    %7 = arith.mulf %6, %6 : vector<128x8xf32>
    %cst_2 = arith.constant dense<0.000000e+00> : vector<128xf32>
    %8 = vector.multi_reduction <add>, %7, %cst_2 [1] : vector<128x8xf32> to vector<128xf32>
    %9 = vector.shape_cast %8 : vector<128xf32> to vector<128x1xf32>
    %cst_3 = arith.constant 8.000000e+00 : f32
    %10 = vector.broadcast %cst_3 : f32 to vector<128x1xf32>
    %11 = arith.divf %9, %10 : vector<128x1xf32>
    %12 = vector.broadcast %4 : vector<128x1xf32> to vector<128x8xf32>
    %13 = arith.subf %0, %12 : vector<128x8xf32>
    %cst_4 = arith.constant 9.99999974E-6 : f32
    %14 = vector.broadcast %cst_4 : f32 to vector<128x1xf32>
    %15 = arith.addf %11, %14 : vector<128x1xf32>
    %16 = math.rsqrt %15 : vector<128x1xf32>
    %17 = vector.broadcast %16 : vector<128x1xf32> to vector<128x8xf32>
    %18 = arith.mulf %13, %17 : vector<128x8xf32>
    %c0_5 = arith.constant 0 : index
    %c0_6 = arith.constant 0 : index
    %19 = vector.load %arg3[%c0_5, %c0_6] : memref<1x8xf32, #tpu.memory_space<vmem>>, vector<1x8xf32>
    %20 = vector.shape_cast %19 : vector<1x8xf32> to vector<8xf32>
    %21 = vector.shape_cast %20 : vector<8xf32> to vector<1x8xf32>
    %22 = vector.broadcast %21 : vector<1x8xf32> to vector<128x8xf32>
    %23 = arith.mulf %18, %22 : vector<128x8xf32>
    %c0_7 = arith.constant 0 : index
    %c0_8 = arith.constant 0 : index
    %24 = vector.load %arg4[%c0_7, %c0_8] : memref<1x8xf32, #tpu.memory_space<vmem>>, vector<1x8xf32>
    %25 = vector.shape_cast %24 : vector<1x8xf32> to vector<8xf32>
    %26 = vector.shape_cast %25 : vector<8xf32> to vector<1x8xf32>
    %27 = vector.broadcast %26 : vector<1x8xf32> to vector<128x8xf32>
    %28 = arith.addf %23, %27 : vector<128x8xf32>
    %c0_9 = arith.constant 0 : index
    %c0_10 = arith.constant 0 : index
    %29 = vector.load %arg2[%c0_9, %c0_10] : memref<128x8xf32, #tpu.memory_space<vmem>>, vector<128x8xf32>
    %30 = arith.negf %29 : vector<128x8xf32>
    %31 = math.exp %30 : vector<128x8xf32>
    %cst_11 = arith.constant 1.000000e+00 : f32
    %32 = vector.broadcast %cst_11 : f32 to vector<128x8xf32>
    %33 = arith.addf %32, %31 : vector<128x8xf32>
    %34 = arith.divf %32, %33 : vector<128x8xf32>
    %35 = arith.mulf %29, %34 : vector<128x8xf32>
    %36 = arith.mulf %28, %35 : vector<128x8xf32>
    %37 = arith.truncf %36 : vector<128x8xf32> to vector<128x8xbf16>
    %c0_12 = arith.constant 0 : index
    %c0_13 = arith.constant 0 : index
    %38 = vector.load %arg5[%c0_12, %c0_13] : memref<8x4xbf16, #tpu.memory_space<vmem>>, vector<8x4xbf16>
    %cst_14 = arith.constant dense<0.000000e+00> : vector<128x4xf32>
    %39 = tpu.matmul %37, %38, %cst_14 {dimension_numbers = #tpu.dot_dimension_numbers<[1], [0], [0], [1], [0, 0, 1, 1], [], []>} : vector<128x8xbf16>, vector<8x4xbf16>, vector<128x4xf32> -> vector<128x4xf32>
    %c0_15 = arith.constant 0 : index
    %c0_16 = arith.constant 0 : index
    %40 = vector.load %arg6[%c0_15, %c0_16] : memref<128x4xf32, #tpu.memory_space<vmem>>, vector<128x4xf32>
    tpu.vector_store %arg6[%c0_15, %c0_16], %39 {strides = array<i32>} : memref<128x4xf32, #tpu.memory_space<vmem>>, vector<128x4xf32>,
    return
  }
  func.func @transform_0(%arg0: i32) -> (i32, i32) {
    %c0_i32 = arith.constant 0 : i32
    %c0_i32_0 = arith.constant 0 : i32
    return %arg0, %c0_i32 : i32, i32
  }
  func.func @transform_1(%arg0: i32) -> (i32, i32) {
    %c0_i32 = arith.constant 0 : i32
    %c0_i32_0 = arith.constant 0 : i32
    return %arg0, %c0_i32 : i32, i32
  }
  func.func @transform_2(%arg0: i32) -> (i32, i32) {
    %c0_i32 = arith.constant 0 : i32
    %c0_i32_0 = arith.constant 0 : i32
    %c0_i32_1 = arith.constant 0 : i32
    return %c0_i32, %c0_i32_0 : i32, i32
  }
  func.func @transform_3(%arg0: i32) -> (i32, i32) {
    %c0_i32 = arith.constant 0 : i32
    %c0_i32_0 = arith.constant 0 : i32
    %c0_i32_1 = arith.constant 0 : i32
    return %c0_i32, %c0_i32_0 : i32, i32
  }
  func.func @transform_4(%arg0: i32) -> (i32, i32) {
    %c0_i32 = arith.constant 0 : i32
    %c0_i32_0 = arith.constant 0 : i32
    %c0_i32_1 = arith.constant 0 : i32
    return %c0_i32, %c0_i32_0 : i32, i32
  }
  func.func @transform_5(%arg0: i32) -> (i32, i32) {
    %c0_i32 = arith.constant 0 : i32
    %c0_i32_0 = arith.constant 0 : i32
    return %arg0, %c0_i32 : i32, i32
  }
}

</mosaic_0001>

<llo_original>
// kernel: ss2d_local_forward.5
$region0: #{ss2d_local_forward.5}
  #allocation0 [shape = 'u32[]', space=smem, size = 0x4, offset = 0x4, fixed_abs, tag = 'smem constant byte address 0x4 - core index']
  #allocation1 [shape = 'u32[144,128]{1,0:T(1,128)}', space=vmem, size = 0x12000, scoped, tag = 'internal scratch']
  %s0 = inlined_call_operand.vmem [shape: f32[512,4], index: 0, kind: input, shape index: {}]
  %s1 = inlined_call_operand.vmem [shape: bf16[4,8], index: 1, kind: input, shape index: {}]
  %s2 = inlined_call_operand.vmem [shape: bf16[4,8], index: 2, kind: input, shape index: {}]
  %s3 = inlined_call_operand.vmem [shape: f32[512,8], index: 3, kind: output, shape index: {0}]
  %s4 = inlined_call_operand.vmem [shape: f32[512,8], index: 4, kind: output, shape index: {1}]
  %5 = xla_tuple %s3, %s4
  %s6 = sld [smem:[#allocation0]]
  $region53: #{ss2d_local_forward.5} parent=0
    _
  %s8 = ssub.s32 1, %s6
  %s9 = scalar_select 0, %s8, %s6
  loop: start=0, step=1, limit=6
  $region2: #{ss2d_local_forward.5} parent=0 // loop_pre_header
    _
  $region3: #{ss2d_local_forward.5} parent=0 // loop_header
    %s11 = sphi 0, %s15
    %p12 = scmp.ge.s32.totalorder %s11, 6
    %s21 = sphi 0, %s23
    %s24 = sphi 0, %s21
    %s25 = sphi 0, %s24
    %s41 = sphi 0, %s25
    %s45 = sphi 0, %s45
    %s47 = sphi 0, %s45
    %s48 = sphi 0, %s47
    %s62 = sphi 0, %s48
    %s66 = sphi 0, %s66
    %s68 = sphi 0, %s66
    %s69 = sphi 0, %s68
    %s83 = sphi 0, %s69
    %s89 = sphi 0, %s91
    %s92 = sphi 0, %s89
    %s93 = sphi 0, %s92
    %s109 = sphi 0, %s93
    %s115 = sphi 0, %s117
    %s118 = sphi 0, %s115
    %s119 = sphi 0, %s118
    %s135 = sphi 0, %s119
  $region4: #{ss2d_local_forward.5} parent=0 // loop_header_branch
    %14 = sbr.rel (%p12) target = $region8
  $region5: #{ss2d_local_forward.5} parent=0 // loop_body
    %s16 = ssub.s32 %s11, 1
    %s17 = ssub.s32 %s11, 2
    %s18 = sadd.s32 %s11, 1
    %s19 = ssub.s32 %s11, %s18
    %p20 = scmp.eq.s32.totalorder %s19, 0
    %s22 = sadd.s32 %s21, 1
    %s23 = scalar_select %p20, %s21, %s22
    %p26 = pneg %p20
    %p27 = scmp.eq.s32.totalorder %s11, 3
    %p28 = por %p26, %p27
    %p29 = scmp.ne.s32.totalorder %s21, %s24
    %p30 = scmp.eq.s32.totalorder %s11, 0
    %p31 = por %p29, %p30
    %p32 = scmp.ne.s32.totalorder %s21, %s24
    %p33 = scmp.eq.s32.totalorder %s16, 3
    %p34 = por %p32, %p33
    %p35 = scmp.ne.s32.totalorder %s24, %s25
    %p36 = scmp.eq.s32.totalorder %s16, 0
    %p37 = por %p35, %p36
    %p38 = scmp.ne.s32.totalorder %s24, %s25
    %p39 = scmp.eq.s32.totalorder %s17, 3
    %p40 = por %p38, %p39
    %p42 = scmp.ne.s32.totalorder %s25, %s41
    %p43 = scmp.eq.s32.totalorder %s17, 0
    %p44 = por %p42, %p43
    %s46 = sadd.s32 %s45, 1
    %p49 = scmp.eq.s32.totalorder %s11, 3
    %p50 = scmp.ne.s32.totalorder %s45, %s47
    %p51 = scmp.eq.s32.totalorder %s11, 0
    %p52 = por %p50, %p51
    %p53 = scmp.ne.s32.totalorder %s45, %s47
    %p54 = scmp.eq.s32.totalorder %s16, 3
    %p55 = por %p53, %p54
    %p56 = scmp.ne.s32.totalorder %s47, %s48
    %p57 = scmp.eq.s32.totalorder %s16, 0
    %p58 = por %p56, %p57
    %p59 = scmp.ne.s32.totalorder %s47, %s48
    %p60 = scmp.eq.s32.totalorder %s17, 3
    %p61 = por %p59, %p60
    %p63 = scmp.ne.s32.totalorder %s48, %s62
    %p64 = scmp.eq.s32.totalorder %s17, 0
    %p65 = por %p63, %p64
    %s67 = sadd.s32 %s66, 1
    %p70 = scmp.eq.s32.totalorder %s11, 3
    %p71 = scmp.ne.s32.totalorder %s66, %s68
    %p72 = scmp.eq.s32.totalorder %s11, 0
    %p73 = por %p71, %p72
    %p74 = scmp.ne.s32.totalorder %s66, %s68
    %p75 = scmp.eq.s32.totalorder %s16, 3
    %p76 = por %p74, %p75
    %p77 = scmp.ne.s32.totalorder %s68, %s69
    %p78 = scmp.eq.s32.totalorder %s16, 0
    %p79 = por %p77, %p78
    %p80 = scmp.ne.s32.totalorder %s68, %s69
    %p81 = scmp.eq.s32.totalorder %s17, 3
    %p82 = por %p80, %p81
    %p84 = scmp.ne.s32.totalorder %s69, %s83
    %p85 = scmp.eq.s32.totalorder %s17, 0
    %p86 = por %p84, %p85
    %s87 = ssub.s32 %s11, %s18
    %p88 = scmp.eq.s32.totalorder %s87, 0
    %s90 = sadd.s32 %s89, 1
    %s91 = scalar_select %p88, %s89, %s90
    %p94 = pneg %p88
    %p95 = scmp.eq.s32.totalorder %s11, 3
    %p96 = por %p94, %p95
    %p97 = scmp.ne.s32.totalorder %s89, %s92
    %p98 = scmp.eq.s32.totalorder %s11, 0
    %p99 = por %p97, %p98
    %p100 = scmp.ne.s32.totalorder %s89, %s92
    %p101 = scmp.eq.s32.totalorder %s16, 3
    %p102 = por %p100, %p101
    %p103 = scmp.ne.s32.totalorder %s92, %s93
    %p104 = scmp.eq.s32.totalorder %s16, 0
    %p105 = por %p103, %p104
    %p106 = scmp.ne.s32.totalorder %s92, %s93
    %p107 = scmp.eq.s32.totalorder %s17, 3
    %p108 = por %p106, %p107
    %p110 = scmp.ne.s32.totalorder %s93, %s109
    %p111 = scmp.eq.s32.totalorder %s17, 0
    %p112 = por %p110, %p111
    %s113 = ssub.s32 %s11, %s18
    %p114 = scmp.eq.s32.totalorder %s113, 0
    %s116 = sadd.s32 %s115, 1
    %s117 = scalar_select %p114, %s115, %s116
    %p120 = pneg %p114
    %p121 = scmp.eq.s32.totalorder %s11, 3
    %p122 = por %p120, %p121
    %p123 = scmp.ne.s32.totalorder %s115, %s118
    %p124 = scmp.eq.s32.totalorder %s11, 0
    %p125 = por %p123, %p124
    %p126 = scmp.ne.s32.totalorder %s115, %s118
    %p127 = scmp.eq.s32.totalorder %s16, 3
    %p128 = por %p126, %p127
    %p129 = scmp.ne.s32.totalorder %s118, %s119
    %p130 = scmp.eq.s32.totalorder %s16, 0
    %p131 = por %p129, %p130
    %p132 = scmp.ne.s32.totalorder %s118, %s119
    %p133 = scmp.eq.s32.totalorder %s17, 3
    %p134 = por %p132, %p133
    %p136 = scmp.ne.s32.totalorder %s119, %s135
    %p137 = scmp.eq.s32.totalorder %s17, 0
    %p138 = por %p136, %p137
    %p139 = scmp.le.s32.totalorder 1, %s11
    %p140 = scmp.lt.s32.totalorder %s11, 5
    %p141 = pnand %p139, %p140
    %p142 = pneg %p141
    // Predicated region
    $region9: #{ss2d_local_forward.5} parent=5 // pred_check
      _
    $region10: #{ss2d_local_forward.5} parent=5 // pred_check_branch
      %144 = sbr.rel (%p141) target = $region12
    $region11: #{ss2d_local_forward.5} parent=5 // pred_region
      %s145 = ssub.s32 %s11, 1
      // Predicated region
      $region13: #{ss2d_local_forward.5} parent=11 // pred_check
        %p146 = pneg %p58
      $region14: #{ss2d_local_forward.5} parent=11 // pred_check_branch
        %148 = sbr.rel (%p146) target = $region16
      $region15: #{ss2d_local_forward.5} parent=11 // pred_region
        _
      $region16: #{ss2d_local_forward.5} parent=11 // pred_fallthru
        _
      // Predicated region
      $region17: #{ss2d_local_forward.5} parent=11 // pred_check
        %p149 = pneg %p79
      $region18: #{ss2d_local_forward.5} parent=11 // pred_check_branch
        %151 = sbr.rel (%p149) target = $region20
      $region19: #{ss2d_local_forward.5} parent=11 // pred_region
        _
      $region20: #{ss2d_local_forward.5} parent=11 // pred_fallthru
        _
    $region12: #{ss2d_local_forward.5} parent=5 // pred_fallthru
      _
    %p152 = scmp.lt.s32.totalorder %s11, 4
    // Predicated region
    $region21: #{ss2d_local_forward.5} parent=5 // pred_check
      %p153 = pneg %p152
    $region22: #{ss2d_local_forward.5} parent=5 // pred_check_branch
      %155 = sbr.rel (%p153) target = $region24
    $region23: #{ss2d_local_forward.5} parent=5 // pred_region
      // Predicated region
      $region25: #{ss2d_local_forward.5} parent=23 // pred_check
        %p156 = pneg %p31
      $region26: #{ss2d_local_forward.5} parent=23 // pred_check_branch
        %158 = sbr.rel (%p156) target = $region28
      $region27: #{ss2d_local_forward.5} parent=23 // pred_region
        %s159 = smul.u32 16, %s11
        %p160 = scmp.lt.s32.totalorder %s159, 63
        %s161 = scalar_select %p160, %s159, 63
        %s162 = smul.addr %s161, 8
        %s163 = scalar_lea.vmem %s0, %s162
        %s164 = smul.u32 16, %s11
      $region28: #{ss2d_local_forward.5} parent=23 // pred_fallthru
        _
    $region24: #{ss2d_local_forward.5} parent=5 // pred_fallthru
      _
    %p165 = scmp.le.s32.totalorder 1, %s11
    %p166 = scmp.lt.s32.totalorder %s11, 5
    %p167 = pnand %p165, %p166
    %p168 = pneg %p167
    // Predicated region
    $region29: #{ss2d_local_forward.5} parent=5 // pred_check
      _
    $region30: #{ss2d_local_forward.5} parent=5 // pred_check_branch
      %170 = sbr.rel (%p167) target = $region32
    $region31: #{ss2d_local_forward.5} parent=5 // pred_region
      %s171 = ssub.s32 %s11, 1
      %s172 = smul.u32 16, %s16
      %p173 = scmp.lt.s32.totalorder %s172, 63
      %s174 = scalar_select %p173, %s172, 63
      %s175 = smul.addr %s174, 8
      %s176 = scalar_lea.vmem %s0, %s175
      %p177 = pneg %p37
      %p178 = pneg %p34
      %p179 = pneg %p58
      %p180 = pneg %p55
      %p181 = pneg %p79
      %p182 = pneg %p76
      %p183 = pneg %p105
      %p184 = pneg %p102
      %s185 = smul.u32 16, %s16
      %p186 = scmp.lt.s32.totalorder %s185, 63
      %s187 = scalar_select %p186, %s185, 63
      %s188 = smul.addr %s187, 8
      %s189 = scalar_lea.vmem %s3, %s188
      %p190 = pneg %p131
      %p191 = pneg %p128
      %s192 = smul.u32 16, %s16
      %p193 = scmp.lt.s32.totalorder %s192, 63
      %s194 = scalar_select %p193, %s192, 63
      %s195 = smul.addr %s194, 8
      %s196 = scalar_lea.vmem %s4, %s195
      %s197 = smul.u32 16, %s16
      %p198 = scmp.lt.s32.totalorder %s197, 63
      %s199 = scalar_select %p198, %s197, 63
      %s200 = smul.addr %s199, 8
      %s201 = scalar_lea.vmem %s0, %s200
      %s202 = smul.u32 16, %s16
      %s203 = smul.u32 16, %s16
      %p204 = scmp.lt.s32.totalorder %s203, 63
      %s205 = scalar_select %p204, %s203, 63
      %s206 = smul.addr %s205, 8
      %s207 = scalar_lea.vmem %s3, %s206
      %s208 = smul.u32 16, %s16
      %s209 = smul.u32 16, %s16
      %p210 = scmp.lt.s32.totalorder %s209, 63
      %s211 = scalar_select %p210, %s209, 63
      %s212 = smul.addr %s211, 8
      %s213 = scalar_lea.vmem %s4, %s212
      %s214 = smul.u32 16, %s16
      %v216 = vld [vmem:[%s201] sm:$0xff]
      %v217 = vld [vmem:[%s201 + $0x8] sm:$0xff]
      %v218 = vld [vmem:[%s201 + $0x10] sm:$0xff]
      %v219 = vld [vmem:[%s201 + $0x18] sm:$0xff]
      %v220 = vld [vmem:[%s201 + $0x20] sm:$0xff]
      %v221 = vld [vmem:[%s201 + $0x28] sm:$0xff]
      %v222 = vld [vmem:[%s201 + $0x30] sm:$0xff]
      %v223 = vld [vmem:[%s201 + $0x38] sm:$0xff]
      %v224 = vld [vmem:[%s201 + $0x40] sm:$0xff]
      %v225 = vld [vmem:[%s201 + $0x48] sm:$0xff]
      %v226 = vld [vmem:[%s201 + $0x50] sm:$0xff]
      %v227 = vld [vmem:[%s201 + $0x58] sm:$0xff]
      %v228 = vld [vmem:[%s201 + $0x60] sm:$0xff]
      %v229 = vld [vmem:[%s201 + $0x68] sm:$0xff]
      %v230 = vld [vmem:[%s201 + $0x70] sm:$0xff]
      %v231 = vld [vmem:[%s201 + $0x78] sm:$0xff]
      %v232 = vpack.c.bf16 %v217, %v216
      %v233 = vpack.c.bf16 %v219, %v218
      %v234 = vpack.c.bf16 %v221, %v220
      %v235 = vpack.c.bf16 %v223, %v222
      %v236 = vpack.c.bf16 %v225, %v224
      %v237 = vpack.c.bf16 %v227, %v226
      %v238 = vpack.c.bf16 %v229, %v228
      %v239 = vpack.c.bf16 %v231, %v230
      %v240 = vld [vmem:[%s1] sm:$0x3]
      %vm241 = vcmask 31744
      %v243 = vsel %vm241, %v232, 0
      %v246 = vsel %vm241, %v233, 0
      %v249 = vsel %vm241, %v234, 0
      %v252 = vsel %vm241, %v235, 0
      %v255 = vsel %vm241, %v236, 0
      %v258 = vsel %vm241, %v237, 0
      %v261 = vsel %vm241, %v238, 0
      %v264 = vsel %vm241, %v239, 0
      %vm266 = vcmask 1041408
      %v268 = vsel %vm266, %v240, 0
      %270 = vmatprep.subr.bf16.mxu0 0
      %271 = vmatpush1.bf16.msra.mxu0 0
      %272 = vmatprep.subr.bf16.mxu0 0
      %273 = vmatpush1.bf16.msra.mxu0 0
      %274 = vmatprep.subr.bf16.mxu0 0
      %275 = vmatpush1.bf16.msra.mxu0 0
      %276 = vmatprep.subr.bf16.mxu0 0
      %277 = vmatpush1.bf16.msra.mxu0 0
      %278 = vmatprep.subr.bf16.mxu0 0
      %279 = vmatpush1.bf16.msra.mxu0 0
      %280 = vmatprep.subr.bf16.mxu0 0
      %281 = vmatpush1.bf16.msra.mxu0 0
      %282 = vmatprep.subr.bf16.mxu0 0
      %283 = vmatpush1.bf16.msra.mxu0 0
      %284 = vmatprep.subr.bf16.mxu0 0
      %285 = vmatpush1.bf16.msra.mxu0 %v268
      %286 = vmatprep.subr.bf16.mxu0 0
      %287 = vmatpush2.bf16.msra.mxu0 0
      %288 = vmatprep.subr.bf16.mxu0 0
      %289 = vmatpush2.bf16.msra.mxu0 0
      %290 = vmatprep.subr.bf16.mxu0 0
      %291 = vmatpush2.bf16.msra.mxu0 0
      %292 = vmatprep.subr.bf16.mxu0 0
      %293 = vmatpush2.bf16.msra.mxu0 0
      %294 = vmatprep.subr.bf16.mxu0 0
      %295 = vmatpush2.bf16.msra.mxu0 0
      %296 = vmatprep.subr.bf16.mxu0 0
      %297 = vmatpush2.bf16.msra.mxu0 0
      %298 = vmatprep.subr.bf16.mxu0 0
      %299 = vmatpush2.bf16.msra.mxu0 0
      %300 = vmatprep.subr.bf16.mxu0 0
      %301 = vmatpush2.bf16.msra.mxu0 0
      %302 = vmatprep.mubr.bf16.mxu0 0
      %303 = vmatmul.mubr.bf16.gmra.mxu0 %v243
      %v304 = vpop.f32.mrf.mxu0
      %v305 = vadd.f32 0.0, %v304
      %v306 = vpop.f32.mrf.mxu0
      %v307 = vpop.f32.mrf.mxu0
      %v308 = vadd.f32 0.0, %v307
      %v309 = vpop.f32.mrf.mxu0
      %310 = vmatprep.mubr.bf16.mxu0 0
      %311 = vmatmul.mubr.bf16.gmra.mxu0 %v246
      %v312 = vpop.f32.mrf.mxu0
      %v313 = vadd.f32 0.0, %v312
      %v314 = vpop.f32.mrf.mxu0
      %v315 = vpop.f32.mrf.mxu0
      %v316 = vadd.f32 0.0, %v315
      %v317 = vpop.f32.mrf.mxu0
      %318 = vmatprep.mubr.bf16.mxu0 0
      %319 = vmatmul.mubr.bf16.gmra.mxu0 %v249
      %v320 = vpop.f32.mrf.mxu0
      %v321 = vadd.f32 0.0, %v320
      %v322 = vpop.f32.mrf.mxu0
      %v323 = vpop.f32.mrf.mxu0
      %v324 = vadd.f32 0.0, %v323
      %v325 = vpop.f32.mrf.mxu0
      %326 = vmatprep.mubr.bf16.mxu0 0
      %327 = vmatmul.mubr.bf16.gmra.mxu0 %v252
      %v328 = vpop.f32.mrf.mxu0
      %v329 = vadd.f32 0.0, %v328
      %v330 = vpop.f32.mrf.mxu0
      %v331 = vpop.f32.mrf.mxu0
      %v332 = vadd.f32 0.0, %v331
      %v333 = vpop.f32.mrf.mxu0
      %334 = vmatprep.mubr.bf16.mxu0 0
      %335 = vmatmul.mubr.bf16.gmra.mxu0 %v255
      %v336 = vpop.f32.mrf.mxu0
      %v337 = vadd.f32 0.0, %v336
      %v338 = vpop.f32.mrf.mxu0
      %v339 = vpop.f32.mrf.mxu0
      %v340 = vadd.f32 0.0, %v339
      %v341 = vpop.f32.mrf.mxu0
      %342 = vmatprep.mubr.bf16.mxu0 0
      %343 = vmatmul.mubr.bf16.gmra.mxu0 %v258
      %v344 = vpop.f32.mrf.mxu0
      %v345 = vadd.f32 0.0, %v344
      %v346 = vpop.f32.mrf.mxu0
      %v347 = vpop.f32.mrf.mxu0
      %v348 = vadd.f32 0.0, %v347
      %v349 = vpop.f32.mrf.mxu0
      %350 = vmatprep.mubr.bf16.mxu0 0
      %351 = vmatmul.mubr.bf16.gmra.mxu0 %v261
      %v352 = vpop.f32.mrf.mxu0
      %v353 = vadd.f32 0.0, %v352
      %v354 = vpop.f32.mrf.mxu0
      %v355 = vpop.f32.mrf.mxu0
      %v356 = vadd.f32 0.0, %v355
      %v357 = vpop.f32.mrf.mxu0
      %358 = vmatprep.mubr.bf16.mxu0 0
      %359 = vmatmul.mubr.bf16.gmra.mxu0 %v264
      %v360 = vpop.f32.mrf.mxu0
      %v361 = vadd.f32 0.0, %v360
      %v362 = vpop.f32.mrf.mxu0
      %v363 = vpop.f32.mrf.mxu0
      %v364 = vadd.f32 0.0, %v363
      %v365 = vpop.f32.mrf.mxu0
      %366 = vdwg.mxu0
      %vm367 = vcmask 64512
      %368 = vst.msk [vmem:[%s207] sm:$0xff] %vm367, %v305
      %369 = vst.msk [vmem:[%s207 + $0x8] sm:$0xff] %vm367, %v308
      %370 = vst.msk [vmem:[%s207 + $0x10] sm:$0xff] %vm367, %v313
      %371 = vst.msk [vmem:[%s207 + $0x18] sm:$0xff] %vm367, %v316
      %372 = vst.msk [vmem:[%s207 + $0x20] sm:$0xff] %vm367, %v321
      %373 = vst.msk [vmem:[%s207 + $0x28] sm:$0xff] %vm367, %v324
      %374 = vst.msk [vmem:[%s207 + $0x30] sm:$0xff] %vm367, %v329
      %375 = vst.msk [vmem:[%s207 + $0x38] sm:$0xff] %vm367, %v332
      %376 = vst.msk [vmem:[%s207 + $0x40] sm:$0xff] %vm367, %v337
      %377 = vst.msk [vmem:[%s207 + $0x48] sm:$0xff] %vm367, %v340
      %378 = vst.msk [vmem:[%s207 + $0x50] sm:$0xff] %vm367, %v345
      %379 = vst.msk [vmem:[%s207 + $0x58] sm:$0xff] %vm367, %v348
      %380 = vst.msk [vmem:[%s207 + $0x60] sm:$0xff] %vm367, %v353
      %381 = vst.msk [vmem:[%s207 + $0x68] sm:$0xff] %vm367, %v356
      %382 = vst.msk [vmem:[%s207 + $0x70] sm:$0xff] %vm367, %v361
      %383 = vst.msk [vmem:[%s207 + $0x78] sm:$0xff] %vm367, %v364
      %v384 = vld [vmem:[%s2] sm:$0x3]
      %v386 = vsel %vm266, %v384, 0
      %388 = vmatprep.subr.bf16.mxu0 0
      %389 = vmatpush1.bf16.msra.mxu0 0
      %390 = vmatprep.subr.bf16.mxu0 0
      %391 = vmatpush1.bf16.msra.mxu0 0
      %392 = vmatprep.subr.bf16.mxu0 0
      %393 = vmatpush1.bf16.msra.mxu0 0
      %394 = vmatprep.subr.bf16.mxu0 0
      %395 = vmatpush1.bf16.msra.mxu0 0
      %396 = vmatprep.subr.bf16.mxu0 0
      %397 = vmatpush1.bf16.msra.mxu0 0
      %398 = vmatprep.subr.bf16.mxu0 0
      %399 = vmatpush1.bf16.msra.mxu0 0
      %400 = vmatprep.subr.bf16.mxu0 0
      %401 = vmatpush1.bf16.msra.mxu0 0
      %402 = vmatprep.subr.bf16.mxu0 0
      %403 = vmatpush1.bf16.msra.mxu0 %v386
      %404 = vmatprep.subr.bf16.mxu0 0
      %405 = vmatpush2.bf16.msra.mxu0 0
      %406 = vmatprep.subr.bf16.mxu0 0
      %407 = vmatpush2.bf16.msra.mxu0 0
      %408 = vmatprep.subr.bf16.mxu0 0
      %409 = vmatpush2.bf16.msra.mxu0 0
      %410 = vmatprep.subr.bf16.mxu0 0
      %411 = vmatpush2.bf16.msra.mxu0 0
      %412 = vmatprep.subr.bf16.mxu0 0
      %413 = vmatpush2.bf16.msra.mxu0 0
      %414 = vmatprep.subr.bf16.mxu0 0
      %415 = vmatpush2.bf16.msra.mxu0 0
      %416 = vmatprep.subr.bf16.mxu0 0
      %417 = vmatpush2.bf16.msra.mxu0 0
      %418 = vmatprep.subr.bf16.mxu0 0
      %419 = vmatpush2.bf16.msra.mxu0 0
      %420 = vmatprep.mubr.bf16.mxu0 0
      %421 = vmatmul.mubr.bf16.gmra.mxu0 %v243
      %v422 = vpop.f32.mrf.mxu0
      %v423 = vadd.f32 0.0, %v422
      %v424 = vpop.f32.mrf.mxu0
      %v425 = vpop.f32.mrf.mxu0
      %v426 = vadd.f32 0.0, %v425
      %v427 = vpop.f32.mrf.mxu0
      %428 = vmatprep.mubr.bf16.mxu0 0
      %429 = vmatmul.mubr.bf16.gmra.mxu0 %v246
      %v430 = vpop.f32.mrf.mxu0
      %v431 = vadd.f32 0.0, %v430
      %v432 = vpop.f32.mrf.mxu0
      %v433 = vpop.f32.mrf.mxu0
      %v434 = vadd.f32 0.0, %v433
      %v435 = vpop.f32.mrf.mxu0
      %436 = vmatprep.mubr.bf16.mxu0 0
      %437 = vmatmul.mubr.bf16.gmra.mxu0 %v249
      %v438 = vpop.f32.mrf.mxu0
      %v439 = vadd.f32 0.0, %v438
      %v440 = vpop.f32.mrf.mxu0
      %v441 = vpop.f32.mrf.mxu0
      %v442 = vadd.f32 0.0, %v441
      %v443 = vpop.f32.mrf.mxu0
      %444 = vmatprep.mubr.bf16.mxu0 0
      %445 = vmatmul.mubr.bf16.gmra.mxu0 %v252
      %v446 = vpop.f32.mrf.mxu0
      %v447 = vadd.f32 0.0, %v446
      %v448 = vpop.f32.mrf.mxu0
      %v449 = vpop.f32.mrf.mxu0
      %v450 = vadd.f32 0.0, %v449
      %v451 = vpop.f32.mrf.mxu0
      %452 = vmatprep.mubr.bf16.mxu0 0
      %453 = vmatmul.mubr.bf16.gmra.mxu0 %v255
      %v454 = vpop.f32.mrf.mxu0
      %v455 = vadd.f32 0.0, %v454
      %v456 = vpop.f32.mrf.mxu0
      %v457 = vpop.f32.mrf.mxu0
      %v458 = vadd.f32 0.0, %v457
      %v459 = vpop.f32.mrf.mxu0
      %460 = vmatprep.mubr.bf16.mxu0 0
      %461 = vmatmul.mubr.bf16.gmra.mxu0 %v258
      %v462 = vpop.f32.mrf.mxu0
      %v463 = vadd.f32 0.0, %v462
      %v464 = vpop.f32.mrf.mxu0
      %v465 = vpop.f32.mrf.mxu0
      %v466 = vadd.f32 0.0, %v465
      %v467 = vpop.f32.mrf.mxu0
      %468 = vmatprep.mubr.bf16.mxu0 0
      %469 = vmatmul.mubr.bf16.gmra.mxu0 %v261
      %v470 = vpop.f32.mrf.mxu0
      %v471 = vadd.f32 0.0, %v470
      %v472 = vpop.f32.mrf.mxu0
      %v473 = vpop.f32.mrf.mxu0
      %v474 = vadd.f32 0.0, %v473
      %v475 = vpop.f32.mrf.mxu0
      %476 = vmatprep.mubr.bf16.mxu0 0
      %477 = vmatmul.mubr.bf16.gmra.mxu0 %v264
      %v478 = vpop.f32.mrf.mxu0
      %v479 = vadd.f32 0.0, %v478
      %v480 = vpop.f32.mrf.mxu0
      %v481 = vpop.f32.mrf.mxu0
      %v482 = vadd.f32 0.0, %v481
      %v483 = vpop.f32.mrf.mxu0
      %484 = vdwg.mxu0
      %485 = vst.msk [vmem:[%s213] sm:$0xff] %vm367, %v423
      %486 = vst.msk [vmem:[%s213 + $0x8] sm:$0xff] %vm367, %v426
      %487 = vst.msk [vmem:[%s213 + $0x10] sm:$0xff] %vm367, %v431
      %488 = vst.msk [vmem:[%s213 + $0x18] sm:$0xff] %vm367, %v434
      %489 = vst.msk [vmem:[%s213 + $0x20] sm:$0xff] %vm367, %v439
      %490 = vst.msk [vmem:[%s213 + $0x28] sm:$0xff] %vm367, %v442
      %491 = vst.msk [vmem:[%s213 + $0x30] sm:$0xff] %vm367, %v447
      %492 = vst.msk [vmem:[%s213 + $0x38] sm:$0xff] %vm367, %v450
      %493 = vst.msk [vmem:[%s213 + $0x40] sm:$0xff] %vm367, %v455
      %494 = vst.msk [vmem:[%s213 + $0x48] sm:$0xff] %vm367, %v458
      %495 = vst.msk [vmem:[%s213 + $0x50] sm:$0xff] %vm367, %v463
      %496 = vst.msk [vmem:[%s213 + $0x58] sm:$0xff] %vm367, %v466
      %497 = vst.msk [vmem:[%s213 + $0x60] sm:$0xff] %vm367, %v471
      %498 = vst.msk [vmem:[%s213 + $0x68] sm:$0xff] %vm367, %v474
      %499 = vst.msk [vmem:[%s213 + $0x70] sm:$0xff] %vm367, %v479
      %500 = vst.msk [vmem:[%s213 + $0x78] sm:$0xff] %vm367, %v482
      %s501 = smul.u32 16, %s16
      %p502 = scmp.lt.s32.totalorder %s501, 63
      %s503 = scalar_select %p502, %s501, 63
      %s504 = smul.addr %s503, 8
      %s505 = scalar_lea.vmem %s3, %s504
      %s506 = smul.u32 16, %s16
      %p507 = scmp.lt.s32.totalorder %s506, 63
      %s508 = scalar_select %p507, %s506, 63
      %s509 = smul.addr %s508, 8
      %s510 = scalar_lea.vmem %s4, %s509
      // Predicated region
      $region33: #{ss2d_local_forward.5} parent=31 // pred_check
        %p511 = pneg %p102
      $region34: #{ss2d_local_forward.5} parent=31 // pred_check_branch
        %513 = sbr.rel (%p511) target = $region36
      $region35: #{ss2d_local_forward.5} parent=31 // pred_region
        %s514 = smul.u32 16, %s16
      $region36: #{ss2d_local_forward.5} parent=31 // pred_fallthru
        _
      // Predicated region
      $region37: #{ss2d_local_forward.5} parent=31 // pred_check
        %p515 = pneg %p128
      $region38: #{ss2d_local_forward.5} parent=31 // pred_check_branch
        %517 = sbr.rel (%p515) target = $region40
      $region39: #{ss2d_local_forward.5} parent=31 // pred_region
        %s518 = smul.u32 16, %s16
      $region40: #{ss2d_local_forward.5} parent=31 // pred_fallthru
        _
    $region32: #{ss2d_local_forward.5} parent=5 // pred_fallthru
      _
    %p519 = scmp.le.s32.totalorder 2, %s11
    // Predicated region
    $region41: #{ss2d_local_forward.5} parent=5 // pred_check
      %p520 = pneg %p519
    $region42: #{ss2d_local_forward.5} parent=5 // pred_check_branch
      %522 = sbr.rel (%p520) target = $region44
    $region43: #{ss2d_local_forward.5} parent=5 // pred_region
      %s523 = ssub.s32 %s11, 2
      // Predicated region
      $region45: #{ss2d_local_forward.5} parent=43 // pred_check
        %p524 = pneg %p108
      $region46: #{ss2d_local_forward.5} parent=43 // pred_check_branch
        %526 = sbr.rel (%p524) target = $region48
      $region47: #{ss2d_local_forward.5} parent=43 // pred_region
        %s527 = smul.u32 16, %s17
        %p528 = scmp.lt.s32.totalorder %s527, 63
        %s529 = scalar_select %p528, %s527, 63
        %s530 = smul.addr %s529, 8
        %s531 = scalar_lea.vmem %s3, %s530
      $region48: #{ss2d_local_forward.5} parent=43 // pred_fallthru
        _
      // Predicated region
      $region49: #{ss2d_local_forward.5} parent=43 // pred_check
        %p532 = pneg %p134
      $region50: #{ss2d_local_forward.5} parent=43 // pred_check_branch
        %534 = sbr.rel (%p532) target = $region52
      $region51: #{ss2d_local_forward.5} parent=43 // pred_region
        %s535 = smul.u32 16, %s17
        %p536 = scmp.lt.s32.totalorder %s535, 63
        %s537 = scalar_select %p536, %s535, 63
        %s538 = smul.addr %s537, 8
        %s539 = scalar_lea.vmem %s4, %s538
      $region52: #{ss2d_local_forward.5} parent=43 // pred_fallthru
        _
    $region44: #{ss2d_local_forward.5} parent=5 // pred_fallthru
      _
  $region6: #{ss2d_local_forward.5} parent=0 // loop_footer
    %s15 = sadd.s32 1, %s11
  $region7: #{ss2d_local_forward.5} parent=0 // loop_footer_branch
    %10 = sbr.rel target = $region3
  $region8: #{ss2d_local_forward.5} parent=0 // loop_exit
    _

// kernel: ss2d_local_forward.6
$region0: #{ss2d_local_forward.6}
  #allocation0 [shape = 'u32[]', space=smem, size = 0x4, offset = 0x4, fixed_abs, tag = 'smem constant byte address 0x4 - core index']
  #allocation1 [shape = 'u32[144,128]{1,0:T(1,128)}', space=vmem, size = 0x12000, scoped, tag = 'internal scratch']
  %s0 = inlined_call_operand.vmem [shape: f32[2,16,16,8], index: 0, kind: input, shape index: {}]
  %s1 = inlined_call_operand.hbm [shape: f32[3,3,8], index: 1, kind: input, shape index: {}]
  %s2 = inlined_call_operand.hbm [shape: f32[1,8], index: 2, kind: input, shape index: {}]
  %s3 = inlined_call_operand.vmem [shape: f32[2,16,16,8], index: 3, kind: output, shape index: {}]
  %s4 = sld [smem:[#allocation0]]
  $region53: #{ss2d_local_forward.6} parent=0
    _
  %s6 = ssub.s32 1, %s4
  %s7 = scalar_select 0, %s6, %s4
  $region1: #{ss2d_local_forward.6} parent=0
    #allocation2 [shape = 'u8[6144]{0}', space=vmem, size = 0x1800, scoped, tag = 'input window, operand 1, single buffered']
    #allocation3 [shape = 's32[2]{0}', space=sflag, size = 0x8, scoped, tag = 'scoped memory for ss2d_local_forward.6']
    #allocation4 [shape = 'u8[512]{0}', space=vmem, size = 0x400, scoped, tag = 'input window, operand 2, single buffered']
    #allocation5 [shape = 's32[1]{0}', space=sflag, size = 0x4, scoped, tag = 'scoped memory for ss2d_local_forward.6']
    %8 = vsyncpa [#allocation3], 0
    %9 = vsyncpa [#allocation5], 0
    loop: start=0, step=1, limit=4
    $region2: #{ss2d_local_forward.6} parent=1 // loop_pre_header
      _
    $region3: #{ss2d_local_forward.6} parent=1 // loop_header
      %s11 = sphi 0, %s15
      %p12 = scmp.ge.s32.totalorder %s11, 4
      %s18 = sphi 0, %s30
      %s19 = sphi 0, %s26
      %s20 = sphi 0, %s18
      %s21 = sphi 0, %s19
      %s22 = sphi 0, %s20
      %s23 = sphi 0, %s21
      %s35 = sphi 0, %s37
      %s38 = sphi 0, %s35
      %s39 = sphi 0, %s38
      %s55 = sphi 0, %s39
      %s61 = sphi 0, %s63
      %s64 = sphi 0, %s61
      %s65 = sphi 0, %s64
      %s81 = sphi 0, %s65
      %s87 = sphi 0, %s89
      %s90 = sphi 0, %s87
      %s91 = sphi 0, %s90
      %s107 = sphi 0, %s91
      %s115 = sphi 0, %s117
      %s118 = sphi 0, %s115
      %s119 = sphi 0, %s118
      %s135 = sphi 0, %s119
    $region4: #{ss2d_local_forward.6} parent=1 // loop_header_branch
      %14 = sbr.rel (%p12) target = $region8
    $region5: #{ss2d_local_forward.6} parent=1 // loop_body
      %s16 = ssub.s32 %s11, 1
      %s17 = ssub.s32 %s11, 2
      %s24 = sadd.s32 1, %s19
      %p25 = scmp.ge.s32.totalorder %s24, 1
      %s26 = scalar_select %p25, 0, %s24
      %s27 = sadd.s32 1, %s18
      %s28 = scalar_select %p25, %s27, %s18
      %p29 = scmp.ge.s32.totalorder %s28, 2
      %s30 = scalar_select %p29, 0, %s28
      %s31 = ssub.s32 %s18, %s30
      %s32 = ssub.s32 %s19, %s26
      %s33 = sor.u32 %s31, %s32
      %p34 = scmp.eq.s32.totalorder %s33, 0
      %s36 = sadd.s32 %s35, 1
      %s37 = scalar_select %p34, %s35, %s36
      %p40 = pneg %p34
      %p41 = scmp.eq.s32.totalorder %s11, 1
      %p42 = por %p40, %p41
      %p43 = scmp.ne.s32.totalorder %s35, %s38
      %p44 = scmp.eq.s32.totalorder %s11, 0
      %p45 = por %p43, %p44
      %p46 = scmp.ne.s32.totalorder %s35, %s38
      %p47 = scmp.eq.s32.totalorder %s16, 1
      %p48 = por %p46, %p47
      %p49 = scmp.ne.s32.totalorder %s38, %s39
      %p50 = scmp.eq.s32.totalorder %s16, 0
      %p51 = por %p49, %p50
      %p52 = scmp.ne.s32.totalorder %s38, %s39
      %p53 = scmp.eq.s32.totalorder %s17, 1
      %p54 = por %p52, %p53
      %p56 = scmp.ne.s32.totalorder %s39, %s55
      %p57 = scmp.eq.s32.totalorder %s17, 0
      %p58 = por %p56, %p57
      %s59 = ssub.s32 %s19, %s26
      %p60 = scmp.eq.s32.totalorder %s59, 0
      %s62 = sadd.s32 %s61, 1
      %s63 = scalar_select %p60, %s61, %s62
      %p66 = pneg %p60
      %p67 = scmp.eq.s32.totalorder %s11, 1
      %p68 = por %p66, %p67
      %p69 = scmp.ne.s32.totalorder %s61, %s64
      %p70 = scmp.eq.s32.totalorder %s11, 0
      %p71 = por %p69, %p70
      %p72 = scmp.ne.s32.totalorder %s61, %s64
      %p73 = scmp.eq.s32.totalorder %s16, 1
      %p74 = por %p72, %p73
      %p75 = scmp.ne.s32.totalorder %s64, %s65
      %p76 = scmp.eq.s32.totalorder %s16, 0
      %p77 = por %p75, %p76
      %p78 = scmp.ne.s32.totalorder %s64, %s65
      %p79 = scmp.eq.s32.totalorder %s17, 1
      %p80 = por %p78, %p79
      %p82 = scmp.ne.s32.totalorder %s65, %s81
      %p83 = scmp.eq.s32.totalorder %s17, 0
      %p84 = por %p82, %p83
      %s85 = ssub.s32 %s19, %s26
      %p86 = scmp.eq.s32.totalorder %s85, 0
      %s88 = sadd.s32 %s87, 1
      %s89 = scalar_select %p86, %s87, %s88
      %p92 = pneg %p86
      %p93 = scmp.eq.s32.totalorder %s11, 1
      %p94 = por %p92, %p93
      %p95 = scmp.ne.s32.totalorder %s87, %s90
      %p96 = scmp.eq.s32.totalorder %s11, 0
      %p97 = por %p95, %p96
      %p98 = scmp.ne.s32.totalorder %s87, %s90
      %p99 = scmp.eq.s32.totalorder %s16, 1
      %p100 = por %p98, %p99
      %p101 = scmp.ne.s32.totalorder %s90, %s91
      %p102 = scmp.eq.s32.totalorder %s16, 0
      %p103 = por %p101, %p102
      %p104 = scmp.ne.s32.totalorder %s90, %s91
      %p105 = scmp.eq.s32.totalorder %s17, 1
      %p106 = por %p104, %p105
      %p108 = scmp.ne.s32.totalorder %s91, %s107
      %p109 = scmp.eq.s32.totalorder %s17, 0
      %p110 = por %p108, %p109
      %s111 = ssub.s32 %s18, %s30
      %s112 = ssub.s32 %s19, %s26
      %s113 = sor.u32 %s111, %s112
      %p114 = scmp.eq.s32.totalorder %s113, 0
      %s116 = sadd.s32 %s115, 1
      %s117 = scalar_select %p114, %s115, %s116
      %p120 = pneg %p114
      %p121 = scmp.eq.s32.totalorder %s11, 1
      %p122 = por %p120, %p121
      %p123 = scmp.ne.s32.totalorder %s115, %s118
      %p124 = scmp.eq.s32.totalorder %s11, 0
      %p125 = por %p123, %p124
      %p126 = scmp.ne.s32.totalorder %s115, %s118
      %p127 = scmp.eq.s32.totalorder %s16, 1
      %p128 = por %p126, %p127
      %p129 = scmp.ne.s32.totalorder %s118, %s119
      %p130 = scmp.eq.s32.totalorder %s16, 0
      %p131 = por %p129, %p130
      %p132 = scmp.ne.s32.totalorder %s118, %s119
      %p133 = scmp.eq.s32.totalorder %s17, 1
      %p134 = por %p132, %p133
      %p136 = scmp.ne.s32.totalorder %s119, %s135
      %p137 = scmp.eq.s32.totalorder %s17, 0
      %p138 = por %p136, %p137
      %p139 = scmp.le.s32.totalorder 1, %s11
      %p140 = scmp.lt.s32.totalorder %s11, 3
      %p141 = pnand %p139, %p140
      %p142 = pneg %p141
      // Predicated region
      $region9: #{ss2d_local_forward.6} parent=5 // pred_check
        _
      $region10: #{ss2d_local_forward.6} parent=5 // pred_check_branch
        %144 = sbr.rel (%p141) target = $region12
      $region11: #{ss2d_local_forward.6} parent=5 // pred_region
        %s145 = ssub.s32 %s11, 1
        // Predicated region
        $region13: #{ss2d_local_forward.6} parent=11 // pred_check
          %p146 = pneg %p77
        $region14: #{ss2d_local_forward.6} parent=11 // pred_check_branch
          %148 = sbr.rel (%p146) target = $region16
        $region15: #{ss2d_local_forward.6} parent=11 // pred_region
          %s150 = ssub.s32 192, 192
          %151 = vsyncadd [#allocation3], %s150
          %s152 = smul.addr %s21, 64
          %s153 = scalar_lea.hbm %s1, %s152
          %s154 = sshll.u32 [#allocation2], 4
          %s155 = int_to_ptr.vmem [resolvable:$true] %s154
          %160 = dma.hbm_to_vmem [thread:$0]  %s153, 192, %s155, [#allocation3], 64, 64, 4
        $region16: #{ss2d_local_forward.6} parent=11 // pred_fallthru
          _
        // Predicated region
        $region17: #{ss2d_local_forward.6} parent=11 // pred_check
          %p161 = pneg %p103
        $region18: #{ss2d_local_forward.6} parent=11 // pred_check_branch
          %163 = sbr.rel (%p161) target = $region20
        $region19: #{ss2d_local_forward.6} parent=11 // pred_region
          %s165 = ssub.s32 16, 16
          %166 = vsyncadd [#allocation5], %s165
          %s167 = smul.addr %s21, 16
          %s168 = scalar_lea.hbm %s2, %s167
          %s170 = sshll.u32 [#allocation4], 4
          %s171 = int_to_ptr.vmem [resolvable:$true] %s170
          %173 = dma.hbm_to_vmem [thread:$0]  %s168, 16, %s171, [#allocation5]
        $region20: #{ss2d_local_forward.6} parent=11 // pred_fallthru
          _
      $region12: #{ss2d_local_forward.6} parent=5 // pred_fallthru
        _
      %p174 = scmp.lt.s32.totalorder %s11, 2
      // Predicated region
      $region21: #{ss2d_local_forward.6} parent=5 // pred_check
        %p175 = pneg %p174
      $region22: #{ss2d_local_forward.6} parent=5 // pred_check_branch
        %177 = sbr.rel (%p175) target = $region24
      $region23: #{ss2d_local_forward.6} parent=5 // pred_region
        // Predicated region
        $region25: #{ss2d_local_forward.6} parent=23 // pred_check
          %p178 = pneg %p45
        $region26: #{ss2d_local_forward.6} parent=23 // pred_check_branch
          %180 = sbr.rel (%p178) target = $region28
        $region27: #{ss2d_local_forward.6} parent=23 // pred_region
          %p181 = scmp.lt.s32.totalorder %s18, 1
          %s182 = scalar_select %p181, %s18, 1
          %p183 = scmp.lt.s32.totalorder %s19, 0
          %s184 = scalar_select %p183, %s19, 0
          %s185 = smul.addr %s182, 32
          %s186 = sadd.s32 %s184, %s185
          %s187 = smul.addr %s186, 8
          %s188 = scalar_lea.vmem %s0, %s187
        $region28: #{ss2d_local_forward.6} parent=23 // pred_fallthru
          _
      $region24: #{ss2d_local_forward.6} parent=5 // pred_fallthru
        _
      %p189 = scmp.le.s32.totalorder 1, %s11
      %p190 = scmp.lt.s32.totalorder %s11, 3
      %p191 = pnand %p189, %p190
      %p192 = pneg %p191
      // Predicated region
      $region29: #{ss2d_local_forward.6} parent=5 // pred_check
        _
      $region30: #{ss2d_local_forward.6} parent=5 // pred_check_branch
        %194 = sbr.rel (%p191) target = $region32
      $region31: #{ss2d_local_forward.6} parent=5 // pred_region
        %s195 = ssub.s32 %s11, 1
        // Predicated region
        $region33: #{ss2d_local_forward.6} parent=31 // pred_check
          %p196 = pneg %p77
        $region34: #{ss2d_local_forward.6} parent=31 // pred_check_branch
          %198 = sbr.rel (%p196) target = $region36
        $region35: #{ss2d_local_forward.6} parent=31 // pred_region
          %199 = dma.done [#allocation3], 192
        $region36: #{ss2d_local_forward.6} parent=31 // pred_fallthru
          _
        // Predicated region
        $region37: #{ss2d_local_forward.6} parent=31 // pred_check
          %p200 = pneg %p103
        $region38: #{ss2d_local_forward.6} parent=31 // pred_check_branch
          %202 = sbr.rel (%p200) target = $region40
        $region39: #{ss2d_local_forward.6} parent=31 // pred_region
          %203 = dma.done [#allocation5], 16
        $region40: #{ss2d_local_forward.6} parent=31 // pred_fallthru
          _
        %p204 = scmp.lt.s32.totalorder %s20, 1
        %s205 = scalar_select %p204, %s20, 1
        %p206 = scmp.lt.s32.totalorder %s21, 0
        %s207 = scalar_select %p206, %s21, 0
        %s208 = smul.addr %s205, 32
        %s209 = sadd.s32 %s207, %s208
        %s210 = smul.addr %s209, 8
        %s211 = scalar_lea.vmem %s0, %s210
        %p212 = pneg %p51
        %p213 = pneg %p48
        %p214 = pneg %p77
        %p215 = pneg %p74
        %p216 = pneg %p103
        %p217 = pneg %p100
        %p218 = pneg %p131
        %p219 = pneg %p128
        %p220 = scmp.lt.s32.totalorder %s20, 1
        %s221 = scalar_select %p220, %s20, 1
        %p222 = scmp.lt.s32.totalorder %s21, 0
        %s223 = scalar_select %p222, %s21, 0
        %s224 = smul.addr %s221, 32
        %s225 = sadd.s32 %s223, %s224
        %s226 = smul.addr %s225, 8
        %s227 = scalar_lea.vmem %s3, %s226
        %p228 = scmp.lt.s32.totalorder %s20, 1
        %s229 = scalar_select %p228, %s20, 1
        %p230 = scmp.lt.s32.totalorder %s21, 0
        %s231 = scalar_select %p230, %s21, 0
        %s232 = smul.addr %s229, 32
        %s233 = sadd.s32 %s231, %s232
        %s234 = smul.addr %s233, 8
        %s235 = scalar_lea.vmem %s0, %s234
        %p236 = scmp.lt.s32.totalorder %s20, 1
        %s237 = scalar_select %p236, %s20, 1
        %p238 = scmp.lt.s32.totalorder %s21, 0
        %s239 = scalar_select %p238, %s21, 0
        %s240 = smul.addr %s237, 32
        %s241 = sadd.s32 %s239, %s240
        %s242 = smul.addr %s241, 8
        %s243 = scalar_lea.vmem %s3, %s242
        %v244 = vld [vmem:[%s235] sm:$0xff]
        %v245 = vld [vmem:[%s235 + $0x8] sm:$0xff]
        %v246 = vld [vmem:[%s235 + $0x10] sm:$0xff]
        %v247 = vld [vmem:[%s235 + $0x18] sm:$0xff]
        %v248 = vld [vmem:[%s235 + $0x20] sm:$0xff]
        %v249 = vld [vmem:[%s235 + $0x28] sm:$0xff]
        %v250 = vld [vmem:[%s235 + $0x30] sm:$0xff]
        %v251 = vld [vmem:[%s235 + $0x38] sm:$0xff]
        %v252 = vld [vmem:[%s235 + $0x40] sm:$0xff]
        %v253 = vld [vmem:[%s235 + $0x48] sm:$0xff]
        %v254 = vld [vmem:[%s235 + $0x50] sm:$0xff]
        %v255 = vld [vmem:[%s235 + $0x58] sm:$0xff]
        %v256 = vld [vmem:[%s235 + $0x60] sm:$0xff]
        %v257 = vld [vmem:[%s235 + $0x68] sm:$0xff]
        %v258 = vld [vmem:[%s235 + $0x70] sm:$0xff]
        %v259 = vld [vmem:[%s235 + $0x78] sm:$0xff]
        %v260 = vld [vmem:[%s235 + $0x80] sm:$0xff]
        %v261 = vld [vmem:[%s235 + $0x88] sm:$0xff]
        %v262 = vld [vmem:[%s235 + $0x90] sm:$0xff]
        %v263 = vld [vmem:[%s235 + $0x98] sm:$0xff]
        %v264 = vld [vmem:[%s235 + $0xa0] sm:$0xff]
        %v265 = vld [vmem:[%s235 + $0xa8] sm:$0xff]
        %v266 = vld [vmem:[%s235 + $0xb0] sm:$0xff]
        %v267 = vld [vmem:[%s235 + $0xb8] sm:$0xff]
        %v268 = vld [vmem:[%s235 + $0xc0] sm:$0xff]
        %v269 = vld [vmem:[%s235 + $0xc8] sm:$0xff]
        %v270 = vld [vmem:[%s235 + $0xd0] sm:$0xff]
        %v271 = vld [vmem:[%s235 + $0xd8] sm:$0xff]
        %v272 = vld [vmem:[%s235 + $0xe0] sm:$0xff]
        %v273 = vld [vmem:[%s235 + $0xe8] sm:$0xff]
        %v274 = vld [vmem:[%s235 + $0xf0] sm:$0xff]
        %v275 = vld [vmem:[%s235 + $0xf8] sm:$0xff]
        %v276 = vld [vmem:[#allocation2] sm:$0x7]
        %v277 = vld [vmem:[#allocation2 + $0x4] sm:$0x7]
        %v278 = vld [vmem:[#allocation2 + $0x8] sm:$0x7]
        %vm310 = vcmask 1040384
        %v311 = vrot.slane 0.0, 7
        %v312 = vsel %vm310, %v311, %v311
        %v313 = vrot.slane %v244, 7
        %v314 = vrot.slane %v245, 7
        %v315 = vsel %vm310, %v313, %v314
        %v316 = vrot.slane %v246, 7
        %v317 = vrot.slane %v247, 7
        %v318 = vsel %vm310, %v316, %v317
        %v319 = vrot.slane %v248, 7
        %v320 = vrot.slane %v249, 7
        %v321 = vsel %vm310, %v319, %v320
        %v322 = vrot.slane %v250, 7
        %v323 = vrot.slane %v251, 7
        %v324 = vsel %vm310, %v322, %v323
        %v325 = vrot.slane %v252, 7
        %v326 = vrot.slane %v253, 7
        %v327 = vsel %vm310, %v325, %v326
        %v328 = vrot.slane %v254, 7
        %v329 = vrot.slane %v255, 7
        %v330 = vsel %vm310, %v328, %v329
        %v331 = vrot.slane %v256, 7
        %v332 = vrot.slane %v257, 7
        %v333 = vsel %vm310, %v331, %v332
        %v334 = vrot.slane %v258, 7
        %v335 = vrot.slane %v259, 7
        %v336 = vsel %vm310, %v334, %v335
        %v337 = vrot.slane %v260, 7
        %v338 = vrot.slane %v261, 7
        %v339 = vsel %vm310, %v337, %v338
        %v340 = vrot.slane %v262, 7
        %v341 = vrot.slane %v263, 7
        %v342 = vsel %vm310, %v340, %v341
        %v343 = vrot.slane %v264, 7
        %v344 = vrot.slane %v265, 7
        %v345 = vsel %vm310, %v343, %v344
        %v346 = vrot.slane %v266, 7
        %v347 = vrot.slane %v267, 7
        %v348 = vsel %vm310, %v346, %v347
        %v349 = vrot.slane %v268, 7
        %v350 = vrot.slane %v269, 7
        %v351 = vsel %vm310, %v349, %v350
        %v352 = vrot.slane %v270, 7
        %v353 = vrot.slane %v271, 7
        %v354 = vsel %vm310, %v352, %v353
        %v355 = vrot.slane %v272, 7
        %v356 = vrot.slane %v273, 7
        %v357 = vsel %vm310, %v355, %v356
        %v390 = vsel %vm310, 0.0, %v311
        %v391 = vsel %vm310, 0.0, %v313
        %v392 = vsel %vm310, 0.0, %v316
        %v393 = vsel %vm310, 0.0, %v319
        %v394 = vsel %vm310, 0.0, %v322
        %v395 = vsel %vm310, 0.0, %v325
        %v396 = vsel %vm310, 0.0, %v328
        %v397 = vsel %vm310, 0.0, %v331
        %v398 = vsel %vm310, 0.0, %v334
        %v399 = vsel %vm310, 0.0, %v337
        %v400 = vsel %vm310, 0.0, %v340
        %v401 = vsel %vm310, 0.0, %v343
        %v402 = vsel %vm310, 0.0, %v346
        %v403 = vsel %vm310, 0.0, %v349
        %v404 = vsel %vm310, 0.0, %v352
        %v405 = vsel %vm310, 0.0, %v355
        %v406 = vlaneseq
        %v407 = vshrl.u32 %v406, 7
        %v408 = vsub.s32 0, %v407
        %v409 = vrot.slane %v276, %v408
        %v410 = vmul.f32 %v390, %v409
        %v411 = vmul.f32 %v312, %v409
        %v412 = vmul.f32 %v391, %v409
        %v413 = vmul.f32 %v315, %v409
        %v414 = vmul.f32 %v392, %v409
        %v415 = vmul.f32 %v318, %v409
        %v416 = vmul.f32 %v393, %v409
        %v417 = vmul.f32 %v321, %v409
        %v418 = vmul.f32 %v394, %v409
        %v419 = vmul.f32 %v324, %v409
        %v420 = vmul.f32 %v395, %v409
        %v421 = vmul.f32 %v327, %v409
        %v422 = vmul.f32 %v396, %v409
        %v423 = vmul.f32 %v330, %v409
        %v424 = vmul.f32 %v397, %v409
        %v425 = vmul.f32 %v333, %v409
        %v426 = vmul.f32 %v398, %v409
        %v427 = vmul.f32 %v336, %v409
        %v428 = vmul.f32 %v399, %v409
        %v429 = vmul.f32 %v339, %v409
        %v430 = vmul.f32 %v400, %v409
        %v431 = vmul.f32 %v342, %v409
        %v432 = vmul.f32 %v401, %v409
        %v433 = vmul.f32 %v345, %v409
        %v434 = vmul.f32 %v402, %v409
        %v435 = vmul.f32 %v348, %v409
        %v436 = vmul.f32 %v403, %v409
        %v437 = vmul.f32 %v351, %v409
        %v438 = vmul.f32 %v404, %v409
        %v439 = vmul.f32 %v354, %v409
        %v440 = vmul.f32 %v405, %v409
        %v441 = vmul.f32 %v357, %v409
        %v442 = vadd.f32 %v410, 0.0
        %v443 = vadd.f32 %v411, 0.0
        %v444 = vadd.f32 %v412, 0.0
        %v445 = vadd.f32 %v413, 0.0
        %v446 = vadd.f32 %v414, 0.0
        %v447 = vadd.f32 %v415, 0.0
        %v448 = vadd.f32 %v416, 0.0
        %v449 = vadd.f32 %v417, 0.0
        %v450 = vadd.f32 %v418, 0.0
        %v451 = vadd.f32 %v419, 0.0
        %v452 = vadd.f32 %v420, 0.0
        %v453 = vadd.f32 %v421, 0.0
        %v454 = vadd.f32 %v422, 0.0
        %v455 = vadd.f32 %v423, 0.0
        %v456 = vadd.f32 %v424, 0.0
        %v457 = vadd.f32 %v425, 0.0
        %v458 = vadd.f32 %v426, 0.0
        %v459 = vadd.f32 %v427, 0.0
        %v460 = vadd.f32 %v428, 0.0
        %v461 = vadd.f32 %v429, 0.0
        %v462 = vadd.f32 %v430, 0.0
        %v463 = vadd.f32 %v431, 0.0
        %v464 = vadd.f32 %v432, 0.0
        %v465 = vadd.f32 %v433, 0.0
        %v466 = vadd.f32 %v434, 0.0
        %v467 = vadd.f32 %v435, 0.0
        %v468 = vadd.f32 %v436, 0.0
        %v469 = vadd.f32 %v437, 0.0
        %v470 = vadd.f32 %v438, 0.0
        %v471 = vadd.f32 %v439, 0.0
        %v472 = vadd.f32 %v440, 0.0
        %v473 = vadd.f32 %v441, 0.0
        %v474 = vlaneseq
        %v475 = vshrl.u32 %v474, 7
        %v476 = vsub.s32 1, %v475
        %v477 = vrot.slane %v276, %v476
        %v478 = vmul.f32 %v477, 0.0
        %v479 = vmul.f32 %v244, %v477
        %v480 = vmul.f32 %v245, %v477
        %v481 = vmul.f32 %v246, %v477
        %v482 = vmul.f32 %v247, %v477
        %v483 = vmul.f32 %v248, %v477
        %v484 = vmul.f32 %v249, %v477
        %v485 = vmul.f32 %v250, %v477
        %v486 = vmul.f32 %v251, %v477
        %v487 = vmul.f32 %v252, %v477
        %v488 = vmul.f32 %v253, %v477
        %v489 = vmul.f32 %v254, %v477
        %v490 = vmul.f32 %v255, %v477
        %v491 = vmul.f32 %v256, %v477
        %v492 = vmul.f32 %v257, %v477
        %v493 = vmul.f32 %v258, %v477
        %v494 = vmul.f32 %v259, %v477
        %v495 = vmul.f32 %v260, %v477
        %v496 = vmul.f32 %v261, %v477
        %v497 = vmul.f32 %v262, %v477
        %v498 = vmul.f32 %v263, %v477
        %v499 = vmul.f32 %v264, %v477
        %v500 = vmul.f32 %v265, %v477
        %v501 = vmul.f32 %v266, %v477
        %v502 = vmul.f32 %v267, %v477
        %v503 = vmul.f32 %v268, %v477
        %v504 = vmul.f32 %v269, %v477
        %v505 = vmul.f32 %v270, %v477
        %v506 = vmul.f32 %v271, %v477
        %v507 = vmul.f32 %v272, %v477
        %v508 = vmul.f32 %v273, %v477
        %v509 = vadd.f32 %v442, %v478
        %v510 = vadd.f32 %v443, %v478
        %v511 = vadd.f32 %v444, %v479
        %v512 = vadd.f32 %v445, %v480
        %v513 = vadd.f32 %v446, %v481
        %v514 = vadd.f32 %v447, %v482
        %v515 = vadd.f32 %v448, %v483
        %v516 = vadd.f32 %v449, %v484
        %v517 = vadd.f32 %v450, %v485
        %v518 = vadd.f32 %v451, %v486
        %v519 = vadd.f32 %v452, %v487
        %v520 = vadd.f32 %v453, %v488
        %v521 = vadd.f32 %v454, %v489
        %v522 = vadd.f32 %v455, %v490
        %v523 = vadd.f32 %v456, %v491
        %v524 = vadd.f32 %v457, %v492
        %v525 = vadd.f32 %v458, %v493
        %v526 = vadd.f32 %v459, %v494
        %v527 = vadd.f32 %v460, %v495
        %v528 = vadd.f32 %v461, %v496
        %v529 = vadd.f32 %v462, %v497
        %v530 = vadd.f32 %v463, %v498
        %v531 = vadd.f32 %v464, %v499
        %v532 = vadd.f32 %v465, %v500
        %v533 = vadd.f32 %v466, %v501
        %v534 = vadd.f32 %v467, %v502
        %v535 = vadd.f32 %v468, %v503
        %v536 = vadd.f32 %v469, %v504
        %v537 = vadd.f32 %v470, %v505
        %v538 = vadd.f32 %v471, %v506
        %v539 = vadd.f32 %v472, %v507
        %v540 = vadd.f32 %v473, %v508
        %vm541 = vcmask 1046528
        %v542 = vrot.slane 0.0, 1
        %v543 = vsel %vm541, %v542, %v542
        %v544 = vrot.slane %v244, 1
        %v545 = vrot.slane %v245, 1
        %v546 = vsel %vm541, %v544, %v545
        %v547 = vrot.slane %v246, 1
        %v548 = vrot.slane %v247, 1
        %v549 = vsel %vm541, %v547, %v548
        %v550 = vrot.slane %v248, 1
        %v551 = vrot.slane %v249, 1
        %v552 = vsel %vm541, %v550, %v551
        %v553 = vrot.slane %v250, 1
        %v554 = vrot.slane %v251, 1
        %v555 = vsel %vm541, %v553, %v554
        %v556 = vrot.slane %v252, 1
        %v557 = vrot.slane %v253, 1
        %v558 = vsel %vm541, %v556, %v557
        %v559 = vrot.slane %v254, 1
        %v560 = vrot.slane %v255, 1
        %v561 = vsel %vm541, %v559, %v560
        %v562 = vrot.slane %v256, 1
        %v563 = vrot.slane %v257, 1
        %v564 = vsel %vm541, %v562, %v563
        %v565 = vrot.slane %v258, 1
        %v566 = vrot.slane %v259, 1
        %v567 = vsel %vm541, %v565, %v566
        %v568 = vrot.slane %v260, 1
        %v569 = vrot.slane %v261, 1
        %v570 = vsel %vm541, %v568, %v569
        %v571 = vrot.slane %v262, 1
        %v572 = vrot.slane %v263, 1
        %v573 = vsel %vm541, %v571, %v572
        %v574 = vrot.slane %v264, 1
        %v575 = vrot.slane %v265, 1
        %v576 = vsel %vm541, %v574, %v575
        %v577 = vrot.slane %v266, 1
        %v578 = vrot.slane %v267, 1
        %v579 = vsel %vm541, %v577, %v578
        %v580 = vrot.slane %v268, 1
        %v581 = vrot.slane %v269, 1
        %v582 = vsel %vm541, %v580, %v581
        %v583 = vrot.slane %v270, 1
        %v584 = vrot.slane %v271, 1
        %v585 = vsel %vm541, %v583, %v584
        %v586 = vrot.slane %v272, 1
        %v587 = vrot.slane %v273, 1
        %v588 = vsel %vm541, %v586, %v587
        %v621 = vsel %vm541, %v542, 0.0
        %v622 = vsel %vm541, %v545, 0.0
        %v623 = vsel %vm541, %v548, 0.0
        %v624 = vsel %vm541, %v551, 0.0
        %v625 = vsel %vm541, %v554, 0.0
        %v626 = vsel %vm541, %v557, 0.0
        %v627 = vsel %vm541, %v560, 0.0
        %v628 = vsel %vm541, %v563, 0.0
        %v629 = vsel %vm541, %v566, 0.0
        %v630 = vsel %vm541, %v569, 0.0
        %v631 = vsel %vm541, %v572, 0.0
        %v632 = vsel %vm541, %v575, 0.0
        %v633 = vsel %vm541, %v578, 0.0
        %v634 = vsel %vm541, %v581, 0.0
        %v635 = vsel %vm541, %v584, 0.0
        %v636 = vsel %vm541, %v587, 0.0
        %v637 = vlaneseq
        %v638 = vshrl.u32 %v637, 7
        %v639 = vsub.s32 2, %v638
        %v640 = vrot.slane %v276, %v639
        %v641 = vmul.f32 %v543, %v640
        %v642 = vmul.f32 %v621, %v640
        %v643 = vmul.f32 %v546, %v640
        %v644 = vmul.f32 %v622, %v640
        %v645 = vmul.f32 %v549, %v640
        %v646 = vmul.f32 %v623, %v640
        %v647 = vmul.f32 %v552, %v640
        %v648 = vmul.f32 %v624, %v640
        %v649 = vmul.f32 %v555, %v640
        %v650 = vmul.f32 %v625, %v640
        %v651 = vmul.f32 %v558, %v640
        %v652 = vmul.f32 %v626, %v640
        %v653 = vmul.f32 %v561, %v640
        %v654 = vmul.f32 %v627, %v640
        %v655 = vmul.f32 %v564, %v640
        %v656 = vmul.f32 %v628, %v640
        %v657 = vmul.f32 %v567, %v640
        %v658 = vmul.f32 %v629, %v640
        %v659 = vmul.f32 %v570, %v640
        %v660 = vmul.f32 %v630, %v640
        %v661 = vmul.f32 %v573, %v640
        %v662 = vmul.f32 %v631, %v640
        %v663 = vmul.f32 %v576, %v640
        %v664 = vmul.f32 %v632, %v640
        %v665 = vmul.f32 %v579, %v640
        %v666 = vmul.f32 %v633, %v640
        %v667 = vmul.f32 %v582, %v640
        %v668 = vmul.f32 %v634, %v640
        %v669 = vmul.f32 %v585, %v640
        %v670 = vmul.f32 %v635, %v640
        %v671 = vmul.f32 %v588, %v640
        %v672 = vmul.f32 %v636, %v640
        %v673 = vadd.f32 %v509, %v641
        %v674 = vadd.f32 %v510, %v642
        %v675 = vadd.f32 %v511, %v643
        %v676 = vadd.f32 %v512, %v644
        %v677 = vadd.f32 %v513, %v645
        %v678 = vadd.f32 %v514, %v646
        %v679 = vadd.f32 %v515, %v647
        %v680 = vadd.f32 %v516, %v648
        %v681 = vadd.f32 %v517, %v649
        %v682 = vadd.f32 %v518, %v650
        %v683 = vadd.f32 %v519, %v651
        %v684 = vadd.f32 %v520, %v652
        %v685 = vadd.f32 %v521, %v653
        %v686 = vadd.f32 %v522, %v654
        %v687 = vadd.f32 %v523, %v655
        %v688 = vadd.f32 %v524, %v656
        %v689 = vadd.f32 %v525, %v657
        %v690 = vadd.f32 %v526, %v658
        %v691 = vadd.f32 %v527, %v659
        %v692 = vadd.f32 %v528, %v660
        %v693 = vadd.f32 %v529, %v661
        %v694 = vadd.f32 %v530, %v662
        %v695 = vadd.f32 %v531, %v663
        %v696 = vadd.f32 %v532, %v664
        %v697 = vadd.f32 %v533, %v665
        %v698 = vadd.f32 %v534, %v666
        %v699 = vadd.f32 %v535, %v667
        %v700 = vadd.f32 %v536, %v668
        %v701 = vadd.f32 %v537, %v669
        %v702 = vadd.f32 %v538, %v670
        %v703 = vadd.f32 %v539, %v671
        %v704 = vadd.f32 %v540, %v672
        %v707 = vrot.slane %v274, 7
        %v708 = vrot.slane %v275, 7
        %v709 = vsel %vm310, %v707, %v708
        %v712 = vsel %vm310, 0.0, %v707
        %v713 = vlaneseq
        %v714 = vshrl.u32 %v713, 7
        %v715 = vsub.s32 0, %v714
        %v716 = vrot.slane %v277, %v715
        %v717 = vmul.f32 %v391, %v716
        %v718 = vmul.f32 %v315, %v716
        %v719 = vmul.f32 %v392, %v716
        %v720 = vmul.f32 %v318, %v716
        %v721 = vmul.f32 %v393, %v716
        %v722 = vmul.f32 %v321, %v716
        %v723 = vmul.f32 %v394, %v716
        %v724 = vmul.f32 %v324, %v716
        %v725 = vmul.f32 %v395, %v716
        %v726 = vmul.f32 %v327, %v716
        %v727 = vmul.f32 %v396, %v716
        %v728 = vmul.f32 %v330, %v716
        %v729 = vmul.f32 %v397, %v716
        %v730 = vmul.f32 %v333, %v716
        %v731 = vmul.f32 %v398, %v716
        %v732 = vmul.f32 %v336, %v716
        %v733 = vmul.f32 %v399, %v716
        %v734 = vmul.f32 %v339, %v716
        %v735 = vmul.f32 %v400, %v716
        %v736 = vmul.f32 %v342, %v716
        %v737 = vmul.f32 %v401, %v716
        %v738 = vmul.f32 %v345, %v716
        %v739 = vmul.f32 %v402, %v716
        %v740 = vmul.f32 %v348, %v716
        %v741 = vmul.f32 %v403, %v716
        %v742 = vmul.f32 %v351, %v716
        %v743 = vmul.f32 %v404, %v716
        %v744 = vmul.f32 %v354, %v716
        %v745 = vmul.f32 %v405, %v716
        %v746 = vmul.f32 %v357, %v716
        %v747 = vmul.f32 %v712, %v716
        %v748 = vmul.f32 %v709, %v716
        %v749 = vadd.f32 %v673, %v717
        %v750 = vadd.f32 %v674, %v718
        %v751 = vadd.f32 %v675, %v719
        %v752 = vadd.f32 %v676, %v720
        %v753 = vadd.f32 %v677, %v721
        %v754 = vadd.f32 %v678, %v722
        %v755 = vadd.f32 %v679, %v723
        %v756 = vadd.f32 %v680, %v724
        %v757 = vadd.f32 %v681, %v725
        %v758 = vadd.f32 %v682, %v726
        %v759 = vadd.f32 %v683, %v727
        %v760 = vadd.f32 %v684, %v728
        %v761 = vadd.f32 %v685, %v729
        %v762 = vadd.f32 %v686, %v730
        %v763 = vadd.f32 %v687, %v731
        %v764 = vadd.f32 %v688, %v732
        %v765 = vadd.f32 %v689, %v733
        %v766 = vadd.f32 %v690, %v734
        %v767 = vadd.f32 %v691, %v735
        %v768 = vadd.f32 %v692, %v736
        %v769 = vadd.f32 %v693, %v737
        %v770 = vadd.f32 %v694, %v738
        %v771 = vadd.f32 %v695, %v739
        %v772 = vadd.f32 %v696, %v740
        %v773 = vadd.f32 %v697, %v741
        %v774 = vadd.f32 %v698, %v742
        %v775 = vadd.f32 %v699, %v743
        %v776 = vadd.f32 %v700, %v744
        %v777 = vadd.f32 %v701, %v745
        %v778 = vadd.f32 %v702, %v746
        %v779 = vadd.f32 %v703, %v747
        %v780 = vadd.f32 %v704, %v748
        %v781 = vlaneseq
        %v782 = vshrl.u32 %v781, 7
        %v783 = vsub.s32 1, %v782
        %v784 = vrot.slane %v277, %v783
        %v785 = vmul.f32 %v244, %v784
        %v786 = vmul.f32 %v245, %v784
        %v787 = vmul.f32 %v246, %v784
        %v788 = vmul.f32 %v247, %v784
        %v789 = vmul.f32 %v248, %v784
        %v790 = vmul.f32 %v249, %v784
        %v791 = vmul.f32 %v250, %v784
        %v792 = vmul.f32 %v251, %v784
        %v793 = vmul.f32 %v252, %v784
        %v794 = vmul.f32 %v253, %v784
        %v795 = vmul.f32 %v254, %v784
        %v796 = vmul.f32 %v255, %v784
        %v797 = vmul.f32 %v256, %v784
        %v798 = vmul.f32 %v257, %v784
        %v799 = vmul.f32 %v258, %v784
        %v800 = vmul.f32 %v259, %v784
        %v801 = vmul.f32 %v260, %v784
        %v802 = vmul.f32 %v261, %v784
        %v803 = vmul.f32 %v262, %v784
        %v804 = vmul.f32 %v263, %v784
        %v805 = vmul.f32 %v264, %v784
        %v806 = vmul.f32 %v265, %v784
        %v807 = vmul.f32 %v266, %v784
        %v808 = vmul.f32 %v267, %v784
        %v809 = vmul.f32 %v268, %v784
        %v810 = vmul.f32 %v269, %v784
        %v811 = vmul.f32 %v270, %v784
        %v812 = vmul.f32 %v271, %v784
        %v813 = vmul.f32 %v272, %v784
        %v814 = vmul.f32 %v273, %v784
        %v815 = vmul.f32 %v274, %v784
        %v816 = vmul.f32 %v275, %v784
        %v817 = vadd.f32 %v749, %v785
        %v818 = vadd.f32 %v750, %v786
        %v819 = vadd.f32 %v751, %v787
        %v820 = vadd.f32 %v752, %v788
        %v821 = vadd.f32 %v753, %v789
        %v822 = vadd.f32 %v754, %v790
        %v823 = vadd.f32 %v755, %v791
        %v824 = vadd.f32 %v756, %v792
        %v825 = vadd.f32 %v757, %v793
        %v826 = vadd.f32 %v758, %v794
        %v827 = vadd.f32 %v759, %v795
        %v828 = vadd.f32 %v760, %v796
        %v829 = vadd.f32 %v761, %v797
        %v830 = vadd.f32 %v762, %v798
        %v831 = vadd.f32 %v763, %v799
        %v832 = vadd.f32 %v764, %v800
        %v833 = vadd.f32 %v765, %v801
        %v834 = vadd.f32 %v766, %v802
        %v835 = vadd.f32 %v767, %v803
        %v836 = vadd.f32 %v768, %v804
        %v837 = vadd.f32 %v769, %v805
        %v838 = vadd.f32 %v770, %v806
        %v839 = vadd.f32 %v771, %v807
        %v840 = vadd.f32 %v772, %v808
        %v841 = vadd.f32 %v773, %v809
        %v842 = vadd.f32 %v774, %v810
        %v843 = vadd.f32 %v775, %v811
        %v844 = vadd.f32 %v776, %v812
        %v845 = vadd.f32 %v777, %v813
        %v846 = vadd.f32 %v778, %v814
        %v847 = vadd.f32 %v779, %v815
        %v848 = vadd.f32 %v780, %v816
        %v849 = vrot.slane %v274, 1
        %v850 = vrot.slane %v275, 1
        %v851 = vsel %vm541, %v849, %v850
        %v854 = vsel %vm541, %v850, 0.0
        %v855 = vlaneseq
        %v856 = vshrl.u32 %v855, 7
        %v857 = vsub.s32 2, %v856
        %v858 = vrot.slane %v277, %v857
        %v859 = vmul.f32 %v546, %v858
        %v860 = vmul.f32 %v622, %v858
        %v861 = vmul.f32 %v549, %v858
        %v862 = vmul.f32 %v623, %v858
        %v863 = vmul.f32 %v552, %v858
        %v864 = vmul.f32 %v624, %v858
        %v865 = vmul.f32 %v555, %v858
        %v866 = vmul.f32 %v625, %v858
        %v867 = vmul.f32 %v558, %v858
        %v868 = vmul.f32 %v626, %v858
        %v869 = vmul.f32 %v561, %v858
        %v870 = vmul.f32 %v627, %v858
        %v871 = vmul.f32 %v564, %v858
        %v872 = vmul.f32 %v628, %v858
        %v873 = vmul.f32 %v567, %v858
        %v874 = vmul.f32 %v629, %v858
        %v875 = vmul.f32 %v570, %v858
        %v876 = vmul.f32 %v630, %v858
        %v877 = vmul.f32 %v573, %v858
        %v878 = vmul.f32 %v631, %v858
        %v879 = vmul.f32 %v576, %v858
        %v880 = vmul.f32 %v632, %v858
        %v881 = vmul.f32 %v579, %v858
        %v882 = vmul.f32 %v633, %v858
        %v883 = vmul.f32 %v582, %v858
        %v884 = vmul.f32 %v634, %v858
        %v885 = vmul.f32 %v585, %v858
        %v886 = vmul.f32 %v635, %v858
        %v887 = vmul.f32 %v588, %v858
        %v888 = vmul.f32 %v636, %v858
        %v889 = vmul.f32 %v851, %v858
        %v890 = vmul.f32 %v854, %v858
        %v891 = vadd.f32 %v817, %v859
        %v892 = vadd.f32 %v818, %v860
        %v893 = vadd.f32 %v819, %v861
        %v894 = vadd.f32 %v820, %v862
        %v895 = vadd.f32 %v821, %v863
        %v896 = vadd.f32 %v822, %v864
        %v897 = vadd.f32 %v823, %v865
        %v898 = vadd.f32 %v824, %v866
        %v899 = vadd.f32 %v825, %v867
        %v900 = vadd.f32 %v826, %v868
        %v901 = vadd.f32 %v827, %v869
        %v902 = vadd.f32 %v828, %v870
        %v903 = vadd.f32 %v829, %v871
        %v904 = vadd.f32 %v830, %v872
        %v905 = vadd.f32 %v831, %v873
        %v906 = vadd.f32 %v832, %v874
        %v907 = vadd.f32 %v833, %v875
        %v908 = vadd.f32 %v834, %v876
        %v909 = vadd.f32 %v835, %v877
        %v910 = vadd.f32 %v836, %v878
        %v911 = vadd.f32 %v837, %v879
        %v912 = vadd.f32 %v838, %v880
        %v913 = vadd.f32 %v839, %v881
        %v914 = vadd.f32 %v840, %v882
        %v915 = vadd.f32 %v841, %v883
        %v916 = vadd.f32 %v842, %v884
        %v917 = vadd.f32 %v843, %v885
        %v918 = vadd.f32 %v844, %v886
        %v919 = vadd.f32 %v845, %v887
        %v920 = vadd.f32 %v846, %v888
        %v921 = vadd.f32 %v847, %v889
        %v922 = vadd.f32 %v848, %v890
        %v923 = vlaneseq
        %v924 = vshrl.u32 %v923, 7
        %v925 = vsub.s32 0, %v924
        %v926 = vrot.slane %v278, %v925
        %v927 = vmul.f32 %v392, %v926
        %v928 = vmul.f32 %v318, %v926
        %v929 = vmul.f32 %v393, %v926
        %v930 = vmul.f32 %v321, %v926
        %v931 = vmul.f32 %v394, %v926
        %v932 = vmul.f32 %v324, %v926
        %v933 = vmul.f32 %v395, %v926
        %v934 = vmul.f32 %v327, %v926
        %v935 = vmul.f32 %v396, %v926
        %v936 = vmul.f32 %v330, %v926
        %v937 = vmul.f32 %v397, %v926
        %v938 = vmul.f32 %v333, %v926
        %v939 = vmul.f32 %v398, %v926
        %v940 = vmul.f32 %v336, %v926
        %v941 = vmul.f32 %v399, %v926
        %v942 = vmul.f32 %v339, %v926
        %v943 = vmul.f32 %v400, %v926
        %v944 = vmul.f32 %v342, %v926
        %v945 = vmul.f32 %v401, %v926
        %v946 = vmul.f32 %v345, %v926
        %v947 = vmul.f32 %v402, %v926
        %v948 = vmul.f32 %v348, %v926
        %v949 = vmul.f32 %v403, %v926
        %v950 = vmul.f32 %v351, %v926
        %v951 = vmul.f32 %v404, %v926
        %v952 = vmul.f32 %v354, %v926
        %v953 = vmul.f32 %v405, %v926
        %v954 = vmul.f32 %v357, %v926
        %v955 = vmul.f32 %v712, %v926
        %v956 = vmul.f32 %v709, %v926
        %v957 = vmul.f32 %v390, %v926
        %v958 = vmul.f32 %v312, %v926
        %v959 = vadd.f32 %v891, %v927
        %v960 = vadd.f32 %v892, %v928
        %v961 = vadd.f32 %v893, %v929
        %v962 = vadd.f32 %v894, %v930
        %v963 = vadd.f32 %v895, %v931
        %v964 = vadd.f32 %v896, %v932
        %v965 = vadd.f32 %v897, %v933
        %v966 = vadd.f32 %v898, %v934
        %v967 = vadd.f32 %v899, %v935
        %v968 = vadd.f32 %v900, %v936
        %v969 = vadd.f32 %v901, %v937
        %v970 = vadd.f32 %v902, %v938
        %v971 = vadd.f32 %v903, %v939
        %v972 = vadd.f32 %v904, %v940
        %v973 = vadd.f32 %v905, %v941
        %v974 = vadd.f32 %v906, %v942
        %v975 = vadd.f32 %v907, %v943
        %v976 = vadd.f32 %v908, %v944
        %v977 = vadd.f32 %v909, %v945
        %v978 = vadd.f32 %v910, %v946
        %v979 = vadd.f32 %v911, %v947
        %v980 = vadd.f32 %v912, %v948
        %v981 = vadd.f32 %v913, %v949
        %v982 = vadd.f32 %v914, %v950
        %v983 = vadd.f32 %v915, %v951
        %v984 = vadd.f32 %v916, %v952
        %v985 = vadd.f32 %v917, %v953
        %v986 = vadd.f32 %v918, %v954
        %v987 = vadd.f32 %v919, %v955
        %v988 = vadd.f32 %v920, %v956
        %v989 = vadd.f32 %v921, %v957
        %v990 = vadd.f32 %v922, %v958
        %v991 = vlaneseq
        %v992 = vshrl.u32 %v991, 7
        %v993 = vsub.s32 1, %v992
        %v994 = vrot.slane %v278, %v993
        %v995 = vmul.f32 %v246, %v994
        %v996 = vmul.f32 %v247, %v994
        %v997 = vmul.f32 %v248, %v994
        %v998 = vmul.f32 %v249, %v994
        %v999 = vmul.f32 %v250, %v994
        %v1000 = vmul.f32 %v251, %v994
        %v1001 = vmul.f32 %v252, %v994
        %v1002 = vmul.f32 %v253, %v994
        %v1003 = vmul.f32 %v254, %v994
        %v1004 = vmul.f32 %v255, %v994
        %v1005 = vmul.f32 %v256, %v994
        %v1006 = vmul.f32 %v257, %v994
        %v1007 = vmul.f32 %v258, %v994
        %v1008 = vmul.f32 %v259, %v994
        %v1009 = vmul.f32 %v260, %v994
        %v1010 = vmul.f32 %v261, %v994
        %v1011 = vmul.f32 %v262, %v994
        %v1012 = vmul.f32 %v263, %v994
        %v1013 = vmul.f32 %v264, %v994
        %v1014 = vmul.f32 %v265, %v994
        %v1015 = vmul.f32 %v266, %v994
        %v1016 = vmul.f32 %v267, %v994
        %v1017 = vmul.f32 %v268, %v994
        %v1018 = vmul.f32 %v269, %v994
        %v1019 = vmul.f32 %v270, %v994
        %v1020 = vmul.f32 %v271, %v994
        %v1021 = vmul.f32 %v272, %v994
        %v1022 = vmul.f32 %v273, %v994
        %v1023 = vmul.f32 %v274, %v994
        %v1024 = vmul.f32 %v275, %v994
        %v1025 = vmul.f32 %v994, 0.0
        %v1026 = vadd.f32 %v959, %v995
        %v1027 = vadd.f32 %v960, %v996
        %v1028 = vadd.f32 %v961, %v997
        %v1029 = vadd.f32 %v962, %v998
        %v1030 = vadd.f32 %v963, %v999
        %v1031 = vadd.f32 %v964, %v1000
        %v1032 = vadd.f32 %v965, %v1001
        %v1033 = vadd.f32 %v966, %v1002
        %v1034 = vadd.f32 %v967, %v1003
        %v1035 = vadd.f32 %v968, %v1004
        %v1036 = vadd.f32 %v969, %v1005
        %v1037 = vadd.f32 %v970, %v1006
        %v1038 = vadd.f32 %v971, %v1007
        %v1039 = vadd.f32 %v972, %v1008
        %v1040 = vadd.f32 %v973, %v1009
        %v1041 = vadd.f32 %v974, %v1010
        %v1042 = vadd.f32 %v975, %v1011
        %v1043 = vadd.f32 %v976, %v1012
        %v1044 = vadd.f32 %v977, %v1013
        %v1045 = vadd.f32 %v978, %v1014
        %v1046 = vadd.f32 %v979, %v1015
        %v1047 = vadd.f32 %v980, %v1016
        %v1048 = vadd.f32 %v981, %v1017
        %v1049 = vadd.f32 %v982, %v1018
        %v1050 = vadd.f32 %v983, %v1019
        %v1051 = vadd.f32 %v984, %v1020
        %v1052 = vadd.f32 %v985, %v1021
        %v1053 = vadd.f32 %v986, %v1022
        %v1054 = vadd.f32 %v987, %v1023
        %v1055 = vadd.f32 %v988, %v1024
        %v1056 = vadd.f32 %v989, %v1025
        %v1057 = vadd.f32 %v990, %v1025
        %v1058 = vlaneseq
        %v1059 = vshrl.u32 %v1058, 7
        %v1060 = vsub.s32 2, %v1059
        %v1061 = vrot.slane %v278, %v1060
        %v1062 = vmul.f32 %v549, %v1061
        %v1063 = vmul.f32 %v623, %v1061
        %v1064 = vmul.f32 %v552, %v1061
        %v1065 = vmul.f32 %v624, %v1061
        %v1066 = vmul.f32 %v555, %v1061
        %v1067 = vmul.f32 %v625, %v1061
        %v1068 = vmul.f32 %v558, %v1061
        %v1069 = vmul.f32 %v626, %v1061
        %v1070 = vmul.f32 %v561, %v1061
        %v1071 = vmul.f32 %v627, %v1061
        %v1072 = vmul.f32 %v564, %v1061
        %v1073 = vmul.f32 %v628, %v1061
        %v1074 = vmul.f32 %v567, %v1061
        %v1075 = vmul.f32 %v629, %v1061
        %v1076 = vmul.f32 %v570, %v1061
        %v1077 = vmul.f32 %v630, %v1061
        %v1078 = vmul.f32 %v573, %v1061
        %v1079 = vmul.f32 %v631, %v1061
        %v1080 = vmul.f32 %v576, %v1061
        %v1081 = vmul.f32 %v632, %v1061
        %v1082 = vmul.f32 %v579, %v1061
        %v1083 = vmul.f32 %v633, %v1061
        %v1084 = vmul.f32 %v582, %v1061
        %v1085 = vmul.f32 %v634, %v1061
        %v1086 = vmul.f32 %v585, %v1061
        %v1087 = vmul.f32 %v635, %v1061
        %v1088 = vmul.f32 %v588, %v1061
        %v1089 = vmul.f32 %v636, %v1061
        %v1090 = vmul.f32 %v851, %v1061
        %v1091 = vmul.f32 %v854, %v1061
        %v1092 = vmul.f32 %v543, %v1061
        %v1093 = vmul.f32 %v621, %v1061
        %v1094 = vadd.f32 %v1026, %v1062
        %v1095 = vadd.f32 %v1027, %v1063
        %v1096 = vadd.f32 %v1028, %v1064
        %v1097 = vadd.f32 %v1029, %v1065
        %v1098 = vadd.f32 %v1030, %v1066
        %v1099 = vadd.f32 %v1031, %v1067
        %v1100 = vadd.f32 %v1032, %v1068
        %v1101 = vadd.f32 %v1033, %v1069
        %v1102 = vadd.f32 %v1034, %v1070
        %v1103 = vadd.f32 %v1035, %v1071
        %v1104 = vadd.f32 %v1036, %v1072
        %v1105 = vadd.f32 %v1037, %v1073
        %v1106 = vadd.f32 %v1038, %v1074
        %v1107 = vadd.f32 %v1039, %v1075
        %v1108 = vadd.f32 %v1040, %v1076
        %v1109 = vadd.f32 %v1041, %v1077
        %v1110 = vadd.f32 %v1042, %v1078
        %v1111 = vadd.f32 %v1043, %v1079
        %v1112 = vadd.f32 %v1044, %v1080
        %v1113 = vadd.f32 %v1045, %v1081
        %v1114 = vadd.f32 %v1046, %v1082
        %v1115 = vadd.f32 %v1047, %v1083
        %v1116 = vadd.f32 %v1048, %v1084
        %v1117 = vadd.f32 %v1049, %v1085
        %v1118 = vadd.f32 %v1050, %v1086
        %v1119 = vadd.f32 %v1051, %v1087
        %v1120 = vadd.f32 %v1052, %v1088
        %v1121 = vadd.f32 %v1053, %v1089
        %v1122 = vadd.f32 %v1054, %v1090
        %v1123 = vadd.f32 %v1055, %v1091
        %v1124 = vadd.f32 %v1056, %v1092
        %v1125 = vadd.f32 %v1057, %v1093
        %v1126 = vld [vmem:[#allocation4] sm:$0x1]
        %v1128 = vlaneseq
        %v1129 = vshrl.u32 %v1128, 7
        %v1130 = vsub.s32 0, %v1129
        %v1131 = vrot.slane %v1126, %v1130
        %v1133 = vadd.f32 %v1094, %v1131
        %v1134 = vadd.f32 %v1095, %v1131
        %v1135 = vadd.f32 %v1096, %v1131
        %v1136 = vadd.f32 %v1097, %v1131
        %v1137 = vadd.f32 %v1098, %v1131
        %v1138 = vadd.f32 %v1099, %v1131
        %v1139 = vadd.f32 %v1100, %v1131
        %v1140 = vadd.f32 %v1101, %v1131
        %v1141 = vadd.f32 %v1102, %v1131
        %v1142 = vadd.f32 %v1103, %v1131
        %v1143 = vadd.f32 %v1104, %v1131
        %v1144 = vadd.f32 %v1105, %v1131
        %v1145 = vadd.f32 %v1106, %v1131
        %v1146 = vadd.f32 %v1107, %v1131
        %v1147 = vadd.f32 %v1108, %v1131
        %v1148 = vadd.f32 %v1109, %v1131
        %v1149 = vadd.f32 %v1110, %v1131
        %v1150 = vadd.f32 %v1111, %v1131
        %v1151 = vadd.f32 %v1112, %v1131
        %v1152 = vadd.f32 %v1113, %v1131
        %v1153 = vadd.f32 %v1114, %v1131
        %v1154 = vadd.f32 %v1115, %v1131
        %v1155 = vadd.f32 %v1116, %v1131
        %v1156 = vadd.f32 %v1117, %v1131
        %v1157 = vadd.f32 %v1118, %v1131
        %v1158 = vadd.f32 %v1119, %v1131
        %v1159 = vadd.f32 %v1120, %v1131
        %v1160 = vadd.f32 %v1121, %v1131
        %v1161 = vadd.f32 %v1122, %v1131
        %v1162 = vadd.f32 %v1123, %v1131
        %v1163 = vadd.f32 %v1124, %v1131
        %v1164 = vadd.f32 %v1125, %v1131
        %v1165 = vxor.u32 %v1133, 2147483648
        %v1166 = vxor.u32 %v1134, 2147483648
        %v1167 = vxor.u32 %v1135, 2147483648
        %v1168 = vxor.u32 %v1136, 2147483648
        %v1169 = vxor.u32 %v1137, 2147483648
        %v1170 = vxor.u32 %v1138, 2147483648
        %v1171 = vxor.u32 %v1139, 2147483648
        %v1172 = vxor.u32 %v1140, 2147483648
        %v1173 = vxor.u32 %v1141, 2147483648
        %v1174 = vxor.u32 %v1142, 2147483648
        %v1175 = vxor.u32 %v1143, 2147483648
        %v1176 = vxor.u32 %v1144, 2147483648
        %v1177 = vxor.u32 %v1145, 2147483648
        %v1178 = vxor.u32 %v1146, 2147483648
        %v1179 = vxor.u32 %v1147, 2147483648
        %v1180 = vxor.u32 %v1148, 2147483648
        %v1181 = vxor.u32 %v1149, 2147483648
        %v1182 = vxor.u32 %v1150, 2147483648
        %v1183 = vxor.u32 %v1151, 2147483648
        %v1184 = vxor.u32 %v1152, 2147483648
        %v1185 = vxor.u32 %v1153, 2147483648
        %v1186 = vxor.u32 %v1154, 2147483648
        %v1187 = vxor.u32 %v1155, 2147483648
        %v1188 = vxor.u32 %v1156, 2147483648
        %v1189 = vxor.u32 %v1157, 2147483648
        %v1190 = vxor.u32 %v1158, 2147483648
        %v1191 = vxor.u32 %v1159, 2147483648
        %v1192 = vxor.u32 %v1160, 2147483648
        %v1193 = vxor.u32 %v1161, 2147483648
        %v1194 = vxor.u32 %v1162, 2147483648
        %v1195 = vxor.u32 %v1163, 2147483648
        %v1196 = vxor.u32 %v1164, 2147483648
        %v1197 = vmul.f32 %v1165, 1.442695
        %v1198 = vpow.pop %v1197
        %v1199 = vmul.f32 %v1166, 1.442695
        %v1200 = vpow.pop %v1199
        %v1201 = vmul.f32 %v1167, 1.442695
        %v1202 = vpow.pop %v1201
        %v1203 = vmul.f32 %v1168, 1.442695
        %v1204 = vpow.pop %v1203
        %v1205 = vmul.f32 %v1169, 1.442695
        %v1206 = vpow.pop %v1205
        %v1207 = vmul.f32 %v1170, 1.442695
        %v1208 = vpow.pop %v1207
        %v1209 = vmul.f32 %v1171, 1.442695
        %v1210 = vpow.pop %v1209
        %v1211 = vmul.f32 %v1172, 1.442695
        %v1212 = vpow.pop %v1211
        %v1213 = vmul.f32 %v1173, 1.442695
        %v1214 = vpow.pop %v1213
        %v1215 = vmul.f32 %v1174, 1.442695
        %v1216 = vpow.pop %v1215
        %v1217 = vmul.f32 %v1175, 1.442695
        %v1218 = vpow.pop %v1217
        %v1219 = vmul.f32 %v1176, 1.442695
        %v1220 = vpow.pop %v1219
        %v1221 = vmul.f32 %v1177, 1.442695
        %v1222 = vpow.pop %v1221
        %v1223 = vmul.f32 %v1178, 1.442695
        %v1224 = vpow.pop %v1223
        %v1225 = vmul.f32 %v1179, 1.442695
        %v1226 = vpow.pop %v1225
        %v1227 = vmul.f32 %v1180, 1.442695
        %v1228 = vpow.pop %v1227
        %v1229 = vmul.f32 %v1181, 1.442695
        %v1230 = vpow.pop %v1229
        %v1231 = vmul.f32 %v1182, 1.442695
        %v1232 = vpow.pop %v1231
        %v1233 = vmul.f32 %v1183, 1.442695
        %v1234 = vpow.pop %v1233
        %v1235 = vmul.f32 %v1184, 1.442695
        %v1236 = vpow.pop %v1235
        %v1237 = vmul.f32 %v1185, 1.442695
        %v1238 = vpow.pop %v1237
        %v1239 = vmul.f32 %v1186, 1.442695
        %v1240 = vpow.pop %v1239
        %v1241 = vmul.f32 %v1187, 1.442695
        %v1242 = vpow.pop %v1241
        %v1243 = vmul.f32 %v1188, 1.442695
        %v1244 = vpow.pop %v1243
        %v1245 = vmul.f32 %v1189, 1.442695
        %v1246 = vpow.pop %v1245
        %v1247 = vmul.f32 %v1190, 1.442695
        %v1248 = vpow.pop %v1247
        %v1249 = vmul.f32 %v1191, 1.442695
        %v1250 = vpow.pop %v1249
        %v1251 = vmul.f32 %v1192, 1.442695
        %v1252 = vpow.pop %v1251
        %v1253 = vmul.f32 %v1193, 1.442695
        %v1254 = vpow.pop %v1253
        %v1255 = vmul.f32 %v1194, 1.442695
        %v1256 = vpow.pop %v1255
        %v1257 = vmul.f32 %v1195, 1.442695
        %v1258 = vpow.pop %v1257
        %v1259 = vmul.f32 %v1196, 1.442695
        %v1260 = vpow.pop %v1259
        %v1261 = vadd.f32 %v1198, 1.0
        %v1262 = vadd.f32 %v1200, 1.0
        %v1263 = vadd.f32 %v1202, 1.0
        %v1264 = vadd.f32 %v1204, 1.0
        %v1265 = vadd.f32 %v1206, 1.0
        %v1266 = vadd.f32 %v1208, 1.0
        %v1267 = vadd.f32 %v1210, 1.0
        %v1268 = vadd.f32 %v1212, 1.0
        %v1269 = vadd.f32 %v1214, 1.0
        %v1270 = vadd.f32 %v1216, 1.0
        %v1271 = vadd.f32 %v1218, 1.0
        %v1272 = vadd.f32 %v1220, 1.0
        %v1273 = vadd.f32 %v1222, 1.0
        %v1274 = vadd.f32 %v1224, 1.0
        %v1275 = vadd.f32 %v1226, 1.0
        %v1276 = vadd.f32 %v1228, 1.0
        %v1277 = vadd.f32 %v1230, 1.0
        %v1278 = vadd.f32 %v1232, 1.0
        %v1279 = vadd.f32 %v1234, 1.0
        %v1280 = vadd.f32 %v1236, 1.0
        %v1281 = vadd.f32 %v1238, 1.0
        %v1282 = vadd.f32 %v1240, 1.0
        %v1283 = vadd.f32 %v1242, 1.0
        %v1284 = vadd.f32 %v1244, 1.0
        %v1285 = vadd.f32 %v1246, 1.0
        %v1286 = vadd.f32 %v1248, 1.0
        %v1287 = vadd.f32 %v1250, 1.0
        %v1288 = vadd.f32 %v1252, 1.0
        %v1289 = vadd.f32 %v1254, 1.0
        %v1290 = vadd.f32 %v1256, 1.0
        %v1291 = vadd.f32 %v1258, 1.0
        %v1292 = vadd.f32 %v1260, 1.0
        %v1293 = vrcp.pop %v1261
        %v1294 = vmul.f32 1.0, %v1293
        %v1295 = vrcp.pop %v1262
        %v1296 = vmul.f32 1.0, %v1295
        %v1297 = vrcp.pop %v1263
        %v1298 = vmul.f32 1.0, %v1297
        %v1299 = vrcp.pop %v1264
        %v1300 = vmul.f32 1.0, %v1299
        %v1301 = vrcp.pop %v1265
        %v1302 = vmul.f32 1.0, %v1301
        %v1303 = vrcp.pop %v1266
        %v1304 = vmul.f32 1.0, %v1303
        %v1305 = vrcp.pop %v1267
        %v1306 = vmul.f32 1.0, %v1305
        %v1307 = vrcp.pop %v1268
        %v1308 = vmul.f32 1.0, %v1307
        %v1309 = vrcp.pop %v1269
        %v1310 = vmul.f32 1.0, %v1309
        %v1311 = vrcp.pop %v1270
        %v1312 = vmul.f32 1.0, %v1311
        %v1313 = vrcp.pop %v1271
        %v1314 = vmul.f32 1.0, %v1313
        %v1315 = vrcp.pop %v1272
        %v1316 = vmul.f32 1.0, %v1315
        %v1317 = vrcp.pop %v1273
        %v1318 = vmul.f32 1.0, %v1317
        %v1319 = vrcp.pop %v1274
        %v1320 = vmul.f32 1.0, %v1319
        %v1321 = vrcp.pop %v1275
        %v1322 = vmul.f32 1.0, %v1321
        %v1323 = vrcp.pop %v1276
        %v1324 = vmul.f32 1.0, %v1323
        %v1325 = vrcp.pop %v1277
        %v1326 = vmul.f32 1.0, %v1325
        %v1327 = vrcp.pop %v1278
        %v1328 = vmul.f32 1.0, %v1327
        %v1329 = vrcp.pop %v1279
        %v1330 = vmul.f32 1.0, %v1329
        %v1331 = vrcp.pop %v1280
        %v1332 = vmul.f32 1.0, %v1331
        %v1333 = vrcp.pop %v1281
        %v1334 = vmul.f32 1.0, %v1333
        %v1335 = vrcp.pop %v1282
        %v1336 = vmul.f32 1.0, %v1335
        %v1337 = vrcp.pop %v1283
        %v1338 = vmul.f32 1.0, %v1337
        %v1339 = vrcp.pop %v1284
        %v1340 = vmul.f32 1.0, %v1339
        %v1341 = vrcp.pop %v1285
        %v1342 = vmul.f32 1.0, %v1341
        %v1343 = vrcp.pop %v1286
        %v1344 = vmul.f32 1.0, %v1343
        %v1345 = vrcp.pop %v1287
        %v1346 = vmul.f32 1.0, %v1345
        %v1347 = vrcp.pop %v1288
        %v1348 = vmul.f32 1.0, %v1347
        %v1349 = vrcp.pop %v1289
        %v1350 = vmul.f32 1.0, %v1349
        %v1351 = vrcp.pop %v1290
        %v1352 = vmul.f32 1.0, %v1351
        %v1353 = vrcp.pop %v1291
        %v1354 = vmul.f32 1.0, %v1353
        %v1355 = vrcp.pop %v1292
        %v1356 = vmul.f32 1.0, %v1355
        %v1357 = vmul.f32 %v1133, %v1294
        %v1358 = vmul.f32 %v1134, %v1296
        %v1359 = vmul.f32 %v1135, %v1298
        %v1360 = vmul.f32 %v1136, %v1300
        %v1361 = vmul.f32 %v1137, %v1302
        %v1362 = vmul.f32 %v1138, %v1304
        %v1363 = vmul.f32 %v1139, %v1306
        %v1364 = vmul.f32 %v1140, %v1308
        %v1365 = vmul.f32 %v1141, %v1310
        %v1366 = vmul.f32 %v1142, %v1312
        %v1367 = vmul.f32 %v1143, %v1314
        %v1368 = vmul.f32 %v1144, %v1316
        %v1369 = vmul.f32 %v1145, %v1318
        %v1370 = vmul.f32 %v1146, %v1320
        %v1371 = vmul.f32 %v1147, %v1322
        %v1372 = vmul.f32 %v1148, %v1324
        %v1373 = vmul.f32 %v1149, %v1326
        %v1374 = vmul.f32 %v1150, %v1328
        %v1375 = vmul.f32 %v1151, %v1330
        %v1376 = vmul.f32 %v1152, %v1332
        %v1377 = vmul.f32 %v1153, %v1334
        %v1378 = vmul.f32 %v1154, %v1336
        %v1379 = vmul.f32 %v1155, %v1338
        %v1380 = vmul.f32 %v1156, %v1340
        %v1381 = vmul.f32 %v1157, %v1342
        %v1382 = vmul.f32 %v1158, %v1344
        %v1383 = vmul.f32 %v1159, %v1346
        %v1384 = vmul.f32 %v1160, %v1348
        %v1385 = vmul.f32 %v1161, %v1350
        %v1386 = vmul.f32 %v1162, %v1352
        %v1387 = vmul.f32 %v1163, %v1354
        %v1388 = vmul.f32 %v1164, %v1356
        %vm1389 = vcmask 64512
        %1390 = vst.msk [vmem:[%s243] sm:$0xff] %vm1389, %v1357
        %1391 = vst.msk [vmem:[%s243 + $0x8] sm:$0xff] %vm1389, %v1358
        %1392 = vst.msk [vmem:[%s243 + $0x10] sm:$0xff] %vm1389, %v1359
        %1393 = vst.msk [vmem:[%s243 + $0x18] sm:$0xff] %vm1389, %v1360
        %1394 = vst.msk [vmem:[%s243 + $0x20] sm:$0xff] %vm1389, %v1361
        %1395 = vst.msk [vmem:[%s243 + $0x28] sm:$0xff] %vm1389, %v1362
        %1396 = vst.msk [vmem:[%s243 + $0x30] sm:$0xff] %vm1389, %v1363
        %1397 = vst.msk [vmem:[%s243 + $0x38] sm:$0xff] %vm1389, %v1364
        %1398 = vst.msk [vmem:[%s243 + $0x40] sm:$0xff] %vm1389, %v1365
        %1399 = vst.msk [vmem:[%s243 + $0x48] sm:$0xff] %vm1389, %v1366
        %1400 = vst.msk [vmem:[%s243 + $0x50] sm:$0xff] %vm1389, %v1367
        %1401 = vst.msk [vmem:[%s243 + $0x58] sm:$0xff] %vm1389, %v1368
        %1402 = vst.msk [vmem:[%s243 + $0x60] sm:$0xff] %vm1389, %v1369
        %1403 = vst.msk [vmem:[%s243 + $0x68] sm:$0xff] %vm1389, %v1370
        %1404 = vst.msk [vmem:[%s243 + $0x70] sm:$0xff] %vm1389, %v1371
        %1405 = vst.msk [vmem:[%s243 + $0x78] sm:$0xff] %vm1389, %v1372
        %1406 = vst.msk [vmem:[%s243 + $0x80] sm:$0xff] %vm1389, %v1373
        %1407 = vst.msk [vmem:[%s243 + $0x88] sm:$0xff] %vm1389, %v1374
        %1408 = vst.msk [vmem:[%s243 + $0x90] sm:$0xff] %vm1389, %v1375
        %1409 = vst.msk [vmem:[%s243 + $0x98] sm:$0xff] %vm1389, %v1376
        %1410 = vst.msk [vmem:[%s243 + $0xa0] sm:$0xff] %vm1389, %v1377
        %1411 = vst.msk [vmem:[%s243 + $0xa8] sm:$0xff] %vm1389, %v1378
        %1412 = vst.msk [vmem:[%s243 + $0xb0] sm:$0xff] %vm1389, %v1379
        %1413 = vst.msk [vmem:[%s243 + $0xb8] sm:$0xff] %vm1389, %v1380
        %1414 = vst.msk [vmem:[%s243 + $0xc0] sm:$0xff] %vm1389, %v1381
        %1415 = vst.msk [vmem:[%s243 + $0xc8] sm:$0xff] %vm1389, %v1382
        %1416 = vst.msk [vmem:[%s243 + $0xd0] sm:$0xff] %vm1389, %v1383
        %1417 = vst.msk [vmem:[%s243 + $0xd8] sm:$0xff] %vm1389, %v1384
        %1418 = vst.msk [vmem:[%s243 + $0xe0] sm:$0xff] %vm1389, %v1385
        %1419 = vst.msk [vmem:[%s243 + $0xe8] sm:$0xff] %vm1389, %v1386
        %1420 = vst.msk [vmem:[%s243 + $0xf0] sm:$0xff] %vm1389, %v1387
        %1421 = vst.msk [vmem:[%s243 + $0xf8] sm:$0xff] %vm1389, %v1388
        %p1422 = scmp.lt.s32.totalorder %s20, 1
        %s1423 = scalar_select %p1422, %s20, 1
        %p1424 = scmp.lt.s32.totalorder %s21, 0
        %s1425 = scalar_select %p1424, %s21, 0
        %s1426 = smul.addr %s1423, 32
        %s1427 = sadd.s32 %s1425, %s1426
        %s1428 = smul.addr %s1427, 8
        %s1429 = scalar_lea.vmem %s3, %s1428
        // Predicated region
        $region41: #{ss2d_local_forward.6} parent=31 // pred_check
          %p1430 = pneg %p128
        $region42: #{ss2d_local_forward.6} parent=31 // pred_check_branch
          %1432 = sbr.rel (%p1430) target = $region44
        $region43: #{ss2d_local_forward.6} parent=31 // pred_region
          _
        $region44: #{ss2d_local_forward.6} parent=31 // pred_fallthru
          _
      $region32: #{ss2d_local_forward.6} parent=5 // pred_fallthru
        _
      %p1433 = scmp.le.s32.totalorder 2, %s11
      // Predicated region
      $region45: #{ss2d_local_forward.6} parent=5 // pred_check
        %p1434 = pneg %p1433
      $region46: #{ss2d_local_forward.6} parent=5 // pred_check_branch
        %1436 = sbr.rel (%p1434) target = $region48
      $region47: #{ss2d_local_forward.6} parent=5 // pred_region
        %s1437 = ssub.s32 %s11, 2
        // Predicated region
        $region49: #{ss2d_local_forward.6} parent=47 // pred_check
          %p1438 = pneg %p134
        $region50: #{ss2d_local_forward.6} parent=47 // pred_check_branch
          %1440 = sbr.rel (%p1438) target = $region52
        $region51: #{ss2d_local_forward.6} parent=47 // pred_region
          %p1441 = scmp.lt.s32.totalorder %s22, 1
          %s1442 = scalar_select %p1441, %s22, 1
          %p1443 = scmp.lt.s32.totalorder %s23, 0
          %s1444 = scalar_select %p1443, %s23, 0
          %s1445 = smul.addr %s1442, 32
          %s1446 = sadd.s32 %s1444, %s1445
          %s1447 = smul.addr %s1446, 8
          %s1448 = scalar_lea.vmem %s3, %s1447
        $region52: #{ss2d_local_forward.6} parent=47 // pred_fallthru
          _
      $region48: #{ss2d_local_forward.6} parent=5 // pred_fallthru
        _
    $region6: #{ss2d_local_forward.6} parent=1 // loop_footer
      %s15 = sadd.s32 1, %s11
    $region7: #{ss2d_local_forward.6} parent=1 // loop_footer_branch
      %10 = sbr.rel target = $region3
    $region8: #{ss2d_local_forward.6} parent=1 // loop_exit
      _
    %1449 = vsyncpa [#allocation3], 1
    %s1450 = scalar_lea.sflag [#allocation3], 1
    %1451 = vsyncpa %s1450, 1
    %1452 = vsyncpa [#allocation5], 1

// kernel: ss2d_local_forward.7
$region0: #{ss2d_local_forward.7}
  #allocation0 [shape = 'u32[]', space=smem, size = 0x4, offset = 0x4, fixed_abs, tag = 'smem constant byte address 0x4 - core index']
  #allocation1 [shape = 'u32[144,128]{1,0:T(1,128)}', space=vmem, size = 0x12000, scoped, tag = 'internal scratch']
  %s0 = inlined_call_operand.vmem [shape: f32[4,512,8], index: 0, kind: input, shape index: {}]
  %s1 = inlined_call_operand.vmem [shape: bf16[4,8,8], index: 1, kind: input, shape index: {}]
  %s2 = inlined_call_operand.vmem [shape: bf16[4,8,32], index: 2, kind: input, shape index: {}]
  %s3 = inlined_call_operand.vmem [shape: f32[4,512,8], index: 3, kind: output, shape index: {0}]
  %s4 = inlined_call_operand.vmem [shape: f32[4,512,32], index: 4, kind: output, shape index: {1}]
  %5 = xla_tuple %s3, %s4
  %s6 = sld [smem:[#allocation0]]
  $region53: #{ss2d_local_forward.7} parent=0
    _
  %s8 = ssub.s32 1, %s6
  %s9 = scalar_select 0, %s8, %s6
  loop: start=0, step=1, limit=18
  $region2: #{ss2d_local_forward.7} parent=0 // loop_pre_header
    _
  $region3: #{ss2d_local_forward.7} parent=0 // loop_header
    %s11 = sphi 0, %s15
    %p12 = scmp.ge.s32.totalorder %s11, 18
    %s18 = sphi 0, %s30
    %s19 = sphi 0, %s26
    %s20 = sphi 0, %s18
    %s21 = sphi 0, %s19
    %s22 = sphi 0, %s20
    %s23 = sphi 0, %s21
    %s35 = sphi 0, %s37
    %s38 = sphi 0, %s35
    %s39 = sphi 0, %s38
    %s55 = sphi 0, %s39
    %s61 = sphi 0, %s63
    %s64 = sphi 0, %s61
    %s65 = sphi 0, %s64
    %s81 = sphi 0, %s65
    %s87 = sphi 0, %s89
    %s90 = sphi 0, %s87
    %s91 = sphi 0, %s90
    %s107 = sphi 0, %s91
    %s115 = sphi 0, %s117
    %s118 = sphi 0, %s115
    %s119 = sphi 0, %s118
    %s135 = sphi 0, %s119
    %s143 = sphi 0, %s145
    %s146 = sphi 0, %s143
    %s147 = sphi 0, %s146
    %s163 = sphi 0, %s147
  $region4: #{ss2d_local_forward.7} parent=0 // loop_header_branch
    %14 = sbr.rel (%p12) target = $region8
  $region5: #{ss2d_local_forward.7} parent=0 // loop_body
    %s16 = ssub.s32 %s11, 1
    %s17 = ssub.s32 %s11, 2
    %s24 = sadd.s32 1, %s19
    %p25 = scmp.ge.s32.totalorder %s24, 4
    %s26 = scalar_select %p25, 0, %s24
    %s27 = sadd.s32 1, %s18
    %s28 = scalar_select %p25, %s27, %s18
    %p29 = scmp.ge.s32.totalorder %s28, 4
    %s30 = scalar_select %p29, 0, %s28
    %s31 = ssub.s32 %s18, %s30
    %s32 = ssub.s32 %s19, %s26
    %s33 = sor.u32 %s31, %s32
    %p34 = scmp.eq.s32.totalorder %s33, 0
    %s36 = sadd.s32 %s35, 1
    %s37 = scalar_select %p34, %s35, %s36
    %p40 = pneg %p34
    %p41 = scmp.eq.s32.totalorder %s11, 15
    %p42 = por %p40, %p41
    %p43 = scmp.ne.s32.totalorder %s35, %s38
    %p44 = scmp.eq.s32.totalorder %s11, 0
    %p45 = por %p43, %p44
    %p46 = scmp.ne.s32.totalorder %s35, %s38
    %p47 = scmp.eq.s32.totalorder %s16, 15
    %p48 = por %p46, %p47
    %p49 = scmp.ne.s32.totalorder %s38, %s39
    %p50 = scmp.eq.s32.totalorder %s16, 0
    %p51 = por %p49, %p50
    %p52 = scmp.ne.s32.totalorder %s38, %s39
    %p53 = scmp.eq.s32.totalorder %s17, 15
    %p54 = por %p52, %p53
    %p56 = scmp.ne.s32.totalorder %s39, %s55
    %p57 = scmp.eq.s32.totalorder %s17, 0
    %p58 = por %p56, %p57
    %s59 = ssub.s32 %s18, %s30
    %p60 = scmp.eq.s32.totalorder %s59, 0
    %s62 = sadd.s32 %s61, 1
    %s63 = scalar_select %p60, %s61, %s62
    %p66 = pneg %p60
    %p67 = scmp.eq.s32.totalorder %s11, 15
    %p68 = por %p66, %p67
    %p69 = scmp.ne.s32.totalorder %s61, %s64
    %p70 = scmp.eq.s32.totalorder %s11, 0
    %p71 = por %p69, %p70
    %p72 = scmp.ne.s32.totalorder %s61, %s64
    %p73 = scmp.eq.s32.totalorder %s16, 15
    %p74 = por %p72, %p73
    %p75 = scmp.ne.s32.totalorder %s64, %s65
    %p76 = scmp.eq.s32.totalorder %s16, 0
    %p77 = por %p75, %p76
    %p78 = scmp.ne.s32.totalorder %s64, %s65
    %p79 = scmp.eq.s32.totalorder %s17, 15
    %p80 = por %p78, %p79
    %p82 = scmp.ne.s32.totalorder %s65, %s81
    %p83 = scmp.eq.s32.totalorder %s17, 0
    %p84 = por %p82, %p83
    %s85 = ssub.s32 %s18, %s30
    %p86 = scmp.eq.s32.totalorder %s85, 0
    %s88 = sadd.s32 %s87, 1
    %s89 = scalar_select %p86, %s87, %s88
    %p92 = pneg %p86
    %p93 = scmp.eq.s32.totalorder %s11, 15
    %p94 = por %p92, %p93
    %p95 = scmp.ne.s32.totalorder %s87, %s90
    %p96 = scmp.eq.s32.totalorder %s11, 0
    %p97 = por %p95, %p96
    %p98 = scmp.ne.s32.totalorder %s87, %s90
    %p99 = scmp.eq.s32.totalorder %s16, 15
    %p100 = por %p98, %p99
    %p101 = scmp.ne.s32.totalorder %s90, %s91
    %p102 = scmp.eq.s32.totalorder %s16, 0
    %p103 = por %p101, %p102
    %p104 = scmp.ne.s32.totalorder %s90, %s91
    %p105 = scmp.eq.s32.totalorder %s17, 15
    %p106 = por %p104, %p105
    %p108 = scmp.ne.s32.totalorder %s91, %s107
    %p109 = scmp.eq.s32.totalorder %s17, 0
    %p110 = por %p108, %p109
    %s111 = ssub.s32 %s18, %s30
    %s112 = ssub.s32 %s19, %s26
    %s113 = sor.u32 %s111, %s112
    %p114 = scmp.eq.s32.totalorder %s113, 0
    %s116 = sadd.s32 %s115, 1
    %s117 = scalar_select %p114, %s115, %s116
    %p120 = pneg %p114
    %p121 = scmp.eq.s32.totalorder %s11, 15
    %p122 = por %p120, %p121
    %p123 = scmp.ne.s32.totalorder %s115, %s118
    %p124 = scmp.eq.s32.totalorder %s11, 0
    %p125 = por %p123, %p124
    %p126 = scmp.ne.s32.totalorder %s115, %s118
    %p127 = scmp.eq.s32.totalorder %s16, 15
    %p128 = por %p126, %p127
    %p129 = scmp.ne.s32.totalorder %s118, %s119
    %p130 = scmp.eq.s32.totalorder %s16, 0
    %p131 = por %p129, %p130
    %p132 = scmp.ne.s32.totalorder %s118, %s119
    %p133 = scmp.eq.s32.totalorder %s17, 15
    %p134 = por %p132, %p133
    %p136 = scmp.ne.s32.totalorder %s119, %s135
    %p137 = scmp.eq.s32.totalorder %s17, 0
    %p138 = por %p136, %p137
    %s139 = ssub.s32 %s18, %s30
    %s140 = ssub.s32 %s19, %s26
    %s141 = sor.u32 %s139, %s140
    %p142 = scmp.eq.s32.totalorder %s141, 0
    %s144 = sadd.s32 %s143, 1
    %s145 = scalar_select %p142, %s143, %s144
    %p148 = pneg %p142
    %p149 = scmp.eq.s32.totalorder %s11, 15
    %p150 = por %p148, %p149
    %p151 = scmp.ne.s32.totalorder %s143, %s146
    %p152 = scmp.eq.s32.totalorder %s11, 0
    %p153 = por %p151, %p152
    %p154 = scmp.ne.s32.totalorder %s143, %s146
    %p155 = scmp.eq.s32.totalorder %s16, 15
    %p156 = por %p154, %p155
    %p157 = scmp.ne.s32.totalorder %s146, %s147
    %p158 = scmp.eq.s32.totalorder %s16, 0
    %p159 = por %p157, %p158
    %p160 = scmp.ne.s32.totalorder %s146, %s147
    %p161 = scmp.eq.s32.totalorder %s17, 15
    %p162 = por %p160, %p161
    %p164 = scmp.ne.s32.totalorder %s147, %s163
    %p165 = scmp.eq.s32.totalorder %s17, 0
    %p166 = por %p164, %p165
    %p167 = scmp.le.s32.totalorder 1, %s11
    %p168 = scmp.lt.s32.totalorder %s11, 17
    %p169 = pnand %p167, %p168
    %p170 = pneg %p169
    // Predicated region
    $region9: #{ss2d_local_forward.7} parent=5 // pred_check
      _
    $region10: #{ss2d_local_forward.7} parent=5 // pred_check_branch
      %172 = sbr.rel (%p169) target = $region12
    $region11: #{ss2d_local_forward.7} parent=5 // pred_region
      %s173 = ssub.s32 %s11, 1
    $region12: #{ss2d_local_forward.7} parent=5 // pred_fallthru
      _
    %p174 = scmp.lt.s32.totalorder %s11, 16
    // Predicated region
    $region13: #{ss2d_local_forward.7} parent=5 // pred_check
      %p175 = pneg %p174
    $region14: #{ss2d_local_forward.7} parent=5 // pred_check_branch
      %177 = sbr.rel (%p175) target = $region16
    $region15: #{ss2d_local_forward.7} parent=5 // pred_region
      // Predicated region
      $region17: #{ss2d_local_forward.7} parent=15 // pred_check
        %p178 = pneg %p45
      $region18: #{ss2d_local_forward.7} parent=15 // pred_check_branch
        %180 = sbr.rel (%p178) target = $region20
      $region19: #{ss2d_local_forward.7} parent=15 // pred_region
        %s181 = smul.u32 16, %s19
        %p182 = scmp.lt.s32.totalorder %s18, 3
        %s183 = scalar_select %p182, %s18, 3
        %p184 = scmp.lt.s32.totalorder %s181, 63
        %s185 = scalar_select %p184, %s181, 63
        %s186 = smul.addr %s183, 64
        %s187 = sadd.s32 %s185, %s186
        %s188 = smul.addr %s187, 8
        %s189 = scalar_lea.vmem %s0, %s188
        %s190 = smul.u32 16, %s19
      $region20: #{ss2d_local_forward.7} parent=15 // pred_fallthru
        _
      // Predicated region
      $region21: #{ss2d_local_forward.7} parent=15 // pred_check
        %p191 = pneg %p71
      $region22: #{ss2d_local_forward.7} parent=15 // pred_check_branch
        %193 = sbr.rel (%p191) target = $region24
      $region23: #{ss2d_local_forward.7} parent=15 // pred_region
        %p194 = scmp.lt.s32.totalorder %s18, 3
        %s195 = scalar_select %p194, %s18, 3
        %s196 = smul.addr %s195, 4
        %s197 = scalar_lea.vmem %s1, %s196
      $region24: #{ss2d_local_forward.7} parent=15 // pred_fallthru
        _
      // Predicated region
      $region25: #{ss2d_local_forward.7} parent=15 // pred_check
        %p198 = pneg %p97
      $region26: #{ss2d_local_forward.7} parent=15 // pred_check_branch
        %200 = sbr.rel (%p198) target = $region28
      $region27: #{ss2d_local_forward.7} parent=15 // pred_region
        %p201 = scmp.lt.s32.totalorder %s18, 3
        %s202 = scalar_select %p201, %s18, 3
        %s203 = smul.addr %s202, 4
        %s204 = scalar_lea.vmem %s2, %s203
      $region28: #{ss2d_local_forward.7} parent=15 // pred_fallthru
        _
    $region16: #{ss2d_local_forward.7} parent=5 // pred_fallthru
      _
    %p205 = scmp.le.s32.totalorder 1, %s11
    %p206 = scmp.lt.s32.totalorder %s11, 17
    %p207 = pnand %p205, %p206
    %p208 = pneg %p207
    // Predicated region
    $region29: #{ss2d_local_forward.7} parent=5 // pred_check
      _
    $region30: #{ss2d_local_forward.7} parent=5 // pred_check_branch
      %210 = sbr.rel (%p207) target = $region32
    $region31: #{ss2d_local_forward.7} parent=5 // pred_region
      %s211 = ssub.s32 %s11, 1
      %s212 = smul.u32 16, %s21
      %p213 = scmp.lt.s32.totalorder %s20, 3
      %s214 = scalar_select %p213, %s20, 3
      %p215 = scmp.lt.s32.totalorder %s212, 63
      %s216 = scalar_select %p215, %s212, 63
      %s217 = smul.addr %s214, 64
      %s218 = sadd.s32 %s216, %s217
      %s219 = smul.addr %s218, 8
      %s220 = scalar_lea.vmem %s0, %s219
      %p221 = pneg %p51
      %p222 = pneg %p48
      %p223 = scmp.lt.s32.totalorder %s20, 3
      %s224 = scalar_select %p223, %s20, 3
      %s225 = smul.addr %s224, 4
      %s226 = scalar_lea.vmem %s1, %s225
      %p227 = pneg %p77
      %p228 = pneg %p74
      %p229 = scmp.lt.s32.totalorder %s20, 3
      %s230 = scalar_select %p229, %s20, 3
      %s231 = smul.addr %s230, 4
      %s232 = scalar_lea.vmem %s2, %s231
      %p233 = pneg %p103
      %p234 = pneg %p100
      %p235 = pneg %p131
      %p236 = pneg %p128
      %s237 = smul.u32 16, %s21
      %p238 = scmp.lt.s32.totalorder %s20, 3
      %s239 = scalar_select %p238, %s20, 3
      %p240 = scmp.lt.s32.totalorder %s237, 63
      %s241 = scalar_select %p240, %s237, 63
      %s242 = smul.addr %s239, 64
      %s243 = sadd.s32 %s241, %s242
      %s244 = smul.addr %s243, 8
      %s245 = scalar_lea.vmem %s3, %s244
      %p246 = pneg %p159
      %p247 = pneg %p156
      %s248 = smul.u32 16, %s21
      %p249 = scmp.lt.s32.totalorder %s20, 3
      %s250 = scalar_select %p249, %s20, 3
      %p251 = scmp.lt.s32.totalorder %s248, 63
      %s252 = scalar_select %p251, %s248, 63
      %s253 = smul.addr %s250, 64
      %s254 = sadd.s32 %s252, %s253
      %s255 = smul.addr %s254, 8
      %s256 = scalar_lea.vmem %s4, %s255
      %s257 = smul.u32 16, %s21
      %p258 = scmp.lt.s32.totalorder %s20, 3
      %s259 = scalar_select %p258, %s20, 3
      %p260 = scmp.lt.s32.totalorder %s257, 63
      %s261 = scalar_select %p260, %s257, 63
      %s262 = smul.addr %s259, 64
      %s263 = sadd.s32 %s261, %s262
      %s264 = smul.addr %s263, 8
      %s265 = scalar_lea.vmem %s0, %s264
      %s266 = smul.u32 16, %s21
      %p267 = scmp.lt.s32.totalorder %s20, 3
      %s268 = scalar_select %p267, %s20, 3
      %s269 = smul.addr %s268, 4
      %s270 = scalar_lea.vmem %s1, %s269
      %p271 = scmp.lt.s32.totalorder %s20, 3
      %s272 = scalar_select %p271, %s20, 3
      %s273 = smul.addr %s272, 4
      %s274 = scalar_lea.vmem %s2, %s273
      %s275 = smul.u32 16, %s21
      %p276 = scmp.lt.s32.totalorder %s20, 3
      %s277 = scalar_select %p276, %s20, 3
      %p278 = scmp.lt.s32.totalorder %s275, 63
      %s279 = scalar_select %p278, %s275, 63
      %s280 = smul.addr %s277, 64
      %s281 = sadd.s32 %s279, %s280
      %s282 = smul.addr %s281, 8
      %s283 = scalar_lea.vmem %s3, %s282
      %s284 = smul.u32 16, %s21
      %s285 = smul.u32 16, %s21
      %p286 = scmp.lt.s32.totalorder %s20, 3
      %s287 = scalar_select %p286, %s20, 3
      %p288 = scmp.lt.s32.totalorder %s285, 63
      %s289 = scalar_select %p288, %s285, 63
      %s290 = smul.addr %s287, 64
      %s291 = sadd.s32 %s289, %s290
      %s292 = smul.addr %s291, 8
      %s293 = scalar_lea.vmem %s4, %s292
      %s294 = smul.u32 16, %s21
      %v296 = vld [vmem:[%s265] sm:$0xff]
      %v297 = vld [vmem:[%s265 + $0x8] sm:$0xff]
      %v298 = vld [vmem:[%s265 + $0x10] sm:$0xff]
      %v299 = vld [vmem:[%s265 + $0x18] sm:$0xff]
      %v300 = vld [vmem:[%s265 + $0x20] sm:$0xff]
      %v301 = vld [vmem:[%s265 + $0x28] sm:$0xff]
      %v302 = vld [vmem:[%s265 + $0x30] sm:$0xff]
      %v303 = vld [vmem:[%s265 + $0x38] sm:$0xff]
      %v304 = vld [vmem:[%s265 + $0x40] sm:$0xff]
      %v305 = vld [vmem:[%s265 + $0x48] sm:$0xff]
      %v306 = vld [vmem:[%s265 + $0x50] sm:$0xff]
      %v307 = vld [vmem:[%s265 + $0x58] sm:$0xff]
      %v308 = vld [vmem:[%s265 + $0x60] sm:$0xff]
      %v309 = vld [vmem:[%s265 + $0x68] sm:$0xff]
      %v310 = vld [vmem:[%s265 + $0x70] sm:$0xff]
      %v311 = vld [vmem:[%s265 + $0x78] sm:$0xff]
      %v312 = vpack.c.bf16 %v297, %v296
      %v313 = vpack.c.bf16 %v299, %v298
      %v314 = vpack.c.bf16 %v301, %v300
      %v315 = vpack.c.bf16 %v303, %v302
      %v316 = vpack.c.bf16 %v305, %v304
      %v317 = vpack.c.bf16 %v307, %v306
      %v318 = vpack.c.bf16 %v309, %v308
      %v319 = vpack.c.bf16 %v311, %v310
      %v320 = vld [vmem:[%s270] sm:$0xf]
      %vm321 = vcmask 64512
      %v323 = vsel %vm321, %v312, 0
      %v326 = vsel %vm321, %v313, 0
      %v329 = vsel %vm321, %v314, 0
      %v332 = vsel %vm321, %v315, 0
      %v335 = vsel %vm321, %v316, 0
      %v338 = vsel %vm321, %v317, 0
      %v341 = vsel %vm321, %v318, 0
      %v344 = vsel %vm321, %v319, 0
      %vm346 = vcmask 1043456
      %v348 = vsel %vm346, %v320, 0
      %350 = vmatprep.subr.bf16.mxu0 0
      %351 = vmatpush1.bf16.msra.mxu0 0
      %352 = vmatprep.subr.bf16.mxu0 0
      %353 = vmatpush1.bf16.msra.mxu0 0
      %354 = vmatprep.subr.bf16.mxu0 0
      %355 = vmatpush1.bf16.msra.mxu0 0
      %356 = vmatprep.subr.bf16.mxu0 0
      %357 = vmatpush1.bf16.msra.mxu0 0
      %358 = vmatprep.subr.bf16.mxu0 0
      %359 = vmatpush1.bf16.msra.mxu0 0
      %360 = vmatprep.subr.bf16.mxu0 0
      %361 = vmatpush1.bf16.msra.mxu0 0
      %362 = vmatprep.subr.bf16.mxu0 0
      %363 = vmatpush1.bf16.msra.mxu0 0
      %364 = vmatprep.subr.bf16.mxu0 0
      %365 = vmatpush1.bf16.msra.mxu0 %v348
      %366 = vmatprep.subr.bf16.mxu0 0
      %367 = vmatpush2.bf16.msra.mxu0 0
      %368 = vmatprep.subr.bf16.mxu0 0
      %369 = vmatpush2.bf16.msra.mxu0 0
      %370 = vmatprep.subr.bf16.mxu0 0
      %371 = vmatpush2.bf16.msra.mxu0 0
      %372 = vmatprep.subr.bf16.mxu0 0
      %373 = vmatpush2.bf16.msra.mxu0 0
      %374 = vmatprep.subr.bf16.mxu0 0
      %375 = vmatpush2.bf16.msra.mxu0 0
      %376 = vmatprep.subr.bf16.mxu0 0
      %377 = vmatpush2.bf16.msra.mxu0 0
      %378 = vmatprep.subr.bf16.mxu0 0
      %379 = vmatpush2.bf16.msra.mxu0 0
      %380 = vmatprep.subr.bf16.mxu0 0
      %381 = vmatpush2.bf16.msra.mxu0 0
      %382 = vmatprep.mubr.bf16.mxu0 0
      %383 = vmatmul.mubr.bf16.gmra.mxu0 %v323
      %v384 = vpop.f32.mrf.mxu0
      %v385 = vadd.f32 0.0, %v384
      %v386 = vpop.f32.mrf.mxu0
      %v387 = vpop.f32.mrf.mxu0
      %v388 = vadd.f32 0.0, %v387
      %v389 = vpop.f32.mrf.mxu0
      %390 = vmatprep.mubr.bf16.mxu0 0
      %391 = vmatmul.mubr.bf16.gmra.mxu0 %v326
      %v392 = vpop.f32.mrf.mxu0
      %v393 = vadd.f32 0.0, %v392
      %v394 = vpop.f32.mrf.mxu0
      %v395 = vpop.f32.mrf.mxu0
      %v396 = vadd.f32 0.0, %v395
      %v397 = vpop.f32.mrf.mxu0
      %398 = vmatprep.mubr.bf16.mxu0 0
      %399 = vmatmul.mubr.bf16.gmra.mxu0 %v329
      %v400 = vpop.f32.mrf.mxu0
      %v401 = vadd.f32 0.0, %v400
      %v402 = vpop.f32.mrf.mxu0
      %v403 = vpop.f32.mrf.mxu0
      %v404 = vadd.f32 0.0, %v403
      %v405 = vpop.f32.mrf.mxu0
      %406 = vmatprep.mubr.bf16.mxu0 0
      %407 = vmatmul.mubr.bf16.gmra.mxu0 %v332
      %v408 = vpop.f32.mrf.mxu0
      %v409 = vadd.f32 0.0, %v408
      %v410 = vpop.f32.mrf.mxu0
      %v411 = vpop.f32.mrf.mxu0
      %v412 = vadd.f32 0.0, %v411
      %v413 = vpop.f32.mrf.mxu0
      %414 = vmatprep.mubr.bf16.mxu0 0
      %415 = vmatmul.mubr.bf16.gmra.mxu0 %v335
      %v416 = vpop.f32.mrf.mxu0
      %v417 = vadd.f32 0.0, %v416
      %v418 = vpop.f32.mrf.mxu0
      %v419 = vpop.f32.mrf.mxu0
      %v420 = vadd.f32 0.0, %v419
      %v421 = vpop.f32.mrf.mxu0
      %422 = vmatprep.mubr.bf16.mxu0 0
      %423 = vmatmul.mubr.bf16.gmra.mxu0 %v338
      %v424 = vpop.f32.mrf.mxu0
      %v425 = vadd.f32 0.0, %v424
      %v426 = vpop.f32.mrf.mxu0
      %v427 = vpop.f32.mrf.mxu0
      %v428 = vadd.f32 0.0, %v427
      %v429 = vpop.f32.mrf.mxu0
      %430 = vmatprep.mubr.bf16.mxu0 0
      %431 = vmatmul.mubr.bf16.gmra.mxu0 %v341
      %v432 = vpop.f32.mrf.mxu0
      %v433 = vadd.f32 0.0, %v432
      %v434 = vpop.f32.mrf.mxu0
      %v435 = vpop.f32.mrf.mxu0
      %v436 = vadd.f32 0.0, %v435
      %v437 = vpop.f32.mrf.mxu0
      %438 = vmatprep.mubr.bf16.mxu0 0
      %439 = vmatmul.mubr.bf16.gmra.mxu0 %v344
      %v440 = vpop.f32.mrf.mxu0
      %v441 = vadd.f32 0.0, %v440
      %v442 = vpop.f32.mrf.mxu0
      %v443 = vpop.f32.mrf.mxu0
      %v444 = vadd.f32 0.0, %v443
      %v445 = vpop.f32.mrf.mxu0
      %446 = vdwg.mxu0
      %447 = vst.msk [vmem:[%s283] sm:$0xff] %vm321, %v385
      %448 = vst.msk [vmem:[%s283 + $0x8] sm:$0xff] %vm321, %v388
      %449 = vst.msk [vmem:[%s283 + $0x10] sm:$0xff] %vm321, %v393
      %450 = vst.msk [vmem:[%s283 + $0x18] sm:$0xff] %vm321, %v396
      %451 = vst.msk [vmem:[%s283 + $0x20] sm:$0xff] %vm321, %v401
      %452 = vst.msk [vmem:[%s283 + $0x28] sm:$0xff] %vm321, %v404
      %453 = vst.msk [vmem:[%s283 + $0x30] sm:$0xff] %vm321, %v409
      %454 = vst.msk [vmem:[%s283 + $0x38] sm:$0xff] %vm321, %v412
      %455 = vst.msk [vmem:[%s283 + $0x40] sm:$0xff] %vm321, %v417
      %456 = vst.msk [vmem:[%s283 + $0x48] sm:$0xff] %vm321, %v420
      %457 = vst.msk [vmem:[%s283 + $0x50] sm:$0xff] %vm321, %v425
      %458 = vst.msk [vmem:[%s283 + $0x58] sm:$0xff] %vm321, %v428
      %459 = vst.msk [vmem:[%s283 + $0x60] sm:$0xff] %vm321, %v433
      %460 = vst.msk [vmem:[%s283 + $0x68] sm:$0xff] %vm321, %v436
      %461 = vst.msk [vmem:[%s283 + $0x70] sm:$0xff] %vm321, %v441
      %462 = vst.msk [vmem:[%s283 + $0x78] sm:$0xff] %vm321, %v444
      %v463 = vld [vmem:[%s274] sm:$0xf]
      %v465 = vsel %vm346, %v463, 0
      %467 = vmatprep.subr.bf16.mxu0 0
      %468 = vmatpush1.bf16.msra.mxu0 0
      %469 = vmatprep.subr.bf16.mxu0 0
      %470 = vmatpush1.bf16.msra.mxu0 0
      %471 = vmatprep.subr.bf16.mxu0 0
      %472 = vmatpush1.bf16.msra.mxu0 0
      %473 = vmatprep.subr.bf16.mxu0 0
      %474 = vmatpush1.bf16.msra.mxu0 0
      %475 = vmatprep.subr.bf16.mxu0 0
      %476 = vmatpush1.bf16.msra.mxu0 0
      %477 = vmatprep.subr.bf16.mxu0 0
      %478 = vmatpush1.bf16.msra.mxu0 0
      %479 = vmatprep.subr.bf16.mxu0 0
      %480 = vmatpush1.bf16.msra.mxu0 0
      %481 = vmatprep.subr.bf16.mxu0 0
      %482 = vmatpush1.bf16.msra.mxu0 %v465
      %483 = vmatprep.subr.bf16.mxu0 0
      %484 = vmatpush2.bf16.msra.mxu0 0
      %485 = vmatprep.subr.bf16.mxu0 0
      %486 = vmatpush2.bf16.msra.mxu0 0
      %487 = vmatprep.subr.bf16.mxu0 0
      %488 = vmatpush2.bf16.msra.mxu0 0
      %489 = vmatprep.subr.bf16.mxu0 0
      %490 = vmatpush2.bf16.msra.mxu0 0
      %491 = vmatprep.subr.bf16.mxu0 0
      %492 = vmatpush2.bf16.msra.mxu0 0
      %493 = vmatprep.subr.bf16.mxu0 0
      %494 = vmatpush2.bf16.msra.mxu0 0
      %495 = vmatprep.subr.bf16.mxu0 0
      %496 = vmatpush2.bf16.msra.mxu0 0
      %497 = vmatprep.subr.bf16.mxu0 0
      %498 = vmatpush2.bf16.msra.mxu0 0
      %499 = vmatprep.mubr.bf16.mxu0 0
      %500 = vmatmul.mubr.bf16.gmra.mxu0 %v323
      %v501 = vpop.f32.mrf.mxu0
      %v502 = vadd.f32 0.0, %v501
      %v503 = vpop.f32.mrf.mxu0
      %v504 = vpop.f32.mrf.mxu0
      %v505 = vadd.f32 0.0, %v504
      %v506 = vpop.f32.mrf.mxu0
      %507 = vmatprep.mubr.bf16.mxu0 0
      %508 = vmatmul.mubr.bf16.gmra.mxu0 %v326
      %v509 = vpop.f32.mrf.mxu0
      %v510 = vadd.f32 0.0, %v509
      %v511 = vpop.f32.mrf.mxu0
      %v512 = vpop.f32.mrf.mxu0
      %v513 = vadd.f32 0.0, %v512
      %v514 = vpop.f32.mrf.mxu0
      %515 = vmatprep.mubr.bf16.mxu0 0
      %516 = vmatmul.mubr.bf16.gmra.mxu0 %v329
      %v517 = vpop.f32.mrf.mxu0
      %v518 = vadd.f32 0.0, %v517
      %v519 = vpop.f32.mrf.mxu0
      %v520 = vpop.f32.mrf.mxu0
      %v521 = vadd.f32 0.0, %v520
      %v522 = vpop.f32.mrf.mxu0
      %523 = vmatprep.mubr.bf16.mxu0 0
      %524 = vmatmul.mubr.bf16.gmra.mxu0 %v332
      %v525 = vpop.f32.mrf.mxu0
      %v526 = vadd.f32 0.0, %v525
      %v527 = vpop.f32.mrf.mxu0
      %v528 = vpop.f32.mrf.mxu0
      %v529 = vadd.f32 0.0, %v528
      %v530 = vpop.f32.mrf.mxu0
      %531 = vmatprep.mubr.bf16.mxu0 0
      %532 = vmatmul.mubr.bf16.gmra.mxu0 %v335
      %v533 = vpop.f32.mrf.mxu0
      %v534 = vadd.f32 0.0, %v533
      %v535 = vpop.f32.mrf.mxu0
      %v536 = vpop.f32.mrf.mxu0
      %v537 = vadd.f32 0.0, %v536
      %v538 = vpop.f32.mrf.mxu0
      %539 = vmatprep.mubr.bf16.mxu0 0
      %540 = vmatmul.mubr.bf16.gmra.mxu0 %v338
      %v541 = vpop.f32.mrf.mxu0
      %v542 = vadd.f32 0.0, %v541
      %v543 = vpop.f32.mrf.mxu0
      %v544 = vpop.f32.mrf.mxu0
      %v545 = vadd.f32 0.0, %v544
      %v546 = vpop.f32.mrf.mxu0
      %547 = vmatprep.mubr.bf16.mxu0 0
      %548 = vmatmul.mubr.bf16.gmra.mxu0 %v341
      %v549 = vpop.f32.mrf.mxu0
      %v550 = vadd.f32 0.0, %v549
      %v551 = vpop.f32.mrf.mxu0
      %v552 = vpop.f32.mrf.mxu0
      %v553 = vadd.f32 0.0, %v552
      %v554 = vpop.f32.mrf.mxu0
      %555 = vmatprep.mubr.bf16.mxu0 0
      %556 = vmatmul.mubr.bf16.gmra.mxu0 %v344
      %v557 = vpop.f32.mrf.mxu0
      %v558 = vadd.f32 0.0, %v557
      %v559 = vpop.f32.mrf.mxu0
      %v560 = vpop.f32.mrf.mxu0
      %v561 = vadd.f32 0.0, %v560
      %v562 = vpop.f32.mrf.mxu0
      %563 = vdwg.mxu0
      %vm564 = vcmask 261120
      %565 = vst.msk [vmem:[%s293] sm:$0xff] %vm564, %v502
      %566 = vst.msk [vmem:[%s293 + $0x8] sm:$0xff] %vm564, %v505
      %567 = vst.msk [vmem:[%s293 + $0x10] sm:$0xff] %vm564, %v510
      %568 = vst.msk [vmem:[%s293 + $0x18] sm:$0xff] %vm564, %v513
      %569 = vst.msk [vmem:[%s293 + $0x20] sm:$0xff] %vm564, %v518
      %570 = vst.msk [vmem:[%s293 + $0x28] sm:$0xff] %vm564, %v521
      %571 = vst.msk [vmem:[%s293 + $0x30] sm:$0xff] %vm564, %v526
      %572 = vst.msk [vmem:[%s293 + $0x38] sm:$0xff] %vm564, %v529
      %573 = vst.msk [vmem:[%s293 + $0x40] sm:$0xff] %vm564, %v534
      %574 = vst.msk [vmem:[%s293 + $0x48] sm:$0xff] %vm564, %v537
      %575 = vst.msk [vmem:[%s293 + $0x50] sm:$0xff] %vm564, %v542
      %576 = vst.msk [vmem:[%s293 + $0x58] sm:$0xff] %vm564, %v545
      %577 = vst.msk [vmem:[%s293 + $0x60] sm:$0xff] %vm564, %v550
      %578 = vst.msk [vmem:[%s293 + $0x68] sm:$0xff] %vm564, %v553
      %579 = vst.msk [vmem:[%s293 + $0x70] sm:$0xff] %vm564, %v558
      %580 = vst.msk [vmem:[%s293 + $0x78] sm:$0xff] %vm564, %v561
      %s581 = smul.u32 16, %s21
      %p582 = scmp.lt.s32.totalorder %s20, 3
      %s583 = scalar_select %p582, %s20, 3
      %p584 = scmp.lt.s32.totalorder %s581, 63
      %s585 = scalar_select %p584, %s581, 63
      %s586 = smul.addr %s583, 64
      %s587 = sadd.s32 %s585, %s586
      %s588 = smul.addr %s587, 8
      %s589 = scalar_lea.vmem %s3, %s588
      %s590 = smul.u32 16, %s21
      %p591 = scmp.lt.s32.totalorder %s20, 3
      %s592 = scalar_select %p591, %s20, 3
      %p593 = scmp.lt.s32.totalorder %s590, 63
      %s594 = scalar_select %p593, %s590, 63
      %s595 = smul.addr %s592, 64
      %s596 = sadd.s32 %s594, %s595
      %s597 = smul.addr %s596, 8
      %s598 = scalar_lea.vmem %s4, %s597
      // Predicated region
      $region33: #{ss2d_local_forward.7} parent=31 // pred_check
        %p599 = pneg %p128
      $region34: #{ss2d_local_forward.7} parent=31 // pred_check_branch
        %601 = sbr.rel (%p599) target = $region36
      $region35: #{ss2d_local_forward.7} parent=31 // pred_region
        %s602 = smul.u32 16, %s21
      $region36: #{ss2d_local_forward.7} parent=31 // pred_fallthru
        _
      // Predicated region
      $region37: #{ss2d_local_forward.7} parent=31 // pred_check
        %p603 = pneg %p156
      $region38: #{ss2d_local_forward.7} parent=31 // pred_check_branch
        %605 = sbr.rel (%p603) target = $region40
      $region39: #{ss2d_local_forward.7} parent=31 // pred_region
        %s606 = smul.u32 16, %s21
      $region40: #{ss2d_local_forward.7} parent=31 // pred_fallthru
        _
    $region32: #{ss2d_local_forward.7} parent=5 // pred_fallthru
      _
    %p607 = scmp.le.s32.totalorder 2, %s11
    // Predicated region
    $region41: #{ss2d_local_forward.7} parent=5 // pred_check
      %p608 = pneg %p607
    $region42: #{ss2d_local_forward.7} parent=5 // pred_check_branch
      %610 = sbr.rel (%p608) target = $region44
    $region43: #{ss2d_local_forward.7} parent=5 // pred_region
      %s611 = ssub.s32 %s11, 2
      // Predicated region
      $region45: #{ss2d_local_forward.7} parent=43 // pred_check
        %p612 = pneg %p134
      $region46: #{ss2d_local_forward.7} parent=43 // pred_check_branch
        %614 = sbr.rel (%p612) target = $region48
      $region47: #{ss2d_local_forward.7} parent=43 // pred_region
        %s615 = smul.u32 16, %s23
        %p616 = scmp.lt.s32.totalorder %s22, 3
        %s617 = scalar_select %p616, %s22, 3
        %p618 = scmp.lt.s32.totalorder %s615, 63
        %s619 = scalar_select %p618, %s615, 63
        %s620 = smul.addr %s617, 64
        %s621 = sadd.s32 %s619, %s620
        %s622 = smul.addr %s621, 8
        %s623 = scalar_lea.vmem %s3, %s622
      $region48: #{ss2d_local_forward.7} parent=43 // pred_fallthru
        _
      // Predicated region
      $region49: #{ss2d_local_forward.7} parent=43 // pred_check
        %p624 = pneg %p162
      $region50: #{ss2d_local_forward.7} parent=43 // pred_check_branch
        %626 = sbr.rel (%p624) target = $region52
      $region51: #{ss2d_local_forward.7} parent=43 // pred_region
        %s627 = smul.u32 16, %s23
        %p628 = scmp.lt.s32.totalorder %s22, 3
        %s629 = scalar_select %p628, %s22, 3
        %p630 = scmp.lt.s32.totalorder %s627, 63
        %s631 = scalar_select %p630, %s627, 63
        %s632 = smul.addr %s629, 64
        %s633 = sadd.s32 %s631, %s632
        %s634 = smul.addr %s633, 8
        %s635 = scalar_lea.vmem %s4, %s634
      $region52: #{ss2d_local_forward.7} parent=43 // pred_fallthru
        _
    $region44: #{ss2d_local_forward.7} parent=5 // pred_fallthru
      _
  $region6: #{ss2d_local_forward.7} parent=0 // loop_footer
    %s15 = sadd.s32 1, %s11
  $region7: #{ss2d_local_forward.7} parent=0 // loop_footer_branch
    %10 = sbr.rel target = $region3
  $region8: #{ss2d_local_forward.7} parent=0 // loop_exit
    _

// kernel: ss2d_local_forward.9
$region0: #{ss2d_local_forward.9}
  #allocation0 [shape = 'u32[]', space=smem, size = 0x4, offset = 0x4, fixed_abs, tag = 'smem constant byte address 0x4 - core index']
  #allocation1 [shape = 'u32[144,128]{1,0:T(1,128)}', space=vmem, size = 0x12000, scoped, tag = 'internal scratch']
  %s0 = inlined_call_operand.vmem [shape: f32[512,8], index: 0, kind: input, shape index: {}]
  %s1 = inlined_call_operand.vmem [shape: f32[512,8], index: 1, kind: input, shape index: {}]
  %s2 = inlined_call_operand.vmem [shape: f32[1,8], index: 2, kind: input, shape index: {}]
  %s3 = inlined_call_operand.vmem [shape: f32[1,8], index: 3, kind: input, shape index: {}]
  %s4 = inlined_call_operand.vmem [shape: bf16[8,4], index: 4, kind: input, shape index: {}]
  %s5 = inlined_call_operand.vmem [shape: f32[512,4], index: 5, kind: output, shape index: {}]
  %s6 = sld [smem:[#allocation0]]
  $region53: #{ss2d_local_forward.9} parent=0
    _
  %s8 = ssub.s32 1, %s6
  %s9 = scalar_select 0, %s8, %s6
  loop: start=0, step=1, limit=6
  $region2: #{ss2d_local_forward.9} parent=0 // loop_pre_header
    _
  $region3: #{ss2d_local_forward.9} parent=0 // loop_header
    %s11 = sphi 0, %s15
    %p12 = scmp.ge.s32.totalorder %s11, 6
    %s21 = sphi 0, %s23
    %s24 = sphi 0, %s21
    %s25 = sphi 0, %s24
    %s41 = sphi 0, %s25
    %s47 = sphi 0, %s49
    %s50 = sphi 0, %s47
    %s51 = sphi 0, %s50
    %s67 = sphi 0, %s51
    %s71 = sphi 0, %s71
    %s73 = sphi 0, %s71
    %s74 = sphi 0, %s73
    %s88 = sphi 0, %s74
    %s92 = sphi 0, %s92
    %s94 = sphi 0, %s92
    %s95 = sphi 0, %s94
    %s109 = sphi 0, %s95
    %s113 = sphi 0, %s113
    %s115 = sphi 0, %s113
    %s116 = sphi 0, %s115
    %s130 = sphi 0, %s116
    %s136 = sphi 0, %s138
    %s139 = sphi 0, %s136
    %s140 = sphi 0, %s139
    %s156 = sphi 0, %s140
  $region4: #{ss2d_local_forward.9} parent=0 // loop_header_branch
    %14 = sbr.rel (%p12) target = $region8
  $region5: #{ss2d_local_forward.9} parent=0 // loop_body
    %s16 = ssub.s32 %s11, 1
    %s17 = ssub.s32 %s11, 2
    %s18 = sadd.s32 %s11, 1
    %s19 = ssub.s32 %s11, %s18
    %p20 = scmp.eq.s32.totalorder %s19, 0
    %s22 = sadd.s32 %s21, 1
    %s23 = scalar_select %p20, %s21, %s22
    %p26 = pneg %p20
    %p27 = scmp.eq.s32.totalorder %s11, 3
    %p28 = por %p26, %p27
    %p29 = scmp.ne.s32.totalorder %s21, %s24
    %p30 = scmp.eq.s32.totalorder %s11, 0
    %p31 = por %p29, %p30
    %p32 = scmp.ne.s32.totalorder %s21, %s24
    %p33 = scmp.eq.s32.totalorder %s16, 3
    %p34 = por %p32, %p33
    %p35 = scmp.ne.s32.totalorder %s24, %s25
    %p36 = scmp.eq.s32.totalorder %s16, 0
    %p37 = por %p35, %p36
    %p38 = scmp.ne.s32.totalorder %s24, %s25
    %p39 = scmp.eq.s32.totalorder %s17, 3
    %p40 = por %p38, %p39
    %p42 = scmp.ne.s32.totalorder %s25, %s41
    %p43 = scmp.eq.s32.totalorder %s17, 0
    %p44 = por %p42, %p43
    %s45 = ssub.s32 %s11, %s18
    %p46 = scmp.eq.s32.totalorder %s45, 0
    %s48 = sadd.s32 %s47, 1
    %s49 = scalar_select %p46, %s47, %s48
    %p52 = pneg %p46
    %p53 = scmp.eq.s32.totalorder %s11, 3
    %p54 = por %p52, %p53
    %p55 = scmp.ne.s32.totalorder %s47, %s50
    %p56 = scmp.eq.s32.totalorder %s11, 0
    %p57 = por %p55, %p56
    %p58 = scmp.ne.s32.totalorder %s47, %s50
    %p59 = scmp.eq.s32.totalorder %s16, 3
    %p60 = por %p58, %p59
    %p61 = scmp.ne.s32.totalorder %s50, %s51
    %p62 = scmp.eq.s32.totalorder %s16, 0
    %p63 = por %p61, %p62
    %p64 = scmp.ne.s32.totalorder %s50, %s51
    %p65 = scmp.eq.s32.totalorder %s17, 3
    %p66 = por %p64, %p65
    %p68 = scmp.ne.s32.totalorder %s51, %s67
    %p69 = scmp.eq.s32.totalorder %s17, 0
    %p70 = por %p68, %p69
    %s72 = sadd.s32 %s71, 1
    %p75 = scmp.eq.s32.totalorder %s11, 3
    %p76 = scmp.ne.s32.totalorder %s71, %s73
    %p77 = scmp.eq.s32.totalorder %s11, 0
    %p78 = por %p76, %p77
    %p79 = scmp.ne.s32.totalorder %s71, %s73
    %p80 = scmp.eq.s32.totalorder %s16, 3
    %p81 = por %p79, %p80
    %p82 = scmp.ne.s32.totalorder %s73, %s74
    %p83 = scmp.eq.s32.totalorder %s16, 0
    %p84 = por %p82, %p83
    %p85 = scmp.ne.s32.totalorder %s73, %s74
    %p86 = scmp.eq.s32.totalorder %s17, 3
    %p87 = por %p85, %p86
    %p89 = scmp.ne.s32.totalorder %s74, %s88
    %p90 = scmp.eq.s32.totalorder %s17, 0
    %p91 = por %p89, %p90
    %s93 = sadd.s32 %s92, 1
    %p96 = scmp.eq.s32.totalorder %s11, 3
    %p97 = scmp.ne.s32.totalorder %s92, %s94
    %p98 = scmp.eq.s32.totalorder %s11, 0
    %p99 = por %p97, %p98
    %p100 = scmp.ne.s32.totalorder %s92, %s94
    %p101 = scmp.eq.s32.totalorder %s16, 3
    %p102 = por %p100, %p101
    %p103 = scmp.ne.s32.totalorder %s94, %s95
    %p104 = scmp.eq.s32.totalorder %s16, 0
    %p105 = por %p103, %p104
    %p106 = scmp.ne.s32.totalorder %s94, %s95
    %p107 = scmp.eq.s32.totalorder %s17, 3
    %p108 = por %p106, %p107
    %p110 = scmp.ne.s32.totalorder %s95, %s109
    %p111 = scmp.eq.s32.totalorder %s17, 0
    %p112 = por %p110, %p111
    %s114 = sadd.s32 %s113, 1
    %p117 = scmp.eq.s32.totalorder %s11, 3
    %p118 = scmp.ne.s32.totalorder %s113, %s115
    %p119 = scmp.eq.s32.totalorder %s11, 0
    %p120 = por %p118, %p119
    %p121 = scmp.ne.s32.totalorder %s113, %s115
    %p122 = scmp.eq.s32.totalorder %s16, 3
    %p123 = por %p121, %p122
    %p124 = scmp.ne.s32.totalorder %s115, %s116
    %p125 = scmp.eq.s32.totalorder %s16, 0
    %p126 = por %p124, %p125
    %p127 = scmp.ne.s32.totalorder %s115, %s116
    %p128 = scmp.eq.s32.totalorder %s17, 3
    %p129 = por %p127, %p128
    %p131 = scmp.ne.s32.totalorder %s116, %s130
    %p132 = scmp.eq.s32.totalorder %s17, 0
    %p133 = por %p131, %p132
    %s134 = ssub.s32 %s11, %s18
    %p135 = scmp.eq.s32.totalorder %s134, 0
    %s137 = sadd.s32 %s136, 1
    %s138 = scalar_select %p135, %s136, %s137
    %p141 = pneg %p135
    %p142 = scmp.eq.s32.totalorder %s11, 3
    %p143 = por %p141, %p142
    %p144 = scmp.ne.s32.totalorder %s136, %s139
    %p145 = scmp.eq.s32.totalorder %s11, 0
    %p146 = por %p144, %p145
    %p147 = scmp.ne.s32.totalorder %s136, %s139
    %p148 = scmp.eq.s32.totalorder %s16, 3
    %p149 = por %p147, %p148
    %p150 = scmp.ne.s32.totalorder %s139, %s140
    %p151 = scmp.eq.s32.totalorder %s16, 0
    %p152 = por %p150, %p151
    %p153 = scmp.ne.s32.totalorder %s139, %s140
    %p154 = scmp.eq.s32.totalorder %s17, 3
    %p155 = por %p153, %p154
    %p157 = scmp.ne.s32.totalorder %s140, %s156
    %p158 = scmp.eq.s32.totalorder %s17, 0
    %p159 = por %p157, %p158
    %p160 = scmp.le.s32.totalorder 1, %s11
    %p161 = scmp.lt.s32.totalorder %s11, 5
    %p162 = pnand %p160, %p161
    %p163 = pneg %p162
    // Predicated region
    $region9: #{ss2d_local_forward.9} parent=5 // pred_check
      _
    $region10: #{ss2d_local_forward.9} parent=5 // pred_check_branch
      %165 = sbr.rel (%p162) target = $region12
    $region11: #{ss2d_local_forward.9} parent=5 // pred_region
      %s166 = ssub.s32 %s11, 1
      // Predicated region
      $region13: #{ss2d_local_forward.9} parent=11 // pred_check
        %p167 = pneg %p84
      $region14: #{ss2d_local_forward.9} parent=11 // pred_check_branch
        %169 = sbr.rel (%p167) target = $region16
      $region15: #{ss2d_local_forward.9} parent=11 // pred_region
        _
      $region16: #{ss2d_local_forward.9} parent=11 // pred_fallthru
        _
      // Predicated region
      $region17: #{ss2d_local_forward.9} parent=11 // pred_check
        %p170 = pneg %p105
      $region18: #{ss2d_local_forward.9} parent=11 // pred_check_branch
        %172 = sbr.rel (%p170) target = $region20
      $region19: #{ss2d_local_forward.9} parent=11 // pred_region
        _
      $region20: #{ss2d_local_forward.9} parent=11 // pred_fallthru
        _
      // Predicated region
      $region21: #{ss2d_local_forward.9} parent=11 // pred_check
        %p173 = pneg %p126
      $region22: #{ss2d_local_forward.9} parent=11 // pred_check_branch
        %175 = sbr.rel (%p173) target = $region24
      $region23: #{ss2d_local_forward.9} parent=11 // pred_region
        _
      $region24: #{ss2d_local_forward.9} parent=11 // pred_fallthru
        _
    $region12: #{ss2d_local_forward.9} parent=5 // pred_fallthru
      _
    %p176 = scmp.lt.s32.totalorder %s11, 4
    // Predicated region
    $region25: #{ss2d_local_forward.9} parent=5 // pred_check
      %p177 = pneg %p176
    $region26: #{ss2d_local_forward.9} parent=5 // pred_check_branch
      %179 = sbr.rel (%p177) target = $region28
    $region27: #{ss2d_local_forward.9} parent=5 // pred_region
      // Predicated region
      $region29: #{ss2d_local_forward.9} parent=27 // pred_check
        %p180 = pneg %p31
      $region30: #{ss2d_local_forward.9} parent=27 // pred_check_branch
        %182 = sbr.rel (%p180) target = $region32
      $region31: #{ss2d_local_forward.9} parent=27 // pred_region
        %s183 = smul.u32 16, %s11
        %p184 = scmp.lt.s32.totalorder %s183, 63
        %s185 = scalar_select %p184, %s183, 63
        %s186 = smul.addr %s185, 8
        %s187 = scalar_lea.vmem %s0, %s186
        %s188 = smul.u32 16, %s11
      $region32: #{ss2d_local_forward.9} parent=27 // pred_fallthru
        _
      // Predicated region
      $region33: #{ss2d_local_forward.9} parent=27 // pred_check
        %p189 = pneg %p57
      $region34: #{ss2d_local_forward.9} parent=27 // pred_check_branch
        %191 = sbr.rel (%p189) target = $region36
      $region35: #{ss2d_local_forward.9} parent=27 // pred_region
        %s192 = smul.u32 16, %s11
        %p193 = scmp.lt.s32.totalorder %s192, 63
        %s194 = scalar_select %p193, %s192, 63
        %s195 = smul.addr %s194, 8
        %s196 = scalar_lea.vmem %s1, %s195
        %s197 = smul.u32 16, %s11
      $region36: #{ss2d_local_forward.9} parent=27 // pred_fallthru
        _
    $region28: #{ss2d_local_forward.9} parent=5 // pred_fallthru
      _
    %p198 = scmp.le.s32.totalorder 1, %s11
    %p199 = scmp.lt.s32.totalorder %s11, 5
    %p200 = pnand %p198, %p199
    %p201 = pneg %p200
    // Predicated region
    $region37: #{ss2d_local_forward.9} parent=5 // pred_check
      _
    $region38: #{ss2d_local_forward.9} parent=5 // pred_check_branch
      %203 = sbr.rel (%p200) target = $region40
    $region39: #{ss2d_local_forward.9} parent=5 // pred_region
      %s204 = ssub.s32 %s11, 1
      %s205 = smul.u32 16, %s16
      %p206 = scmp.lt.s32.totalorder %s205, 63
      %s207 = scalar_select %p206, %s205, 63
      %s208 = smul.addr %s207, 8
      %s209 = scalar_lea.vmem %s0, %s208
      %p210 = pneg %p37
      %p211 = pneg %p34
      %s212 = smul.u32 16, %s16
      %p213 = scmp.lt.s32.totalorder %s212, 63
      %s214 = scalar_select %p213, %s212, 63
      %s215 = smul.addr %s214, 8
      %s216 = scalar_lea.vmem %s1, %s215
      %p217 = pneg %p63
      %p218 = pneg %p60
      %p219 = pneg %p84
      %p220 = pneg %p81
      %p221 = pneg %p105
      %p222 = pneg %p102
      %p223 = pneg %p126
      %p224 = pneg %p123
      %p225 = pneg %p152
      %p226 = pneg %p149
      %s227 = smul.u32 16, %s16
      %p228 = scmp.lt.s32.totalorder %s227, 63
      %s229 = scalar_select %p228, %s227, 63
      %s230 = smul.addr %s229, 8
      %s231 = scalar_lea.vmem %s5, %s230
      %s232 = smul.u32 16, %s16
      %p233 = scmp.lt.s32.totalorder %s232, 63
      %s234 = scalar_select %p233, %s232, 63
      %s235 = smul.addr %s234, 8
      %s236 = scalar_lea.vmem %s0, %s235
      %s237 = smul.u32 16, %s16
      %s238 = smul.u32 16, %s16
      %p239 = scmp.lt.s32.totalorder %s238, 63
      %s240 = scalar_select %p239, %s238, 63
      %s241 = smul.addr %s240, 8
      %s242 = scalar_lea.vmem %s1, %s241
      %s243 = smul.u32 16, %s16
      %s244 = smul.u32 16, %s16
      %p245 = scmp.lt.s32.totalorder %s244, 63
      %s246 = scalar_select %p245, %s244, 63
      %s247 = smul.addr %s246, 8
      %s248 = scalar_lea.vmem %s5, %s247
      %s249 = smul.u32 16, %s16
      %v251 = vld [vmem:[%s236] sm:$0xff]
      %v252 = vld [vmem:[%s236 + $0x8] sm:$0xff]
      %v253 = vld [vmem:[%s236 + $0x10] sm:$0xff]
      %v254 = vld [vmem:[%s236 + $0x18] sm:$0xff]
      %v255 = vld [vmem:[%s236 + $0x20] sm:$0xff]
      %v256 = vld [vmem:[%s236 + $0x28] sm:$0xff]
      %v257 = vld [vmem:[%s236 + $0x30] sm:$0xff]
      %v258 = vld [vmem:[%s236 + $0x38] sm:$0xff]
      %v259 = vld [vmem:[%s236 + $0x40] sm:$0xff]
      %v260 = vld [vmem:[%s236 + $0x48] sm:$0xff]
      %v261 = vld [vmem:[%s236 + $0x50] sm:$0xff]
      %v262 = vld [vmem:[%s236 + $0x58] sm:$0xff]
      %v263 = vld [vmem:[%s236 + $0x60] sm:$0xff]
      %v264 = vld [vmem:[%s236 + $0x68] sm:$0xff]
      %v265 = vld [vmem:[%s236 + $0x70] sm:$0xff]
      %v266 = vld [vmem:[%s236 + $0x78] sm:$0xff]
      %vm267 = vcmask 64512
      %v268 = vsel %vm267, %v251, 0.0
      %269 = vadd.xlane.f32.xlu0 %v268
      %v270 = vpop.xlane.xlu0 %269
      %v271 = vsel %vm267, %v252, 0.0
      %272 = vadd.xlane.f32.xlu0 %v271
      %v273 = vpop.xlane.xlu0 %272
      %v274 = vsel %vm267, %v253, 0.0
      %275 = vadd.xlane.f32.xlu0 %v274
      %v276 = vpop.xlane.xlu0 %275
      %v277 = vsel %vm267, %v254, 0.0
      %278 = vadd.xlane.f32.xlu0 %v277
      %v279 = vpop.xlane.xlu0 %278
      %v280 = vsel %vm267, %v255, 0.0
      %281 = vadd.xlane.f32.xlu0 %v280
      %v282 = vpop.xlane.xlu0 %281
      %v283 = vsel %vm267, %v256, 0.0
      %284 = vadd.xlane.f32.xlu0 %v283
      %v285 = vpop.xlane.xlu0 %284
      %v286 = vsel %vm267, %v257, 0.0
      %287 = vadd.xlane.f32.xlu0 %v286
      %v288 = vpop.xlane.xlu0 %287
      %v289 = vsel %vm267, %v258, 0.0
      %290 = vadd.xlane.f32.xlu0 %v289
      %v291 = vpop.xlane.xlu0 %290
      %v292 = vsel %vm267, %v259, 0.0
      %293 = vadd.xlane.f32.xlu0 %v292
      %v294 = vpop.xlane.xlu0 %293
      %v295 = vsel %vm267, %v260, 0.0
      %296 = vadd.xlane.f32.xlu0 %v295
      %v297 = vpop.xlane.xlu0 %296
      %v298 = vsel %vm267, %v261, 0.0
      %299 = vadd.xlane.f32.xlu0 %v298
      %v300 = vpop.xlane.xlu0 %299
      %v301 = vsel %vm267, %v262, 0.0
      %302 = vadd.xlane.f32.xlu0 %v301
      %v303 = vpop.xlane.xlu0 %302
      %v304 = vsel %vm267, %v263, 0.0
      %305 = vadd.xlane.f32.xlu0 %v304
      %v306 = vpop.xlane.xlu0 %305
      %v307 = vsel %vm267, %v264, 0.0
      %308 = vadd.xlane.f32.xlu0 %v307
      %v309 = vpop.xlane.xlu0 %308
      %v310 = vsel %vm267, %v265, 0.0
      %311 = vadd.xlane.f32.xlu0 %v310
      %v312 = vpop.xlane.xlu0 %311
      %v313 = vsel %vm267, %v266, 0.0
      %314 = vadd.xlane.f32.xlu0 %v313
      %v315 = vpop.xlane.xlu0 %314
      %v316 = vrcp.pop 8.0
      %v317 = vmul.f32 %v270, %v316
      %v318 = vmul.f32 %v273, %v316
      %v319 = vmul.f32 %v276, %v316
      %v320 = vmul.f32 %v279, %v316
      %v321 = vmul.f32 %v282, %v316
      %v322 = vmul.f32 %v285, %v316
      %v323 = vmul.f32 %v288, %v316
      %v324 = vmul.f32 %v291, %v316
      %v325 = vmul.f32 %v294, %v316
      %v326 = vmul.f32 %v297, %v316
      %v327 = vmul.f32 %v300, %v316
      %v328 = vmul.f32 %v303, %v316
      %v329 = vmul.f32 %v306, %v316
      %v330 = vmul.f32 %v309, %v316
      %v331 = vmul.f32 %v312, %v316
      %v332 = vmul.f32 %v315, %v316
      %v333 = vsub.f32 %v251, %v317
      %v334 = vsub.f32 %v252, %v318
      %v335 = vsub.f32 %v253, %v319
      %v336 = vsub.f32 %v254, %v320
      %v337 = vsub.f32 %v255, %v321
      %v338 = vsub.f32 %v256, %v322
      %v339 = vsub.f32 %v257, %v323
      %v340 = vsub.f32 %v258, %v324
      %v341 = vsub.f32 %v259, %v325
      %v342 = vsub.f32 %v260, %v326
      %v343 = vsub.f32 %v261, %v327
      %v344 = vsub.f32 %v262, %v328
      %v345 = vsub.f32 %v263, %v329
      %v346 = vsub.f32 %v264, %v330
      %v347 = vsub.f32 %v265, %v331
      %v348 = vsub.f32 %v266, %v332
      %v349 = vmul.f32 %v333, %v333
      %v350 = vmul.f32 %v334, %v334
      %v351 = vmul.f32 %v335, %v335
      %v352 = vmul.f32 %v336, %v336
      %v353 = vmul.f32 %v337, %v337
      %v354 = vmul.f32 %v338, %v338
      %v355 = vmul.f32 %v339, %v339
      %v356 = vmul.f32 %v340, %v340
      %v357 = vmul.f32 %v341, %v341
      %v358 = vmul.f32 %v342, %v342
      %v359 = vmul.f32 %v343, %v343
      %v360 = vmul.f32 %v344, %v344
      %v361 = vmul.f32 %v345, %v345
      %v362 = vmul.f32 %v346, %v346
      %v363 = vmul.f32 %v347, %v347
      %v364 = vmul.f32 %v348, %v348
      %v365 = vsel %vm267, %v349, 0.0
      %366 = vadd.xlane.f32.xlu0 %v365
      %v367 = vpop.xlane.xlu0 %366
      %v368 = vsel %vm267, %v350, 0.0
      %369 = vadd.xlane.f32.xlu0 %v368
      %v370 = vpop.xlane.xlu0 %369
      %v371 = vsel %vm267, %v351, 0.0
      %372 = vadd.xlane.f32.xlu0 %v371
      %v373 = vpop.xlane.xlu0 %372
      %v374 = vsel %vm267, %v352, 0.0
      %375 = vadd.xlane.f32.xlu0 %v374
      %v376 = vpop.xlane.xlu0 %375
      %v377 = vsel %vm267, %v353, 0.0
      %378 = vadd.xlane.f32.xlu0 %v377
      %v379 = vpop.xlane.xlu0 %378
      %v380 = vsel %vm267, %v354, 0.0
      %381 = vadd.xlane.f32.xlu0 %v380
      %v382 = vpop.xlane.xlu0 %381
      %v383 = vsel %vm267, %v355, 0.0
      %384 = vadd.xlane.f32.xlu0 %v383
      %v385 = vpop.xlane.xlu0 %384
      %v386 = vsel %vm267, %v356, 0.0
      %387 = vadd.xlane.f32.xlu0 %v386
      %v388 = vpop.xlane.xlu0 %387
      %v389 = vsel %vm267, %v357, 0.0
      %390 = vadd.xlane.f32.xlu0 %v389
      %v391 = vpop.xlane.xlu0 %390
      %v392 = vsel %vm267, %v358, 0.0
      %393 = vadd.xlane.f32.xlu0 %v392
      %v394 = vpop.xlane.xlu0 %393
      %v395 = vsel %vm267, %v359, 0.0
      %396 = vadd.xlane.f32.xlu0 %v395
      %v397 = vpop.xlane.xlu0 %396
      %v398 = vsel %vm267, %v360, 0.0
      %399 = vadd.xlane.f32.xlu0 %v398
      %v400 = vpop.xlane.xlu0 %399
      %v401 = vsel %vm267, %v361, 0.0
      %402 = vadd.xlane.f32.xlu0 %v401
      %v403 = vpop.xlane.xlu0 %402
      %v404 = vsel %vm267, %v362, 0.0
      %405 = vadd.xlane.f32.xlu0 %v404
      %v406 = vpop.xlane.xlu0 %405
      %v407 = vsel %vm267, %v363, 0.0
      %408 = vadd.xlane.f32.xlu0 %v407
      %v409 = vpop.xlane.xlu0 %408
      %v410 = vsel %vm267, %v364, 0.0
      %411 = vadd.xlane.f32.xlu0 %v410
      %v412 = vpop.xlane.xlu0 %411
      %v413 = vmul.f32 %v367, %v316
      %v414 = vmul.f32 %v370, %v316
      %v415 = vmul.f32 %v373, %v316
      %v416 = vmul.f32 %v376, %v316
      %v417 = vmul.f32 %v379, %v316
      %v418 = vmul.f32 %v382, %v316
      %v419 = vmul.f32 %v385, %v316
      %v420 = vmul.f32 %v388, %v316
      %v421 = vmul.f32 %v391, %v316
      %v422 = vmul.f32 %v394, %v316
      %v423 = vmul.f32 %v397, %v316
      %v424 = vmul.f32 %v400, %v316
      %v425 = vmul.f32 %v403, %v316
      %v426 = vmul.f32 %v406, %v316
      %v427 = vmul.f32 %v409, %v316
      %v428 = vmul.f32 %v412, %v316
      %v429 = vadd.f32 %v413, 1e-05
      %v430 = vadd.f32 %v414, 1e-05
      %v431 = vadd.f32 %v415, 1e-05
      %v432 = vadd.f32 %v416, 1e-05
      %v433 = vadd.f32 %v417, 1e-05
      %v434 = vadd.f32 %v418, 1e-05
      %v435 = vadd.f32 %v419, 1e-05
      %v436 = vadd.f32 %v420, 1e-05
      %v437 = vadd.f32 %v421, 1e-05
      %v438 = vadd.f32 %v422, 1e-05
      %v439 = vadd.f32 %v423, 1e-05
      %v440 = vadd.f32 %v424, 1e-05
      %v441 = vadd.f32 %v425, 1e-05
      %v442 = vadd.f32 %v426, 1e-05
      %v443 = vadd.f32 %v427, 1e-05
      %v444 = vadd.f32 %v428, 1e-05
      %v445 = vrsqrt.pop %v429
      %v446 = vrsqrt.pop %v430
      %v447 = vrsqrt.pop %v431
      %v448 = vrsqrt.pop %v432
      %v449 = vrsqrt.pop %v433
      %v450 = vrsqrt.pop %v434
      %v451 = vrsqrt.pop %v435
      %v452 = vrsqrt.pop %v436
      %v453 = vrsqrt.pop %v437
      %v454 = vrsqrt.pop %v438
      %v455 = vrsqrt.pop %v439
      %v456 = vrsqrt.pop %v440
      %v457 = vrsqrt.pop %v441
      %v458 = vrsqrt.pop %v442
      %v459 = vrsqrt.pop %v443
      %v460 = vrsqrt.pop %v444
      %v461 = vmul.f32 %v333, %v445
      %v462 = vmul.f32 %v334, %v446
      %v463 = vmul.f32 %v335, %v447
      %v464 = vmul.f32 %v336, %v448
      %v465 = vmul.f32 %v337, %v449
      %v466 = vmul.f32 %v338, %v450
      %v467 = vmul.f32 %v339, %v451
      %v468 = vmul.f32 %v340, %v452
      %v469 = vmul.f32 %v341, %v453
      %v470 = vmul.f32 %v342, %v454
      %v471 = vmul.f32 %v343, %v455
      %v472 = vmul.f32 %v344, %v456
      %v473 = vmul.f32 %v345, %v457
      %v474 = vmul.f32 %v346, %v458
      %v475 = vmul.f32 %v347, %v459
      %v476 = vmul.f32 %v348, %v460
      %v477 = vld [vmem:[%s2] sm:$0x1]
      %v479 = vlaneseq
      %v480 = vshrl.u32 %v479, 7
      %v481 = vsub.s32 0, %v480
      %v482 = vrot.slane %v477, %v481
      %v484 = vmul.f32 %v461, %v482
      %v485 = vmul.f32 %v462, %v482
      %v486 = vmul.f32 %v463, %v482
      %v487 = vmul.f32 %v464, %v482
      %v488 = vmul.f32 %v465, %v482
      %v489 = vmul.f32 %v466, %v482
      %v490 = vmul.f32 %v467, %v482
      %v491 = vmul.f32 %v468, %v482
      %v492 = vmul.f32 %v469, %v482
      %v493 = vmul.f32 %v470, %v482
      %v494 = vmul.f32 %v471, %v482
      %v495 = vmul.f32 %v472, %v482
      %v496 = vmul.f32 %v473, %v482
      %v497 = vmul.f32 %v474, %v482
      %v498 = vmul.f32 %v475, %v482
      %v499 = vmul.f32 %v476, %v482
      %v500 = vld [vmem:[%s3] sm:$0x1]
      %v502 = vlaneseq
      %v503 = vshrl.u32 %v502, 7
      %v504 = vsub.s32 0, %v503
      %v505 = vrot.slane %v500, %v504
      %v507 = vadd.f32 %v484, %v505
      %v508 = vadd.f32 %v485, %v505
      %v509 = vadd.f32 %v486, %v505
      %v510 = vadd.f32 %v487, %v505
      %v511 = vadd.f32 %v488, %v505
      %v512 = vadd.f32 %v489, %v505
      %v513 = vadd.f32 %v490, %v505
      %v514 = vadd.f32 %v491, %v505
      %v515 = vadd.f32 %v492, %v505
      %v516 = vadd.f32 %v493, %v505
      %v517 = vadd.f32 %v494, %v505
      %v518 = vadd.f32 %v495, %v505
      %v519 = vadd.f32 %v496, %v505
      %v520 = vadd.f32 %v497, %v505
      %v521 = vadd.f32 %v498, %v505
      %v522 = vadd.f32 %v499, %v505
      %v523 = vld [vmem:[%s242] sm:$0xff]
      %v524 = vld [vmem:[%s242 + $0x8] sm:$0xff]
      %v525 = vld [vmem:[%s242 + $0x10] sm:$0xff]
      %v526 = vld [vmem:[%s242 + $0x18] sm:$0xff]
      %v527 = vld [vmem:[%s242 + $0x20] sm:$0xff]
      %v528 = vld [vmem:[%s242 + $0x28] sm:$0xff]
      %v529 = vld [vmem:[%s242 + $0x30] sm:$0xff]
      %v530 = vld [vmem:[%s242 + $0x38] sm:$0xff]
      %v531 = vld [vmem:[%s242 + $0x40] sm:$0xff]
      %v532 = vld [vmem:[%s242 + $0x48] sm:$0xff]
      %v533 = vld [vmem:[%s242 + $0x50] sm:$0xff]
      %v534 = vld [vmem:[%s242 + $0x58] sm:$0xff]
      %v535 = vld [vmem:[%s242 + $0x60] sm:$0xff]
      %v536 = vld [vmem:[%s242 + $0x68] sm:$0xff]
      %v537 = vld [vmem:[%s242 + $0x70] sm:$0xff]
      %v538 = vld [vmem:[%s242 + $0x78] sm:$0xff]
      %v539 = vxor.u32 %v523, 2147483648
      %v540 = vxor.u32 %v524, 2147483648
      %v541 = vxor.u32 %v525, 2147483648
      %v542 = vxor.u32 %v526, 2147483648
      %v543 = vxor.u32 %v527, 2147483648
      %v544 = vxor.u32 %v528, 2147483648
      %v545 = vxor.u32 %v529, 2147483648
      %v546 = vxor.u32 %v530, 2147483648
      %v547 = vxor.u32 %v531, 2147483648
      %v548 = vxor.u32 %v532, 2147483648
      %v549 = vxor.u32 %v533, 2147483648
      %v550 = vxor.u32 %v534, 2147483648
      %v551 = vxor.u32 %v535, 2147483648
      %v552 = vxor.u32 %v536, 2147483648
      %v553 = vxor.u32 %v537, 2147483648
      %v554 = vxor.u32 %v538, 2147483648
      %v555 = vmul.f32 %v539, 1.442695
      %v556 = vpow.pop %v555
      %v557 = vmul.f32 %v540, 1.442695
      %v558 = vpow.pop %v557
      %v559 = vmul.f32 %v541, 1.442695
      %v560 = vpow.pop %v559
      %v561 = vmul.f32 %v542, 1.442695
      %v562 = vpow.pop %v561
      %v563 = vmul.f32 %v543, 1.442695
      %v564 = vpow.pop %v563
      %v565 = vmul.f32 %v544, 1.442695
      %v566 = vpow.pop %v565
      %v567 = vmul.f32 %v545, 1.442695
      %v568 = vpow.pop %v567
      %v569 = vmul.f32 %v546, 1.442695
      %v570 = vpow.pop %v569
      %v571 = vmul.f32 %v547, 1.442695
      %v572 = vpow.pop %v571
      %v573 = vmul.f32 %v548, 1.442695
      %v574 = vpow.pop %v573
      %v575 = vmul.f32 %v549, 1.442695
      %v576 = vpow.pop %v575
      %v577 = vmul.f32 %v550, 1.442695
      %v578 = vpow.pop %v577
      %v579 = vmul.f32 %v551, 1.442695
      %v580 = vpow.pop %v579
      %v581 = vmul.f32 %v552, 1.442695
      %v582 = vpow.pop %v581
      %v583 = vmul.f32 %v553, 1.442695
      %v584 = vpow.pop %v583
      %v585 = vmul.f32 %v554, 1.442695
      %v586 = vpow.pop %v585
      %v587 = vadd.f32 %v556, 1.0
      %v588 = vadd.f32 %v558, 1.0
      %v589 = vadd.f32 %v560, 1.0
      %v590 = vadd.f32 %v562, 1.0
      %v591 = vadd.f32 %v564, 1.0
      %v592 = vadd.f32 %v566, 1.0
      %v593 = vadd.f32 %v568, 1.0
      %v594 = vadd.f32 %v570, 1.0
      %v595 = vadd.f32 %v572, 1.0
      %v596 = vadd.f32 %v574, 1.0
      %v597 = vadd.f32 %v576, 1.0
      %v598 = vadd.f32 %v578, 1.0
      %v599 = vadd.f32 %v580, 1.0
      %v600 = vadd.f32 %v582, 1.0
      %v601 = vadd.f32 %v584, 1.0
      %v602 = vadd.f32 %v586, 1.0
      %v603 = vrcp.pop %v587
      %v604 = vmul.f32 1.0, %v603
      %v605 = vrcp.pop %v588
      %v606 = vmul.f32 1.0, %v605
      %v607 = vrcp.pop %v589
      %v608 = vmul.f32 1.0, %v607
      %v609 = vrcp.pop %v590
      %v610 = vmul.f32 1.0, %v609
      %v611 = vrcp.pop %v591
      %v612 = vmul.f32 1.0, %v611
      %v613 = vrcp.pop %v592
      %v614 = vmul.f32 1.0, %v613
      %v615 = vrcp.pop %v593
      %v616 = vmul.f32 1.0, %v615
      %v617 = vrcp.pop %v594
      %v618 = vmul.f32 1.0, %v617
      %v619 = vrcp.pop %v595
      %v620 = vmul.f32 1.0, %v619
      %v621 = vrcp.pop %v596
      %v622 = vmul.f32 1.0, %v621
      %v623 = vrcp.pop %v597
      %v624 = vmul.f32 1.0, %v623
      %v625 = vrcp.pop %v598
      %v626 = vmul.f32 1.0, %v625
      %v627 = vrcp.pop %v599
      %v628 = vmul.f32 1.0, %v627
      %v629 = vrcp.pop %v600
      %v630 = vmul.f32 1.0, %v629
      %v631 = vrcp.pop %v601
      %v632 = vmul.f32 1.0, %v631
      %v633 = vrcp.pop %v602
      %v634 = vmul.f32 1.0, %v633
      %v635 = vmul.f32 %v523, %v604
      %v636 = vmul.f32 %v524, %v606
      %v637 = vmul.f32 %v525, %v608
      %v638 = vmul.f32 %v526, %v610
      %v639 = vmul.f32 %v527, %v612
      %v640 = vmul.f32 %v528, %v614
      %v641 = vmul.f32 %v529, %v616
      %v642 = vmul.f32 %v530, %v618
      %v643 = vmul.f32 %v531, %v620
      %v644 = vmul.f32 %v532, %v622
      %v645 = vmul.f32 %v533, %v624
      %v646 = vmul.f32 %v534, %v626
      %v647 = vmul.f32 %v535, %v628
      %v648 = vmul.f32 %v536, %v630
      %v649 = vmul.f32 %v537, %v632
      %v650 = vmul.f32 %v538, %v634
      %v651 = vmul.f32 %v507, %v635
      %v652 = vmul.f32 %v508, %v636
      %v653 = vmul.f32 %v509, %v637
      %v654 = vmul.f32 %v510, %v638
      %v655 = vmul.f32 %v511, %v639
      %v656 = vmul.f32 %v512, %v640
      %v657 = vmul.f32 %v513, %v641
      %v658 = vmul.f32 %v514, %v642
      %v659 = vmul.f32 %v515, %v643
      %v660 = vmul.f32 %v516, %v644
      %v661 = vmul.f32 %v517, %v645
      %v662 = vmul.f32 %v518, %v646
      %v663 = vmul.f32 %v519, %v647
      %v664 = vmul.f32 %v520, %v648
      %v665 = vmul.f32 %v521, %v649
      %v666 = vmul.f32 %v522, %v650
      %v667 = vpack.c.bf16 %v652, %v651
      %v668 = vpack.c.bf16 %v654, %v653
      %v669 = vpack.c.bf16 %v656, %v655
      %v670 = vpack.c.bf16 %v658, %v657
      %v671 = vpack.c.bf16 %v660, %v659
      %v672 = vpack.c.bf16 %v662, %v661
      %v673 = vpack.c.bf16 %v664, %v663
      %v674 = vpack.c.bf16 %v666, %v665
      %v675 = vld [vmem:[%s4] sm:$0xf]
      %v677 = vsel %vm267, %v667, 0
      %v680 = vsel %vm267, %v668, 0
      %v683 = vsel %vm267, %v669, 0
      %v686 = vsel %vm267, %v670, 0
      %v689 = vsel %vm267, %v671, 0
      %v692 = vsel %vm267, %v672, 0
      %v695 = vsel %vm267, %v673, 0
      %v698 = vsel %vm267, %v674, 0
      %vm700 = vcmask 1043456
      %v702 = vsel %vm700, %v675, 0
      %704 = vmatprep.subr.bf16.mxu0 0
      %705 = vmatpush1.bf16.msra.mxu0 0
      %706 = vmatprep.subr.bf16.mxu0 0
      %707 = vmatpush1.bf16.msra.mxu0 0
      %708 = vmatprep.subr.bf16.mxu0 0
      %709 = vmatpush1.bf16.msra.mxu0 0
      %710 = vmatprep.subr.bf16.mxu0 0
      %711 = vmatpush1.bf16.msra.mxu0 0
      %712 = vmatprep.subr.bf16.mxu0 0
      %713 = vmatpush1.bf16.msra.mxu0 0
      %714 = vmatprep.subr.bf16.mxu0 0
      %715 = vmatpush1.bf16.msra.mxu0 0
      %716 = vmatprep.subr.bf16.mxu0 0
      %717 = vmatpush1.bf16.msra.mxu0 0
      %718 = vmatprep.subr.bf16.mxu0 0
      %719 = vmatpush1.bf16.msra.mxu0 %v702
      %720 = vmatprep.subr.bf16.mxu0 0
      %721 = vmatpush2.bf16.msra.mxu0 0
      %722 = vmatprep.subr.bf16.mxu0 0
      %723 = vmatpush2.bf16.msra.mxu0 0
      %724 = vmatprep.subr.bf16.mxu0 0
      %725 = vmatpush2.bf16.msra.mxu0 0
      %726 = vmatprep.subr.bf16.mxu0 0
      %727 = vmatpush2.bf16.msra.mxu0 0
      %728 = vmatprep.subr.bf16.mxu0 0
      %729 = vmatpush2.bf16.msra.mxu0 0
      %730 = vmatprep.subr.bf16.mxu0 0
      %731 = vmatpush2.bf16.msra.mxu0 0
      %732 = vmatprep.subr.bf16.mxu0 0
      %733 = vmatpush2.bf16.msra.mxu0 0
      %734 = vmatprep.subr.bf16.mxu0 0
      %735 = vmatpush2.bf16.msra.mxu0 0
      %736 = vmatprep.mubr.bf16.mxu0 0
      %737 = vmatmul.mubr.bf16.gmra.mxu0 %v677
      %v738 = vpop.f32.mrf.mxu0
      %v739 = vadd.f32 0.0, %v738
      %v740 = vpop.f32.mrf.mxu0
      %v741 = vpop.f32.mrf.mxu0
      %v742 = vadd.f32 0.0, %v741
      %v743 = vpop.f32.mrf.mxu0
      %744 = vmatprep.mubr.bf16.mxu0 0
      %745 = vmatmul.mubr.bf16.gmra.mxu0 %v680
      %v746 = vpop.f32.mrf.mxu0
      %v747 = vadd.f32 0.0, %v746
      %v748 = vpop.f32.mrf.mxu0
      %v749 = vpop.f32.mrf.mxu0
      %v750 = vadd.f32 0.0, %v749
      %v751 = vpop.f32.mrf.mxu0
      %752 = vmatprep.mubr.bf16.mxu0 0
      %753 = vmatmul.mubr.bf16.gmra.mxu0 %v683
      %v754 = vpop.f32.mrf.mxu0
      %v755 = vadd.f32 0.0, %v754
      %v756 = vpop.f32.mrf.mxu0
      %v757 = vpop.f32.mrf.mxu0
      %v758 = vadd.f32 0.0, %v757
      %v759 = vpop.f32.mrf.mxu0
      %760 = vmatprep.mubr.bf16.mxu0 0
      %761 = vmatmul.mubr.bf16.gmra.mxu0 %v686
      %v762 = vpop.f32.mrf.mxu0
      %v763 = vadd.f32 0.0, %v762
      %v764 = vpop.f32.mrf.mxu0
      %v765 = vpop.f32.mrf.mxu0
      %v766 = vadd.f32 0.0, %v765
      %v767 = vpop.f32.mrf.mxu0
      %768 = vmatprep.mubr.bf16.mxu0 0
      %769 = vmatmul.mubr.bf16.gmra.mxu0 %v689
      %v770 = vpop.f32.mrf.mxu0
      %v771 = vadd.f32 0.0, %v770
      %v772 = vpop.f32.mrf.mxu0
      %v773 = vpop.f32.mrf.mxu0
      %v774 = vadd.f32 0.0, %v773
      %v775 = vpop.f32.mrf.mxu0
      %776 = vmatprep.mubr.bf16.mxu0 0
      %777 = vmatmul.mubr.bf16.gmra.mxu0 %v692
      %v778 = vpop.f32.mrf.mxu0
      %v779 = vadd.f32 0.0, %v778
      %v780 = vpop.f32.mrf.mxu0
      %v781 = vpop.f32.mrf.mxu0
      %v782 = vadd.f32 0.0, %v781
      %v783 = vpop.f32.mrf.mxu0
      %784 = vmatprep.mubr.bf16.mxu0 0
      %785 = vmatmul.mubr.bf16.gmra.mxu0 %v695
      %v786 = vpop.f32.mrf.mxu0
      %v787 = vadd.f32 0.0, %v786
      %v788 = vpop.f32.mrf.mxu0
      %v789 = vpop.f32.mrf.mxu0
      %v790 = vadd.f32 0.0, %v789
      %v791 = vpop.f32.mrf.mxu0
      %792 = vmatprep.mubr.bf16.mxu0 0
      %793 = vmatmul.mubr.bf16.gmra.mxu0 %v698
      %v794 = vpop.f32.mrf.mxu0
      %v795 = vadd.f32 0.0, %v794
      %v796 = vpop.f32.mrf.mxu0
      %v797 = vpop.f32.mrf.mxu0
      %v798 = vadd.f32 0.0, %v797
      %v799 = vpop.f32.mrf.mxu0
      %800 = vdwg.mxu0
      %vm801 = vcmask 31744
      %802 = vst.msk [vmem:[%s248] sm:$0xff] %vm801, %v739
      %803 = vst.msk [vmem:[%s248 + $0x8] sm:$0xff] %vm801, %v742
      %804 = vst.msk [vmem:[%s248 + $0x10] sm:$0xff] %vm801, %v747
      %805 = vst.msk [vmem:[%s248 + $0x18] sm:$0xff] %vm801, %v750
      %806 = vst.msk [vmem:[%s248 + $0x20] sm:$0xff] %vm801, %v755
      %807 = vst.msk [vmem:[%s248 + $0x28] sm:$0xff] %vm801, %v758
      %808 = vst.msk [vmem:[%s248 + $0x30] sm:$0xff] %vm801, %v763
      %809 = vst.msk [vmem:[%s248 + $0x38] sm:$0xff] %vm801, %v766
      %810 = vst.msk [vmem:[%s248 + $0x40] sm:$0xff] %vm801, %v771
      %811 = vst.msk [vmem:[%s248 + $0x48] sm:$0xff] %vm801, %v774
      %812 = vst.msk [vmem:[%s248 + $0x50] sm:$0xff] %vm801, %v779
      %813 = vst.msk [vmem:[%s248 + $0x58] sm:$0xff] %vm801, %v782
      %814 = vst.msk [vmem:[%s248 + $0x60] sm:$0xff] %vm801, %v787
      %815 = vst.msk [vmem:[%s248 + $0x68] sm:$0xff] %vm801, %v790
      %816 = vst.msk [vmem:[%s248 + $0x70] sm:$0xff] %vm801, %v795
      %817 = vst.msk [vmem:[%s248 + $0x78] sm:$0xff] %vm801, %v798
      %s818 = smul.u32 16, %s16
      %p819 = scmp.lt.s32.totalorder %s818, 63
      %s820 = scalar_select %p819, %s818, 63
      %s821 = smul.addr %s820, 8
      %s822 = scalar_lea.vmem %s5, %s821
      // Predicated region
      $region41: #{ss2d_local_forward.9} parent=39 // pred_check
        %p823 = pneg %p149
      $region42: #{ss2d_local_forward.9} parent=39 // pred_check_branch
        %825 = sbr.rel (%p823) target = $region44
      $region43: #{ss2d_local_forward.9} parent=39 // pred_region
        %s826 = smul.u32 16, %s16
      $region44: #{ss2d_local_forward.9} parent=39 // pred_fallthru
        _
    $region40: #{ss2d_local_forward.9} parent=5 // pred_fallthru
      _
    %p827 = scmp.le.s32.totalorder 2, %s11
    // Predicated region
    $region45: #{ss2d_local_forward.9} parent=5 // pred_check
      %p828 = pneg %p827
    $region46: #{ss2d_local_forward.9} parent=5 // pred_check_branch
      %830 = sbr.rel (%p828) target = $region48
    $region47: #{ss2d_local_forward.9} parent=5 // pred_region
      %s831 = ssub.s32 %s11, 2
      // Predicated region
      $region49: #{ss2d_local_forward.9} parent=47 // pred_check
        %p832 = pneg %p155
      $region50: #{ss2d_local_forward.9} parent=47 // pred_check_branch
        %834 = sbr.rel (%p832) target = $region52
      $region51: #{ss2d_local_forward.9} parent=47 // pred_region
        %s835 = smul.u32 16, %s17
        %p836 = scmp.lt.s32.totalorder %s835, 63
        %s837 = scalar_select %p836, %s835, 63
        %s838 = smul.addr %s837, 8
        %s839 = scalar_lea.vmem %s5, %s838
      $region52: #{ss2d_local_forward.9} parent=47 // pred_fallthru
        _
    $region48: #{ss2d_local_forward.9} parent=5 // pred_fallthru
      _
  $region6: #{ss2d_local_forward.9} parent=0 // loop_footer
    %s15 = sadd.s32 1, %s11
  $region7: #{ss2d_local_forward.9} parent=0 // loop_footer_branch
    %10 = sbr.rel target = $region3
  $region8: #{ss2d_local_forward.9} parent=0 // loop_exit
    _

// kernel: ss2d_local_forward.8
$region0: #{ss2d_local_forward.8}
  #allocation0 [shape = 'u32[]', space=smem, size = 0x4, offset = 0x4, fixed_abs, tag = 'smem constant byte address 0x4 - core index']
  #allocation1 [shape = 'u32[144,128]{1,0:T(1,128)}', space=vmem, size = 0x12000, scoped, tag = 'internal scratch']
  #allocation2 [shape = 'f32[16,8]{1,0:T(8,128)}', space=vmem, size = 0x2000, scoped, tag = 'scratch operand']
  #allocation3 [shape = 'f32[128,8]{1,0:T(8,128)}', space=vmem, size = 0x10000, scoped, tag = 'scratch operand']
  %s0 = inlined_call_operand.vmem [shape: f32[4,2,256,8], index: 0, kind: input, shape index: {}]
  %s1 = inlined_call_operand.vmem [shape: f32[4,2,256,8], index: 1, kind: input, shape index: {}]
  %s2 = inlined_call_operand.vmem [shape: f32[4,2,256,16,2], index: 2, kind: input, shape index: {}]
  %s3 = inlined_call_operand.vmem [shape: f32[4,16,8], index: 3, kind: input, shape index: {}]
  %s4 = inlined_call_operand.vmem [shape: f32[4,1,8], index: 4, kind: input, shape index: {}]
  %s5 = inlined_call_operand.vmem [shape: f32[4,1,8], index: 5, kind: input, shape index: {}]
  %s6 = inlined_call_operand.vmem [shape: f32[4,2,256,8], index: 6, kind: output, shape index: {}]
  %s7 = sld [smem:[#allocation0]]
  $region68: #{ss2d_local_forward.8} parent=0
    _
  %s9 = ssub.s32 1, %s7
  %s10 = scalar_select 0, %s9, %s7
  loop: start=0, step=1, limit=18
  $region2: #{ss2d_local_forward.8} parent=0 // loop_pre_header
    _
  $region3: #{ss2d_local_forward.8} parent=0 // loop_header
    %s12 = sphi 0, %s16
    %p13 = scmp.ge.s32.totalorder %s12, 18
    %s19 = sphi 0, %s38
    %s20 = sphi 0, %s34
    %s21 = sphi 0, %s30
    %s22 = sphi 0, %s19
    %s23 = sphi 0, %s20
    %s24 = sphi 0, %s21
    %s25 = sphi 0, %s22
    %s26 = sphi 0, %s23
    %s27 = sphi 0, %s24
    %s45 = sphi 0, %s47
    %s48 = sphi 0, %s45
    %s49 = sphi 0, %s48
    %s65 = sphi 0, %s49
    %s75 = sphi 0, %s77
    %s78 = sphi 0, %s75
    %s79 = sphi 0, %s78
    %s95 = sphi 0, %s79
    %s105 = sphi 0, %s107
    %s108 = sphi 0, %s105
    %s109 = sphi 0, %s108
    %s125 = sphi 0, %s109
    %s131 = sphi 0, %s133
    %s134 = sphi 0, %s131
    %s135 = sphi 0, %s134
    %s151 = sphi 0, %s135
    %s157 = sphi 0, %s159
    %s160 = sphi 0, %s157
    %s161 = sphi 0, %s160
    %s177 = sphi 0, %s161
    %s183 = sphi 0, %s185
    %s186 = sphi 0, %s183
    %s187 = sphi 0, %s186
    %s203 = sphi 0, %s187
    %s213 = sphi 0, %s215
    %s216 = sphi 0, %s213
    %s217 = sphi 0, %s216
    %s233 = sphi 0, %s217
  $region4: #{ss2d_local_forward.8} parent=0 // loop_header_branch
    %15 = sbr.rel (%p13) target = $region8
  $region5: #{ss2d_local_forward.8} parent=0 // loop_body
    %s17 = ssub.s32 %s12, 1
    %s18 = ssub.s32 %s12, 2
    %s28 = sadd.s32 1, %s21
    %p29 = scmp.ge.s32.totalorder %s28, 2
    %s30 = scalar_select %p29, 0, %s28
    %s31 = sadd.s32 1, %s20
    %s32 = scalar_select %p29, %s31, %s20
    %p33 = scmp.ge.s32.totalorder %s32, 2
    %s34 = scalar_select %p33, 0, %s32
    %s35 = sadd.s32 1, %s19
    %s36 = scalar_select %p33, %s35, %s19
    %p37 = scmp.ge.s32.totalorder %s36, 4
    %s38 = scalar_select %p37, 0, %s36
    %s39 = ssub.s32 %s19, %s38
    %s40 = ssub.s32 %s20, %s34
    %s41 = sor.u32 %s39, %s40
    %s42 = ssub.s32 %s21, %s30
    %s43 = sor.u32 %s41, %s42
    %p44 = scmp.eq.s32.totalorder %s43, 0
    %s46 = sadd.s32 %s45, 1
    %s47 = scalar_select %p44, %s45, %s46
    %p50 = pneg %p44
    %p51 = scmp.eq.s32.totalorder %s12, 15
    %p52 = por %p50, %p51
    %p53 = scmp.ne.s32.totalorder %s45, %s48
    %p54 = scmp.eq.s32.totalorder %s12, 0
    %p55 = por %p53, %p54
    %p56 = scmp.ne.s32.totalorder %s45, %s48
    %p57 = scmp.eq.s32.totalorder %s17, 15
    %p58 = por %p56, %p57
    %p59 = scmp.ne.s32.totalorder %s48, %s49
    %p60 = scmp.eq.s32.totalorder %s17, 0
    %p61 = por %p59, %p60
    %p62 = scmp.ne.s32.totalorder %s48, %s49
    %p63 = scmp.eq.s32.totalorder %s18, 15
    %p64 = por %p62, %p63
    %p66 = scmp.ne.s32.totalorder %s49, %s65
    %p67 = scmp.eq.s32.totalorder %s18, 0
    %p68 = por %p66, %p67
    %s69 = ssub.s32 %s19, %s38
    %s70 = ssub.s32 %s20, %s34
    %s71 = sor.u32 %s69, %s70
    %s72 = ssub.s32 %s21, %s30
    %s73 = sor.u32 %s71, %s72
    %p74 = scmp.eq.s32.totalorder %s73, 0
    %s76 = sadd.s32 %s75, 1
    %s77 = scalar_select %p74, %s75, %s76
    %p80 = pneg %p74
    %p81 = scmp.eq.s32.totalorder %s12, 15
    %p82 = por %p80, %p81
    %p83 = scmp.ne.s32.totalorder %s75, %s78
    %p84 = scmp.eq.s32.totalorder %s12, 0
    %p85 = por %p83, %p84
    %p86 = scmp.ne.s32.totalorder %s75, %s78
    %p87 = scmp.eq.s32.totalorder %s17, 15
    %p88 = por %p86, %p87
    %p89 = scmp.ne.s32.totalorder %s78, %s79
    %p90 = scmp.eq.s32.totalorder %s17, 0
    %p91 = por %p89, %p90
    %p92 = scmp.ne.s32.totalorder %s78, %s79
    %p93 = scmp.eq.s32.totalorder %s18, 15
    %p94 = por %p92, %p93
    %p96 = scmp.ne.s32.totalorder %s79, %s95
    %p97 = scmp.eq.s32.totalorder %s18, 0
    %p98 = por %p96, %p97
    %s99 = ssub.s32 %s19, %s38
    %s100 = ssub.s32 %s20, %s34
    %s101 = sor.u32 %s99, %s100
    %s102 = ssub.s32 %s21, %s30
    %s103 = sor.u32 %s101, %s102
    %p104 = scmp.eq.s32.totalorder %s103, 0
    %s106 = sadd.s32 %s105, 1
    %s107 = scalar_select %p104, %s105, %s106
    %p110 = pneg %p104
    %p111 = scmp.eq.s32.totalorder %s12, 15
    %p112 = por %p110, %p111
    %p113 = scmp.ne.s32.totalorder %s105, %s108
    %p114 = scmp.eq.s32.totalorder %s12, 0
    %p115 = por %p113, %p114
    %p116 = scmp.ne.s32.totalorder %s105, %s108
    %p117 = scmp.eq.s32.totalorder %s17, 15
    %p118 = por %p116, %p117
    %p119 = scmp.ne.s32.totalorder %s108, %s109
    %p120 = scmp.eq.s32.totalorder %s17, 0
    %p121 = por %p119, %p120
    %p122 = scmp.ne.s32.totalorder %s108, %s109
    %p123 = scmp.eq.s32.totalorder %s18, 15
    %p124 = por %p122, %p123
    %p126 = scmp.ne.s32.totalorder %s109, %s125
    %p127 = scmp.eq.s32.totalorder %s18, 0
    %p128 = por %p126, %p127
    %s129 = ssub.s32 %s19, %s38
    %p130 = scmp.eq.s32.totalorder %s129, 0
    %s132 = sadd.s32 %s131, 1
    %s133 = scalar_select %p130, %s131, %s132
    %p136 = pneg %p130
    %p137 = scmp.eq.s32.totalorder %s12, 15
    %p138 = por %p136, %p137
    %p139 = scmp.ne.s32.totalorder %s131, %s134
    %p140 = scmp.eq.s32.totalorder %s12, 0
    %p141 = por %p139, %p140
    %p142 = scmp.ne.s32.totalorder %s131, %s134
    %p143 = scmp.eq.s32.totalorder %s17, 15
    %p144 = por %p142, %p143
    %p145 = scmp.ne.s32.totalorder %s134, %s135
    %p146 = scmp.eq.s32.totalorder %s17, 0
    %p147 = por %p145, %p146
    %p148 = scmp.ne.s32.totalorder %s134, %s135
    %p149 = scmp.eq.s32.totalorder %s18, 15
    %p150 = por %p148, %p149
    %p152 = scmp.ne.s32.totalorder %s135, %s151
    %p153 = scmp.eq.s32.totalorder %s18, 0
    %p154 = por %p152, %p153
    %s155 = ssub.s32 %s19, %s38
    %p156 = scmp.eq.s32.totalorder %s155, 0
    %s158 = sadd.s32 %s157, 1
    %s159 = scalar_select %p156, %s157, %s158
    %p162 = pneg %p156
    %p163 = scmp.eq.s32.totalorder %s12, 15
    %p164 = por %p162, %p163
    %p165 = scmp.ne.s32.totalorder %s157, %s160
    %p166 = scmp.eq.s32.totalorder %s12, 0
    %p167 = por %p165, %p166
    %p168 = scmp.ne.s32.totalorder %s157, %s160
    %p169 = scmp.eq.s32.totalorder %s17, 15
    %p170 = por %p168, %p169
    %p171 = scmp.ne.s32.totalorder %s160, %s161
    %p172 = scmp.eq.s32.totalorder %s17, 0
    %p173 = por %p171, %p172
    %p174 = scmp.ne.s32.totalorder %s160, %s161
    %p175 = scmp.eq.s32.totalorder %s18, 15
    %p176 = por %p174, %p175
    %p178 = scmp.ne.s32.totalorder %s161, %s177
    %p179 = scmp.eq.s32.totalorder %s18, 0
    %p180 = por %p178, %p179
    %s181 = ssub.s32 %s19, %s38
    %p182 = scmp.eq.s32.totalorder %s181, 0
    %s184 = sadd.s32 %s183, 1
    %s185 = scalar_select %p182, %s183, %s184
    %p188 = pneg %p182
    %p189 = scmp.eq.s32.totalorder %s12, 15
    %p190 = por %p188, %p189
    %p191 = scmp.ne.s32.totalorder %s183, %s186
    %p192 = scmp.eq.s32.totalorder %s12, 0
    %p193 = por %p191, %p192
    %p194 = scmp.ne.s32.totalorder %s183, %s186
    %p195 = scmp.eq.s32.totalorder %s17, 15
    %p196 = por %p194, %p195
    %p197 = scmp.ne.s32.totalorder %s186, %s187
    %p198 = scmp.eq.s32.totalorder %s17, 0
    %p199 = por %p197, %p198
    %p200 = scmp.ne.s32.totalorder %s186, %s187
    %p201 = scmp.eq.s32.totalorder %s18, 15
    %p202 = por %p200, %p201
    %p204 = scmp.ne.s32.totalorder %s187, %s203
    %p205 = scmp.eq.s32.totalorder %s18, 0
    %p206 = por %p204, %p205
    %s207 = ssub.s32 %s19, %s38
    %s208 = ssub.s32 %s20, %s34
    %s209 = sor.u32 %s207, %s208
    %s210 = ssub.s32 %s21, %s30
    %s211 = sor.u32 %s209, %s210
    %p212 = scmp.eq.s32.totalorder %s211, 0
    %s214 = sadd.s32 %s213, 1
    %s215 = scalar_select %p212, %s213, %s214
    %p218 = pneg %p212
    %p219 = scmp.eq.s32.totalorder %s12, 15
    %p220 = por %p218, %p219
    %p221 = scmp.ne.s32.totalorder %s213, %s216
    %p222 = scmp.eq.s32.totalorder %s12, 0
    %p223 = por %p221, %p222
    %p224 = scmp.ne.s32.totalorder %s213, %s216
    %p225 = scmp.eq.s32.totalorder %s17, 15
    %p226 = por %p224, %p225
    %p227 = scmp.ne.s32.totalorder %s216, %s217
    %p228 = scmp.eq.s32.totalorder %s17, 0
    %p229 = por %p227, %p228
    %p230 = scmp.ne.s32.totalorder %s216, %s217
    %p231 = scmp.eq.s32.totalorder %s18, 15
    %p232 = por %p230, %p231
    %p234 = scmp.ne.s32.totalorder %s217, %s233
    %p235 = scmp.eq.s32.totalorder %s18, 0
    %p236 = por %p234, %p235
    %p237 = scmp.le.s32.totalorder 1, %s12
    %p238 = scmp.lt.s32.totalorder %s12, 17
    %p239 = pnand %p237, %p238
    %p240 = pneg %p239
    // Predicated region
    $region9: #{ss2d_local_forward.8} parent=5 // pred_check
      _
    $region10: #{ss2d_local_forward.8} parent=5 // pred_check_branch
      %242 = sbr.rel (%p239) target = $region12
    $region11: #{ss2d_local_forward.8} parent=5 // pred_region
      %s243 = ssub.s32 %s12, 1
    $region12: #{ss2d_local_forward.8} parent=5 // pred_fallthru
      _
    %p244 = scmp.lt.s32.totalorder %s12, 16
    // Predicated region
    $region13: #{ss2d_local_forward.8} parent=5 // pred_check
      %p245 = pneg %p244
    $region14: #{ss2d_local_forward.8} parent=5 // pred_check_branch
      %247 = sbr.rel (%p245) target = $region16
    $region15: #{ss2d_local_forward.8} parent=5 // pred_region
      // Predicated region
      $region17: #{ss2d_local_forward.8} parent=15 // pred_check
        %p248 = pneg %p55
      $region18: #{ss2d_local_forward.8} parent=15 // pred_check_branch
        %250 = sbr.rel (%p248) target = $region20
      $region19: #{ss2d_local_forward.8} parent=15 // pred_region
        %s251 = smul.u32 16, %s21
        %p252 = scmp.lt.s32.totalorder %s19, 3
        %s253 = scalar_select %p252, %s19, 3
        %p254 = scmp.lt.s32.totalorder %s20, 1
        %s255 = scalar_select %p254, %s20, 1
        %p256 = scmp.lt.s32.totalorder %s251, 31
        %s257 = scalar_select %p256, %s251, 31
        %s258 = smul.addr %s255, 32
        %s259 = sadd.s32 %s257, %s258
        %s260 = smul.addr %s253, 64
        %s261 = sadd.s32 %s259, %s260
        %s262 = smul.addr %s261, 8
        %s263 = scalar_lea.vmem %s0, %s262
        %s264 = smul.u32 16, %s21
      $region20: #{ss2d_local_forward.8} parent=15 // pred_fallthru
        _
      // Predicated region
      $region21: #{ss2d_local_forward.8} parent=15 // pred_check
        %p265 = pneg %p85
      $region22: #{ss2d_local_forward.8} parent=15 // pred_check_branch
        %267 = sbr.rel (%p265) target = $region24
      $region23: #{ss2d_local_forward.8} parent=15 // pred_region
        %s268 = smul.u32 16, %s21
        %p269 = scmp.lt.s32.totalorder %s19, 3
        %s270 = scalar_select %p269, %s19, 3
        %p271 = scmp.lt.s32.totalorder %s20, 1
        %s272 = scalar_select %p271, %s20, 1
        %p273 = scmp.lt.s32.totalorder %s268, 31
        %s274 = scalar_select %p273, %s268, 31
        %s275 = smul.addr %s272, 32
        %s276 = sadd.s32 %s274, %s275
        %s277 = smul.addr %s270, 64
        %s278 = sadd.s32 %s276, %s277
        %s279 = smul.addr %s278, 8
        %s280 = scalar_lea.vmem %s1, %s279
        %s281 = smul.u32 16, %s21
      $region24: #{ss2d_local_forward.8} parent=15 // pred_fallthru
        _
      // Predicated region
      $region25: #{ss2d_local_forward.8} parent=15 // pred_check
        %p282 = pneg %p115
      $region26: #{ss2d_local_forward.8} parent=15 // pred_check_branch
        %284 = sbr.rel (%p282) target = $region28
      $region27: #{ss2d_local_forward.8} parent=15 // pred_region
        %s285 = smul.u32 128, %s21
        %p286 = scmp.lt.s32.totalorder %s19, 3
        %s287 = scalar_select %p286, %s19, 3
        %p288 = scmp.lt.s32.totalorder %s20, 1
        %s289 = scalar_select %p288, %s20, 1
        %p290 = scmp.lt.s32.totalorder %s285, 255
        %s291 = scalar_select %p290, %s285, 255
        %s292 = smul.addr %s291, 2
        %s293 = smul.addr %s289, 512
        %s294 = sadd.s32 %s292, %s293
        %s295 = smul.addr %s287, 1024
        %s296 = sadd.s32 %s294, %s295
        %s297 = smul.addr %s296, 8
        %s298 = scalar_lea.vmem %s2, %s297
        %s299 = smul.u32 128, %s21
      $region28: #{ss2d_local_forward.8} parent=15 // pred_fallthru
        _
      // Predicated region
      $region29: #{ss2d_local_forward.8} parent=15 // pred_check
        %p300 = pneg %p141
      $region30: #{ss2d_local_forward.8} parent=15 // pred_check_branch
        %302 = sbr.rel (%p300) target = $region32
      $region31: #{ss2d_local_forward.8} parent=15 // pred_region
        %p303 = scmp.lt.s32.totalorder %s19, 3
        %s304 = scalar_select %p303, %s19, 3
        %s305 = smul.addr %s304, 2
        %s306 = smul.addr %s305, 8
        %s307 = scalar_lea.vmem %s3, %s306
      $region32: #{ss2d_local_forward.8} parent=15 // pred_fallthru
        _
      // Predicated region
      $region33: #{ss2d_local_forward.8} parent=15 // pred_check
        %p308 = pneg %p167
      $region34: #{ss2d_local_forward.8} parent=15 // pred_check_branch
        %310 = sbr.rel (%p308) target = $region36
      $region35: #{ss2d_local_forward.8} parent=15 // pred_region
        %p311 = scmp.lt.s32.totalorder %s19, 3
        %s312 = scalar_select %p311, %s19, 3
        %s313 = scalar_lea.vmem %s4, %s312
      $region36: #{ss2d_local_forward.8} parent=15 // pred_fallthru
        _
      // Predicated region
      $region37: #{ss2d_local_forward.8} parent=15 // pred_check
        %p314 = pneg %p193
      $region38: #{ss2d_local_forward.8} parent=15 // pred_check_branch
        %316 = sbr.rel (%p314) target = $region40
      $region39: #{ss2d_local_forward.8} parent=15 // pred_region
        %p317 = scmp.lt.s32.totalorder %s19, 3
        %s318 = scalar_select %p317, %s19, 3
        %s319 = scalar_lea.vmem %s5, %s318
      $region40: #{ss2d_local_forward.8} parent=15 // pred_fallthru
        _
    $region16: #{ss2d_local_forward.8} parent=5 // pred_fallthru
      _
    %p320 = scmp.le.s32.totalorder 1, %s12
    %p321 = scmp.lt.s32.totalorder %s12, 17
    %p322 = pnand %p320, %p321
    %p323 = pneg %p322
    // Predicated region
    $region41: #{ss2d_local_forward.8} parent=5 // pred_check
      _
    $region42: #{ss2d_local_forward.8} parent=5 // pred_check_branch
      %325 = sbr.rel (%p322) target = $region44
    $region43: #{ss2d_local_forward.8} parent=5 // pred_region
      %s326 = ssub.s32 %s12, 1
      %s327 = smul.u32 16, %s24
      %p328 = scmp.lt.s32.totalorder %s22, 3
      %s329 = scalar_select %p328, %s22, 3
      %p330 = scmp.lt.s32.totalorder %s23, 1
      %s331 = scalar_select %p330, %s23, 1
      %p332 = scmp.lt.s32.totalorder %s327, 31
      %s333 = scalar_select %p332, %s327, 31
      %s334 = smul.addr %s331, 32
      %s335 = sadd.s32 %s333, %s334
      %s336 = smul.addr %s329, 64
      %s337 = sadd.s32 %s335, %s336
      %s338 = smul.addr %s337, 8
      %s339 = scalar_lea.vmem %s0, %s338
      %p340 = pneg %p61
      %p341 = pneg %p58
      %s342 = smul.u32 16, %s24
      %p343 = scmp.lt.s32.totalorder %s22, 3
      %s344 = scalar_select %p343, %s22, 3
      %p345 = scmp.lt.s32.totalorder %s23, 1
      %s346 = scalar_select %p345, %s23, 1
      %p347 = scmp.lt.s32.totalorder %s342, 31
      %s348 = scalar_select %p347, %s342, 31
      %s349 = smul.addr %s346, 32
      %s350 = sadd.s32 %s348, %s349
      %s351 = smul.addr %s344, 64
      %s352 = sadd.s32 %s350, %s351
      %s353 = smul.addr %s352, 8
      %s354 = scalar_lea.vmem %s1, %s353
      %p355 = pneg %p91
      %p356 = pneg %p88
      %s357 = smul.u32 128, %s24
      %p358 = scmp.lt.s32.totalorder %s22, 3
      %s359 = scalar_select %p358, %s22, 3
      %p360 = scmp.lt.s32.totalorder %s23, 1
      %s361 = scalar_select %p360, %s23, 1
      %p362 = scmp.lt.s32.totalorder %s357, 255
      %s363 = scalar_select %p362, %s357, 255
      %s364 = smul.addr %s363, 2
      %s365 = smul.addr %s361, 512
      %s366 = sadd.s32 %s364, %s365
      %s367 = smul.addr %s359, 1024
      %s368 = sadd.s32 %s366, %s367
      %s369 = smul.addr %s368, 8
      %s370 = scalar_lea.vmem %s2, %s369
      %p371 = pneg %p121
      %p372 = pneg %p118
      %p373 = scmp.lt.s32.totalorder %s22, 3
      %s374 = scalar_select %p373, %s22, 3
      %s375 = smul.addr %s374, 2
      %s376 = smul.addr %s375, 8
      %s377 = scalar_lea.vmem %s3, %s376
      %p378 = pneg %p147
      %p379 = pneg %p144
      %p380 = scmp.lt.s32.totalorder %s22, 3
      %s381 = scalar_select %p380, %s22, 3
      %s382 = scalar_lea.vmem %s4, %s381
      %p383 = pneg %p173
      %p384 = pneg %p170
      %p385 = scmp.lt.s32.totalorder %s22, 3
      %s386 = scalar_select %p385, %s22, 3
      %s387 = scalar_lea.vmem %s5, %s386
      %p388 = pneg %p199
      %p389 = pneg %p196
      %p390 = pneg %p229
      %p391 = pneg %p226
      %s392 = smul.u32 16, %s24
      %p393 = scmp.lt.s32.totalorder %s22, 3
      %s394 = scalar_select %p393, %s22, 3
      %p395 = scmp.lt.s32.totalorder %s23, 1
      %s396 = scalar_select %p395, %s23, 1
      %p397 = scmp.lt.s32.totalorder %s392, 31
      %s398 = scalar_select %p397, %s392, 31
      %s399 = smul.addr %s396, 32
      %s400 = sadd.s32 %s398, %s399
      %s401 = smul.addr %s394, 64
      %s402 = sadd.s32 %s400, %s401
      %s403 = smul.addr %s402, 8
      %s404 = scalar_lea.vmem %s6, %s403
      %s405 = smul.u32 16, %s24
      %p406 = scmp.lt.s32.totalorder %s22, 3
      %s407 = scalar_select %p406, %s22, 3
      %p408 = scmp.lt.s32.totalorder %s23, 1
      %s409 = scalar_select %p408, %s23, 1
      %p410 = scmp.lt.s32.totalorder %s405, 31
      %s411 = scalar_select %p410, %s405, 31
      %s412 = smul.addr %s409, 32
      %s413 = sadd.s32 %s411, %s412
      %s414 = smul.addr %s407, 64
      %s415 = sadd.s32 %s413, %s414
      %s416 = smul.addr %s415, 8
      %s417 = scalar_lea.vmem %s0, %s416
      %s418 = smul.u32 16, %s24
      %s419 = smul.u32 16, %s24
      %p420 = scmp.lt.s32.totalorder %s22, 3
      %s421 = scalar_select %p420, %s22, 3
      %p422 = scmp.lt.s32.totalorder %s23, 1
      %s423 = scalar_select %p422, %s23, 1
      %p424 = scmp.lt.s32.totalorder %s419, 31
      %s425 = scalar_select %p424, %s419, 31
      %s426 = smul.addr %s423, 32
      %s427 = sadd.s32 %s425, %s426
      %s428 = smul.addr %s421, 64
      %s429 = sadd.s32 %s427, %s428
      %s430 = smul.addr %s429, 8
      %s431 = scalar_lea.vmem %s1, %s430
      %s432 = smul.u32 16, %s24
      %s433 = smul.u32 128, %s24
      %p434 = scmp.lt.s32.totalorder %s22, 3
      %s435 = scalar_select %p434, %s22, 3
      %p436 = scmp.lt.s32.totalorder %s23, 1
      %s437 = scalar_select %p436, %s23, 1
      %p438 = scmp.lt.s32.totalorder %s433, 255
      %s439 = scalar_select %p438, %s433, 255
      %s440 = smul.addr %s439, 2
      %s441 = smul.addr %s437, 512
      %s442 = sadd.s32 %s440, %s441
      %s443 = smul.addr %s435, 1024
      %s444 = sadd.s32 %s442, %s443
      %s445 = smul.addr %s444, 8
      %s446 = scalar_lea.vmem %s2, %s445
      %s447 = smul.u32 128, %s24
      %p448 = scmp.lt.s32.totalorder %s22, 3
      %s449 = scalar_select %p448, %s22, 3
      %s450 = smul.addr %s449, 2
      %s451 = smul.addr %s450, 8
      %s452 = scalar_lea.vmem %s3, %s451
      %p453 = scmp.lt.s32.totalorder %s22, 3
      %s454 = scalar_select %p453, %s22, 3
      %s455 = scalar_lea.vmem %s4, %s454
      %p456 = scmp.lt.s32.totalorder %s22, 3
      %s457 = scalar_select %p456, %s22, 3
      %s458 = scalar_lea.vmem %s5, %s457
      %s459 = smul.u32 16, %s24
      %p460 = scmp.lt.s32.totalorder %s22, 3
      %s461 = scalar_select %p460, %s22, 3
      %p462 = scmp.lt.s32.totalorder %s23, 1
      %s463 = scalar_select %p462, %s23, 1
      %p464 = scmp.lt.s32.totalorder %s459, 31
      %s465 = scalar_select %p464, %s459, 31
      %s466 = smul.addr %s463, 32
      %s467 = sadd.s32 %s465, %s466
      %s468 = smul.addr %s461, 64
      %s469 = sadd.s32 %s467, %s468
      %s470 = smul.addr %s469, 8
      %s471 = scalar_lea.vmem %s6, %s470
      %s472 = smul.u32 16, %s24
      %p473 = scmp.eq.s32.totalorder %s24, 0
      // Predicated region
      $region45: #{ss2d_local_forward.8} parent=43 // pred_check
        %p474 = pneg %p473
      $region46: #{ss2d_local_forward.8} parent=43 // pred_check_branch
        %476 = sbr.rel (%p474) target = $region48
      $region47: #{ss2d_local_forward.8} parent=43 // pred_region
        %vm477 = vcmask 64512
        %478 = vst.msk [vmem:[#allocation2] sm:$0xff] %vm477, 0.0
        %479 = vst.msk [vmem:[#allocation2 + $0x8] sm:$0xff] %vm477, 0.0
      $region48: #{ss2d_local_forward.8} parent=43 // pred_fallthru
        _
      %v480 = vld [vmem:[%s431] sm:$0xff]
      %v481 = vld [vmem:[%s431 + $0x8] sm:$0xff]
      %v482 = vld [vmem:[%s431 + $0x10] sm:$0xff]
      %v483 = vld [vmem:[%s431 + $0x18] sm:$0xff]
      %v484 = vld [vmem:[%s431 + $0x20] sm:$0xff]
      %v485 = vld [vmem:[%s431 + $0x28] sm:$0xff]
      %v486 = vld [vmem:[%s431 + $0x30] sm:$0xff]
      %v487 = vld [vmem:[%s431 + $0x38] sm:$0xff]
      %v488 = vld [vmem:[%s431 + $0x40] sm:$0xff]
      %v489 = vld [vmem:[%s431 + $0x48] sm:$0xff]
      %v490 = vld [vmem:[%s431 + $0x50] sm:$0xff]
      %v491 = vld [vmem:[%s431 + $0x58] sm:$0xff]
      %v492 = vld [vmem:[%s431 + $0x60] sm:$0xff]
      %v493 = vld [vmem:[%s431 + $0x68] sm:$0xff]
      %v494 = vld [vmem:[%s431 + $0x70] sm:$0xff]
      %v495 = vld [vmem:[%s431 + $0x78] sm:$0xff]
      %v496 = vld [vmem:[%s455] sm:$0x1]
      %v498 = vlaneseq
      %v499 = vshrl.u32 %v498, 7
      %v500 = vsub.s32 0, %v499
      %v501 = vrot.slane %v496, %v500
      %v503 = vadd.f32 %v480, %v501
      %v504 = vadd.f32 %v481, %v501
      %v505 = vadd.f32 %v482, %v501
      %v506 = vadd.f32 %v483, %v501
      %v507 = vadd.f32 %v484, %v501
      %v508 = vadd.f32 %v485, %v501
      %v509 = vadd.f32 %v486, %v501
      %v510 = vadd.f32 %v487, %v501
      %v511 = vadd.f32 %v488, %v501
      %v512 = vadd.f32 %v489, %v501
      %v513 = vadd.f32 %v490, %v501
      %v514 = vadd.f32 %v491, %v501
      %v515 = vadd.f32 %v492, %v501
      %v516 = vadd.f32 %v493, %v501
      %v517 = vadd.f32 %v494, %v501
      %v518 = vadd.f32 %v495, %v501
      %v519 = vmax.f32 %v503, 0.0
      %v520 = vmax.f32 %v504, 0.0
      %v521 = vmax.f32 %v505, 0.0
      %v522 = vmax.f32 %v506, 0.0
      %v523 = vmax.f32 %v507, 0.0
      %v524 = vmax.f32 %v508, 0.0
      %v525 = vmax.f32 %v509, 0.0
      %v526 = vmax.f32 %v510, 0.0
      %v527 = vmax.f32 %v511, 0.0
      %v528 = vmax.f32 %v512, 0.0
      %v529 = vmax.f32 %v513, 0.0
      %v530 = vmax.f32 %v514, 0.0
      %v531 = vmax.f32 %v515, 0.0
      %v532 = vmax.f32 %v516, 0.0
      %v533 = vmax.f32 %v517, 0.0
      %v534 = vmax.f32 %v518, 0.0
      %vm535 = vcmp.ne.f32.partialorder %v503, %v503
      %vm536 = vcmp.ne.f32.partialorder %v504, %v504
      %vm537 = vcmp.ne.f32.partialorder %v505, %v505
      %vm538 = vcmp.ne.f32.partialorder %v506, %v506
      %vm539 = vcmp.ne.f32.partialorder %v507, %v507
      %vm540 = vcmp.ne.f32.partialorder %v508, %v508
      %vm541 = vcmp.ne.f32.partialorder %v509, %v509
      %vm542 = vcmp.ne.f32.partialorder %v510, %v510
      %vm543 = vcmp.ne.f32.partialorder %v511, %v511
      %vm544 = vcmp.ne.f32.partialorder %v512, %v512
      %vm545 = vcmp.ne.f32.partialorder %v513, %v513
      %vm546 = vcmp.ne.f32.partialorder %v514, %v514
      %vm547 = vcmp.ne.f32.partialorder %v515, %v515
      %vm548 = vcmp.ne.f32.partialorder %v516, %v516
      %vm549 = vcmp.ne.f32.partialorder %v517, %v517
      %vm550 = vcmp.ne.f32.partialorder %v518, %v518
      %v551 = vadd.f32 %v503, 0.0
      %v552 = vadd.f32 %v504, 0.0
      %v553 = vadd.f32 %v505, 0.0
      %v554 = vadd.f32 %v506, 0.0
      %v555 = vadd.f32 %v507, 0.0
      %v556 = vadd.f32 %v508, 0.0
      %v557 = vadd.f32 %v509, 0.0
      %v558 = vadd.f32 %v510, 0.0
      %v559 = vadd.f32 %v511, 0.0
      %v560 = vadd.f32 %v512, 0.0
      %v561 = vadd.f32 %v513, 0.0
      %v562 = vadd.f32 %v514, 0.0
      %v563 = vadd.f32 %v515, 0.0
      %v564 = vadd.f32 %v516, 0.0
      %v565 = vadd.f32 %v517, 0.0
      %v566 = vadd.f32 %v518, 0.0
      %v567 = vand.u32 2147483647, %v503
      %v568 = vand.u32 2147483647, %v504
      %v569 = vand.u32 2147483647, %v505
      %v570 = vand.u32 2147483647, %v506
      %v571 = vand.u32 2147483647, %v507
      %v572 = vand.u32 2147483647, %v508
      %v573 = vand.u32 2147483647, %v509
      %v574 = vand.u32 2147483647, %v510
      %v575 = vand.u32 2147483647, %v511
      %v576 = vand.u32 2147483647, %v512
      %v577 = vand.u32 2147483647, %v513
      %v578 = vand.u32 2147483647, %v514
      %v579 = vand.u32 2147483647, %v515
      %v580 = vand.u32 2147483647, %v516
      %v581 = vand.u32 2147483647, %v517
      %v582 = vand.u32 2147483647, %v518
      %v583 = vsub.f32 0.0, %v567
      %v584 = vsub.f32 0.0, %v568
      %v585 = vsub.f32 0.0, %v569
      %v586 = vsub.f32 0.0, %v570
      %v587 = vsub.f32 0.0, %v571
      %v588 = vsub.f32 0.0, %v572
      %v589 = vsub.f32 0.0, %v573
      %v590 = vsub.f32 0.0, %v574
      %v591 = vsub.f32 0.0, %v575
      %v592 = vsub.f32 0.0, %v576
      %v593 = vsub.f32 0.0, %v577
      %v594 = vsub.f32 0.0, %v578
      %v595 = vsub.f32 0.0, %v579
      %v596 = vsub.f32 0.0, %v580
      %v597 = vsub.f32 0.0, %v581
      %v598 = vsub.f32 0.0, %v582
      %v599 = vmul.f32 %v583, 1.442695
      %v600 = vpow.pop %v599
      %v601 = vmul.f32 %v584, 1.442695
      %v602 = vpow.pop %v601
      %v603 = vmul.f32 %v585, 1.442695
      %v604 = vpow.pop %v603
      %v605 = vmul.f32 %v586, 1.442695
      %v606 = vpow.pop %v605
      %v607 = vmul.f32 %v587, 1.442695
      %v608 = vpow.pop %v607
      %v609 = vmul.f32 %v588, 1.442695
      %v610 = vpow.pop %v609
      %v611 = vmul.f32 %v589, 1.442695
      %v612 = vpow.pop %v611
      %v613 = vmul.f32 %v590, 1.442695
      %v614 = vpow.pop %v613
      %v615 = vmul.f32 %v591, 1.442695
      %v616 = vpow.pop %v615
      %v617 = vmul.f32 %v592, 1.442695
      %v618 = vpow.pop %v617
      %v619 = vmul.f32 %v593, 1.442695
      %v620 = vpow.pop %v619
      %v621 = vmul.f32 %v594, 1.442695
      %v622 = vpow.pop %v621
      %v623 = vmul.f32 %v595, 1.442695
      %v624 = vpow.pop %v623
      %v625 = vmul.f32 %v596, 1.442695
      %v626 = vpow.pop %v625
      %v627 = vmul.f32 %v597, 1.442695
      %v628 = vpow.pop %v627
      %v629 = vmul.f32 %v598, 1.442695
      %v630 = vpow.pop %v629
      %v631 = vadd.f32 %v600, 1.0
      %v632 = vlog2.pop %v631
      %v633 = vmul.f32 %v632, 0.6931472
      %v634 = vmul.f32 -0.5, %v600
      %v635 = vadd.f32 %v634, 1.0
      %v636 = vmul.f32 %v635, %v600
      %v637 = vand.u32 2147483647, %v600
      %vm638 = vcmp.lt.f32.partialorder %v637, 0.0004427343
      %v639 = vsel %vm638, %v636, %v633
      %v640 = vadd.f32 %v602, 1.0
      %v641 = vlog2.pop %v640
      %v642 = vmul.f32 %v641, 0.6931472
      %v643 = vmul.f32 -0.5, %v602
      %v644 = vadd.f32 %v643, 1.0
      %v645 = vmul.f32 %v644, %v602
      %v646 = vand.u32 2147483647, %v602
      %vm647 = vcmp.lt.f32.partialorder %v646, 0.0004427343
      %v648 = vsel %vm647, %v645, %v642
      %v649 = vadd.f32 %v604, 1.0
      %v650 = vlog2.pop %v649
      %v651 = vmul.f32 %v650, 0.6931472
      %v652 = vmul.f32 -0.5, %v604
      %v653 = vadd.f32 %v652, 1.0
      %v654 = vmul.f32 %v653, %v604
      %v655 = vand.u32 2147483647, %v604
      %vm656 = vcmp.lt.f32.partialorder %v655, 0.0004427343
      %v657 = vsel %vm656, %v654, %v651
      %v658 = vadd.f32 %v606, 1.0
      %v659 = vlog2.pop %v658
      %v660 = vmul.f32 %v659, 0.6931472
      %v661 = vmul.f32 -0.5, %v606
      %v662 = vadd.f32 %v661, 1.0
      %v663 = vmul.f32 %v662, %v606
      %v664 = vand.u32 2147483647, %v606
      %vm665 = vcmp.lt.f32.partialorder %v664, 0.0004427343
      %v666 = vsel %vm665, %v663, %v660
      %v667 = vadd.f32 %v608, 1.0
      %v668 = vlog2.pop %v667
      %v669 = vmul.f32 %v668, 0.6931472
      %v670 = vmul.f32 -0.5, %v608
      %v671 = vadd.f32 %v670, 1.0
      %v672 = vmul.f32 %v671, %v608
      %v673 = vand.u32 2147483647, %v608
      %vm674 = vcmp.lt.f32.partialorder %v673, 0.0004427343
      %v675 = vsel %vm674, %v672, %v669
      %v676 = vadd.f32 %v610, 1.0
      %v677 = vlog2.pop %v676
      %v678 = vmul.f32 %v677, 0.6931472
      %v679 = vmul.f32 -0.5, %v610
      %v680 = vadd.f32 %v679, 1.0
      %v681 = vmul.f32 %v680, %v610
      %v682 = vand.u32 2147483647, %v610
      %vm683 = vcmp.lt.f32.partialorder %v682, 0.0004427343
      %v684 = vsel %vm683, %v681, %v678
      %v685 = vadd.f32 %v612, 1.0
      %v686 = vlog2.pop %v685
      %v687 = vmul.f32 %v686, 0.6931472
      %v688 = vmul.f32 -0.5, %v612
      %v689 = vadd.f32 %v688, 1.0
      %v690 = vmul.f32 %v689, %v612
      %v691 = vand.u32 2147483647, %v612
      %vm692 = vcmp.lt.f32.partialorder %v691, 0.0004427343
      %v693 = vsel %vm692, %v690, %v687
      %v694 = vadd.f32 %v614, 1.0
      %v695 = vlog2.pop %v694
      %v696 = vmul.f32 %v695, 0.6931472
      %v697 = vmul.f32 -0.5, %v614
      %v698 = vadd.f32 %v697, 1.0
      %v699 = vmul.f32 %v698, %v614
      %v700 = vand.u32 2147483647, %v614
      %vm701 = vcmp.lt.f32.partialorder %v700, 0.0004427343
      %v702 = vsel %vm701, %v699, %v696
      %v703 = vadd.f32 %v616, 1.0
      %v704 = vlog2.pop %v703
      %v705 = vmul.f32 %v704, 0.6931472
      %v706 = vmul.f32 -0.5, %v616
      %v707 = vadd.f32 %v706, 1.0
      %v708 = vmul.f32 %v707, %v616
      %v709 = vand.u32 2147483647, %v616
      %vm710 = vcmp.lt.f32.partialorder %v709, 0.0004427343
      %v711 = vsel %vm710, %v708, %v705
      %v712 = vadd.f32 %v618, 1.0
      %v713 = vlog2.pop %v712
      %v714 = vmul.f32 %v713, 0.6931472
      %v715 = vmul.f32 -0.5, %v618
      %v716 = vadd.f32 %v715, 1.0
      %v717 = vmul.f32 %v716, %v618
      %v718 = vand.u32 2147483647, %v618
      %vm719 = vcmp.lt.f32.partialorder %v718, 0.0004427343
      %v720 = vsel %vm719, %v717, %v714
      %v721 = vadd.f32 %v620, 1.0
      %v722 = vlog2.pop %v721
      %v723 = vmul.f32 %v722, 0.6931472
      %v724 = vmul.f32 -0.5, %v620
      %v725 = vadd.f32 %v724, 1.0
      %v726 = vmul.f32 %v725, %v620
      %v727 = vand.u32 2147483647, %v620
      %vm728 = vcmp.lt.f32.partialorder %v727, 0.0004427343
      %v729 = vsel %vm728, %v726, %v723
      %v730 = vadd.f32 %v622, 1.0
      %v731 = vlog2.pop %v730
      %v732 = vmul.f32 %v731, 0.6931472
      %v733 = vmul.f32 -0.5, %v622
      %v734 = vadd.f32 %v733, 1.0
      %v735 = vmul.f32 %v734, %v622
      %v736 = vand.u32 2147483647, %v622
      %vm737 = vcmp.lt.f32.partialorder %v736, 0.0004427343
      %v738 = vsel %vm737, %v735, %v732
      %v739 = vadd.f32 %v624, 1.0
      %v740 = vlog2.pop %v739
      %v741 = vmul.f32 %v740, 0.6931472
      %v742 = vmul.f32 -0.5, %v624
      %v743 = vadd.f32 %v742, 1.0
      %v744 = vmul.f32 %v743, %v624
      %v745 = vand.u32 2147483647, %v624
      %vm746 = vcmp.lt.f32.partialorder %v745, 0.0004427343
      %v747 = vsel %vm746, %v744, %v741
      %v748 = vadd.f32 %v626, 1.0
      %v749 = vlog2.pop %v748
      %v750 = vmul.f32 %v749, 0.6931472
      %v751 = vmul.f32 -0.5, %v626
      %v752 = vadd.f32 %v751, 1.0
      %v753 = vmul.f32 %v752, %v626
      %v754 = vand.u32 2147483647, %v626
      %vm755 = vcmp.lt.f32.partialorder %v754, 0.0004427343
      %v756 = vsel %vm755, %v753, %v750
      %v757 = vadd.f32 %v628, 1.0
      %v758 = vlog2.pop %v757
      %v759 = vmul.f32 %v758, 0.6931472
      %v760 = vmul.f32 -0.5, %v628
      %v761 = vadd.f32 %v760, 1.0
      %v762 = vmul.f32 %v761, %v628
      %v763 = vand.u32 2147483647, %v628
      %vm764 = vcmp.lt.f32.partialorder %v763, 0.0004427343
      %v765 = vsel %vm764, %v762, %v759
      %v766 = vadd.f32 %v630, 1.0
      %v767 = vlog2.pop %v766
      %v768 = vmul.f32 %v767, 0.6931472
      %v769 = vmul.f32 -0.5, %v630
      %v770 = vadd.f32 %v769, 1.0
      %v771 = vmul.f32 %v770, %v630
      %v772 = vand.u32 2147483647, %v630
      %vm773 = vcmp.lt.f32.partialorder %v772, 0.0004427343
      %v774 = vsel %vm773, %v771, %v768
      %v775 = vadd.f32 %v519, %v639
      %v776 = vadd.f32 %v520, %v648
      %v777 = vadd.f32 %v521, %v657
      %v778 = vadd.f32 %v522, %v666
      %v779 = vadd.f32 %v523, %v675
      %v780 = vadd.f32 %v524, %v684
      %v781 = vadd.f32 %v525, %v693
      %v782 = vadd.f32 %v526, %v702
      %v783 = vadd.f32 %v527, %v711
      %v784 = vadd.f32 %v528, %v720
      %v785 = vadd.f32 %v529, %v729
      %v786 = vadd.f32 %v530, %v738
      %v787 = vadd.f32 %v531, %v747
      %v788 = vadd.f32 %v532, %v756
      %v789 = vadd.f32 %v533, %v765
      %v790 = vadd.f32 %v534, %v774
      %v791 = vsel %vm535, %v551, %v775
      %v792 = vsel %vm536, %v552, %v776
      %v793 = vsel %vm537, %v553, %v777
      %v794 = vsel %vm538, %v554, %v778
      %v795 = vsel %vm539, %v555, %v779
      %v796 = vsel %vm540, %v556, %v780
      %v797 = vsel %vm541, %v557, %v781
      %v798 = vsel %vm542, %v558, %v782
      %v799 = vsel %vm543, %v559, %v783
      %v800 = vsel %vm544, %v560, %v784
      %v801 = vsel %vm545, %v561, %v785
      %v802 = vsel %vm546, %v562, %v786
      %v803 = vsel %vm547, %v563, %v787
      %v804 = vsel %vm548, %v564, %v788
      %v805 = vsel %vm549, %v565, %v789
      %v806 = vsel %vm550, %v566, %v790
      %vm807 = vcmask 64512
      %808 = vst.msk [vmem:[#allocation3] sm:$0xff] %vm807, %v791
      %809 = vst.msk [vmem:[#allocation3 + $0x8] sm:$0xff] %vm807, %v792
      %810 = vst.msk [vmem:[#allocation3 + $0x10] sm:$0xff] %vm807, %v793
      %811 = vst.msk [vmem:[#allocation3 + $0x18] sm:$0xff] %vm807, %v794
      %812 = vst.msk [vmem:[#allocation3 + $0x20] sm:$0xff] %vm807, %v795
      %813 = vst.msk [vmem:[#allocation3 + $0x28] sm:$0xff] %vm807, %v796
      %814 = vst.msk [vmem:[#allocation3 + $0x30] sm:$0xff] %vm807, %v797
      %815 = vst.msk [vmem:[#allocation3 + $0x38] sm:$0xff] %vm807, %v798
      %816 = vst.msk [vmem:[#allocation3 + $0x40] sm:$0xff] %vm807, %v799
      %817 = vst.msk [vmem:[#allocation3 + $0x48] sm:$0xff] %vm807, %v800
      %818 = vst.msk [vmem:[#allocation3 + $0x50] sm:$0xff] %vm807, %v801
      %819 = vst.msk [vmem:[#allocation3 + $0x58] sm:$0xff] %vm807, %v802
      %820 = vst.msk [vmem:[#allocation3 + $0x60] sm:$0xff] %vm807, %v803
      %821 = vst.msk [vmem:[#allocation3 + $0x68] sm:$0xff] %vm807, %v804
      %822 = vst.msk [vmem:[#allocation3 + $0x70] sm:$0xff] %vm807, %v805
      %823 = vst.msk [vmem:[#allocation3 + $0x78] sm:$0xff] %vm807, %v806
      %v824 = vld [vmem:[%s452] sm:$0xff]
      %v825 = vld [vmem:[%s452 + $0x8] sm:$0xff]
      %v826 = vld [vmem:[%s458] sm:$0x1]
      %v827 = vld [vmem:[#allocation2] sm:$0xff]
      %v828 = vld [vmem:[#allocation2 + $0x8] sm:$0xff]
      loop: start=0, step=1, limit=16
      $region49: #{ss2d_local_forward.8} parent=43 // loop_pre_header
        _
      $region50: #{ss2d_local_forward.8} parent=43 // loop_header
        %s830 = sphi 0, %s834
        %p831 = scmp.ge.s32.totalorder %s830, 16
        %v835 = vphi %v827, %v1310
        %v836 = vphi %v828, %v1311
      $region51: #{ss2d_local_forward.8} parent=43 // loop_header_branch
        %833 = sbr.rel (%p831) target = $region55
      $region52: #{ss2d_local_forward.8} parent=43 // loop_body
        %s837 = smul.u32 %s830, 8
        %s838 = scalar_lea.vmem %s417, %s837
        %v839 = vld [vmem:[%s838] sm:$0x1]
        %s840 = scalar_lea.vmem [#allocation3], %s837
        %v841 = vld [vmem:[%s840] sm:$0x1]
        %s842 = smul.u32 %s837, 16
        %s843 = scalar_lea.vmem %s446, %s842
        %v844 = vld [vmem:[%s843] sm:$0xff]
        %v845 = vld [vmem:[%s843 + $0x8] sm:$0xff]
        %847 = vset.pattern.permute.xlu0 0
        %848 = vperm.xlu0 %847, %v844
        %v849 = vpop.permute.xlu0 %848
        %852 = vset.pattern.permute.xlu0 0
        %853 = vperm.xlu0 %852, %v845
        %v854 = vpop.permute.xlu0 %853
        %856 = vset.pattern.permute.xlu0 1
        %857 = vperm.xlu0 %856, %v844
        %v858 = vpop.permute.xlu0 %857
        %860 = vset.pattern.permute.xlu0 1
        %861 = vperm.xlu0 %860, %v845
        %v862 = vpop.permute.xlu0 %861
        %v864 = vlaneseq
        %v865 = vshrl.u32 %v864, 7
        %v866 = vsub.s32 0, %v865
        %v867 = vrot.slane %v841, %v866
        %v868 = vmul.f32 %v824, %v867
        %v869 = vmul.f32 %v825, %v867
        %v870 = vmul.f32 %v868, 1.442695
        %v871 = vpow.pop %v870
        %v872 = vmul.f32 %v869, 1.442695
        %v873 = vpow.pop %v872
        %v874 = vmul.f32 %v871, %v835
        %v875 = vmul.f32 %v873, %v836
        %v876 = vmul.f32 %v841, %v839
        %v877 = vlaneseq
        %v878 = vshrl.u32 %v877, 7
        %v879 = vsub.s32 0, %v878
        %v880 = vrot.slane %v876, %v879
        %v881 = vmul.f32 %v880, %v849
        %v882 = vmul.f32 %v880, %v854
        %v883 = vadd.f32 %v874, %v881
        %v884 = vadd.f32 %v875, %v882
        %v885 = vmul.f32 %v883, %v858
        %v886 = vmul.f32 %v884, %v862
        %v887 = vsel %vm807, %v885, 0.0
        %v888 = vsel %vm807, %v886, 0.0
        %v889 = vadd.f32 %v887, %v888
        %v890 = vrot.slane %v889, 4
        %v891 = vadd.f32 %v889, %v890
        %v892 = vrot.slane %v891, 2
        %v893 = vadd.f32 %v891, %v892
        %v894 = vrot.slane %v893, 1
        %v895 = vadd.f32 %v893, %v894
        %v896 = vmul.f32 %v839, %v826
        %v897 = vadd.f32 %v895, %v896
        %s898 = sadd.s32 %s837, 1
        %s899 = scalar_lea.vmem %s417, %s898
        %v900 = vld [vmem:[%s899] sm:$0x1]
        %s901 = scalar_lea.vmem [#allocation3], %s898
        %v902 = vld [vmem:[%s901] sm:$0x1]
        %s903 = smul.u32 %s898, 16
        %s904 = scalar_lea.vmem %s446, %s903
        %v905 = vld [vmem:[%s904] sm:$0xff]
        %v906 = vld [vmem:[%s904 + $0x8] sm:$0xff]
        %908 = vset.pattern.permute.xlu0 0
        %909 = vperm.xlu0 %908, %v905
        %v910 = vpop.permute.xlu0 %909
        %913 = vset.pattern.permute.xlu0 0
        %914 = vperm.xlu0 %913, %v906
        %v915 = vpop.permute.xlu0 %914
        %917 = vset.pattern.permute.xlu0 1
        %918 = vperm.xlu0 %917, %v905
        %v919 = vpop.permute.xlu0 %918
        %921 = vset.pattern.permute.xlu0 1
        %922 = vperm.xlu0 %921, %v906
        %v923 = vpop.permute.xlu0 %922
        %v925 = vlaneseq
        %v926 = vshrl.u32 %v925, 7
        %v927 = vsub.s32 0, %v926
        %v928 = vrot.slane %v902, %v927
        %v929 = vmul.f32 %v824, %v928
        %v930 = vmul.f32 %v825, %v928
        %v931 = vmul.f32 %v929, 1.442695
        %v932 = vpow.pop %v931
        %v933 = vmul.f32 %v930, 1.442695
        %v934 = vpow.pop %v933
        %v935 = vmul.f32 %v932, %v883
        %v936 = vmul.f32 %v934, %v884
        %v937 = vmul.f32 %v902, %v900
        %v938 = vlaneseq
        %v939 = vshrl.u32 %v938, 7
        %v940 = vsub.s32 0, %v939
        %v941 = vrot.slane %v937, %v940
        %v942 = vmul.f32 %v941, %v910
        %v943 = vmul.f32 %v941, %v915
        %v944 = vadd.f32 %v935, %v942
        %v945 = vadd.f32 %v936, %v943
        %v946 = vmul.f32 %v944, %v919
        %v947 = vmul.f32 %v945, %v923
        %v948 = vsel %vm807, %v946, 0.0
        %v949 = vsel %vm807, %v947, 0.0
        %v950 = vadd.f32 %v948, %v949
        %v951 = vrot.slane %v950, 4
        %v952 = vadd.f32 %v950, %v951
        %v953 = vrot.slane %v952, 2
        %v954 = vadd.f32 %v952, %v953
        %v955 = vrot.slane %v954, 1
        %v956 = vadd.f32 %v954, %v955
        %v957 = vmul.f32 %v900, %v826
        %v958 = vadd.f32 %v956, %v957
        %s959 = sadd.s32 %s837, 2
        %s960 = scalar_lea.vmem %s417, %s959
        %v961 = vld [vmem:[%s960] sm:$0x1]
        %s962 = scalar_lea.vmem [#allocation3], %s959
        %v963 = vld [vmem:[%s962] sm:$0x1]
        %s964 = smul.u32 %s959, 16
        %s965 = scalar_lea.vmem %s446, %s964
        %v966 = vld [vmem:[%s965] sm:$0xff]
        %v967 = vld [vmem:[%s965 + $0x8] sm:$0xff]
        %969 = vset.pattern.permute.xlu0 0
        %970 = vperm.xlu0 %969, %v966
        %v971 = vpop.permute.xlu0 %970
        %974 = vset.pattern.permute.xlu0 0
        %975 = vperm.xlu0 %974, %v967
        %v976 = vpop.permute.xlu0 %975
        %978 = vset.pattern.permute.xlu0 1
        %979 = vperm.xlu0 %978, %v966
        %v980 = vpop.permute.xlu0 %979
        %982 = vset.pattern.permute.xlu0 1
        %983 = vperm.xlu0 %982, %v967
        %v984 = vpop.permute.xlu0 %983
        %v986 = vlaneseq
        %v987 = vshrl.u32 %v986, 7
        %v988 = vsub.s32 0, %v987
        %v989 = vrot.slane %v963, %v988
        %v990 = vmul.f32 %v824, %v989
        %v991 = vmul.f32 %v825, %v989
        %v992 = vmul.f32 %v990, 1.442695
        %v993 = vpow.pop %v992
        %v994 = vmul.f32 %v991, 1.442695
        %v995 = vpow.pop %v994
        %v996 = vmul.f32 %v993, %v944
        %v997 = vmul.f32 %v995, %v945
        %v998 = vmul.f32 %v963, %v961
        %v999 = vlaneseq
        %v1000 = vshrl.u32 %v999, 7
        %v1001 = vsub.s32 0, %v1000
        %v1002 = vrot.slane %v998, %v1001
        %v1003 = vmul.f32 %v1002, %v971
        %v1004 = vmul.f32 %v1002, %v976
        %v1005 = vadd.f32 %v996, %v1003
        %v1006 = vadd.f32 %v997, %v1004
        %v1007 = vmul.f32 %v1005, %v980
        %v1008 = vmul.f32 %v1006, %v984
        %v1009 = vsel %vm807, %v1007, 0.0
        %v1010 = vsel %vm807, %v1008, 0.0
        %v1011 = vadd.f32 %v1009, %v1010
        %v1012 = vrot.slane %v1011, 4
        %v1013 = vadd.f32 %v1011, %v1012
        %v1014 = vrot.slane %v1013, 2
        %v1015 = vadd.f32 %v1013, %v1014
        %v1016 = vrot.slane %v1015, 1
        %v1017 = vadd.f32 %v1015, %v1016
        %v1018 = vmul.f32 %v961, %v826
        %v1019 = vadd.f32 %v1017, %v1018
        %s1020 = sadd.s32 %s837, 3
        %s1021 = scalar_lea.vmem %s417, %s1020
        %v1022 = vld [vmem:[%s1021] sm:$0x1]
        %s1023 = scalar_lea.vmem [#allocation3], %s1020
        %v1024 = vld [vmem:[%s1023] sm:$0x1]
        %s1025 = smul.u32 %s1020, 16
        %s1026 = scalar_lea.vmem %s446, %s1025
        %v1027 = vld [vmem:[%s1026] sm:$0xff]
        %v1028 = vld [vmem:[%s1026 + $0x8] sm:$0xff]
        %1030 = vset.pattern.permute.xlu0 0
        %1031 = vperm.xlu0 %1030, %v1027
        %v1032 = vpop.permute.xlu0 %1031
        %1035 = vset.pattern.permute.xlu0 0
        %1036 = vperm.xlu0 %1035, %v1028
        %v1037 = vpop.permute.xlu0 %1036
        %1039 = vset.pattern.permute.xlu0 1
        %1040 = vperm.xlu0 %1039, %v1027
        %v1041 = vpop.permute.xlu0 %1040
        %1043 = vset.pattern.permute.xlu0 1
        %1044 = vperm.xlu0 %1043, %v1028
        %v1045 = vpop.permute.xlu0 %1044
        %v1047 = vlaneseq
        %v1048 = vshrl.u32 %v1047, 7
        %v1049 = vsub.s32 0, %v1048
        %v1050 = vrot.slane %v1024, %v1049
        %v1051 = vmul.f32 %v824, %v1050
        %v1052 = vmul.f32 %v825, %v1050
        %v1053 = vmul.f32 %v1051, 1.442695
        %v1054 = vpow.pop %v1053
        %v1055 = vmul.f32 %v1052, 1.442695
        %v1056 = vpow.pop %v1055
        %v1057 = vmul.f32 %v1054, %v1005
        %v1058 = vmul.f32 %v1056, %v1006
        %v1059 = vmul.f32 %v1024, %v1022
        %v1060 = vlaneseq
        %v1061 = vshrl.u32 %v1060, 7
        %v1062 = vsub.s32 0, %v1061
        %v1063 = vrot.slane %v1059, %v1062
        %v1064 = vmul.f32 %v1063, %v1032
        %v1065 = vmul.f32 %v1063, %v1037
        %v1066 = vadd.f32 %v1057, %v1064
        %v1067 = vadd.f32 %v1058, %v1065
        %v1068 = vmul.f32 %v1066, %v1041
        %v1069 = vmul.f32 %v1067, %v1045
        %v1070 = vsel %vm807, %v1068, 0.0
        %v1071 = vsel %vm807, %v1069, 0.0
        %v1072 = vadd.f32 %v1070, %v1071
        %v1073 = vrot.slane %v1072, 4
        %v1074 = vadd.f32 %v1072, %v1073
        %v1075 = vrot.slane %v1074, 2
        %v1076 = vadd.f32 %v1074, %v1075
        %v1077 = vrot.slane %v1076, 1
        %v1078 = vadd.f32 %v1076, %v1077
        %v1079 = vmul.f32 %v1022, %v826
        %v1080 = vadd.f32 %v1078, %v1079
        %s1081 = sadd.s32 %s837, 4
        %s1082 = scalar_lea.vmem %s417, %s1081
        %v1083 = vld [vmem:[%s1082] sm:$0x1]
        %s1084 = scalar_lea.vmem [#allocation3], %s1081
        %v1085 = vld [vmem:[%s1084] sm:$0x1]
        %s1086 = smul.u32 %s1081, 16
        %s1087 = scalar_lea.vmem %s446, %s1086
        %v1088 = vld [vmem:[%s1087] sm:$0xff]
        %v1089 = vld [vmem:[%s1087 + $0x8] sm:$0xff]
        %1091 = vset.pattern.permute.xlu0 0
        %1092 = vperm.xlu0 %1091, %v1088
        %v1093 = vpop.permute.xlu0 %1092
        %1096 = vset.pattern.permute.xlu0 0
        %1097 = vperm.xlu0 %1096, %v1089
        %v1098 = vpop.permute.xlu0 %1097
        %1100 = vset.pattern.permute.xlu0 1
        %1101 = vperm.xlu0 %1100, %v1088
        %v1102 = vpop.permute.xlu0 %1101
        %1104 = vset.pattern.permute.xlu0 1
        %1105 = vperm.xlu0 %1104, %v1089
        %v1106 = vpop.permute.xlu0 %1105
        %v1108 = vlaneseq
        %v1109 = vshrl.u32 %v1108, 7
        %v1110 = vsub.s32 0, %v1109
        %v1111 = vrot.slane %v1085, %v1110
        %v1112 = vmul.f32 %v824, %v1111
        %v1113 = vmul.f32 %v825, %v1111
        %v1114 = vmul.f32 %v1112, 1.442695
        %v1115 = vpow.pop %v1114
        %v1116 = vmul.f32 %v1113, 1.442695
        %v1117 = vpow.pop %v1116
        %v1118 = vmul.f32 %v1115, %v1066
        %v1119 = vmul.f32 %v1117, %v1067
        %v1120 = vmul.f32 %v1085, %v1083
        %v1121 = vlaneseq
        %v1122 = vshrl.u32 %v1121, 7
        %v1123 = vsub.s32 0, %v1122
        %v1124 = vrot.slane %v1120, %v1123
        %v1125 = vmul.f32 %v1124, %v1093
        %v1126 = vmul.f32 %v1124, %v1098
        %v1127 = vadd.f32 %v1118, %v1125
        %v1128 = vadd.f32 %v1119, %v1126
        %v1129 = vmul.f32 %v1127, %v1102
        %v1130 = vmul.f32 %v1128, %v1106
        %v1131 = vsel %vm807, %v1129, 0.0
        %v1132 = vsel %vm807, %v1130, 0.0
        %v1133 = vadd.f32 %v1131, %v1132
        %v1134 = vrot.slane %v1133, 4
        %v1135 = vadd.f32 %v1133, %v1134
        %v1136 = vrot.slane %v1135, 2
        %v1137 = vadd.f32 %v1135, %v1136
        %v1138 = vrot.slane %v1137, 1
        %v1139 = vadd.f32 %v1137, %v1138
        %v1140 = vmul.f32 %v1083, %v826
        %v1141 = vadd.f32 %v1139, %v1140
        %s1142 = sadd.s32 %s837, 5
        %s1143 = scalar_lea.vmem %s417, %s1142
        %v1144 = vld [vmem:[%s1143] sm:$0x1]
        %s1145 = scalar_lea.vmem [#allocation3], %s1142
        %v1146 = vld [vmem:[%s1145] sm:$0x1]
        %s1147 = smul.u32 %s1142, 16
        %s1148 = scalar_lea.vmem %s446, %s1147
        %v1149 = vld [vmem:[%s1148] sm:$0xff]
        %v1150 = vld [vmem:[%s1148 + $0x8] sm:$0xff]
        %1152 = vset.pattern.permute.xlu0 0
        %1153 = vperm.xlu0 %1152, %v1149
        %v1154 = vpop.permute.xlu0 %1153
        %1157 = vset.pattern.permute.xlu0 0
        %1158 = vperm.xlu0 %1157, %v1150
        %v1159 = vpop.permute.xlu0 %1158
        %1161 = vset.pattern.permute.xlu0 1
        %1162 = vperm.xlu0 %1161, %v1149
        %v1163 = vpop.permute.xlu0 %1162
        %1165 = vset.pattern.permute.xlu0 1
        %1166 = vperm.xlu0 %1165, %v1150
        %v1167 = vpop.permute.xlu0 %1166
        %v1169 = vlaneseq
        %v1170 = vshrl.u32 %v1169, 7
        %v1171 = vsub.s32 0, %v1170
        %v1172 = vrot.slane %v1146, %v1171
        %v1173 = vmul.f32 %v824, %v1172
        %v1174 = vmul.f32 %v825, %v1172
        %v1175 = vmul.f32 %v1173, 1.442695
        %v1176 = vpow.pop %v1175
        %v1177 = vmul.f32 %v1174, 1.442695
        %v1178 = vpow.pop %v1177
        %v1179 = vmul.f32 %v1176, %v1127
        %v1180 = vmul.f32 %v1178, %v1128
        %v1181 = vmul.f32 %v1146, %v1144
        %v1182 = vlaneseq
        %v1183 = vshrl.u32 %v1182, 7
        %v1184 = vsub.s32 0, %v1183
        %v1185 = vrot.slane %v1181, %v1184
        %v1186 = vmul.f32 %v1185, %v1154
        %v1187 = vmul.f32 %v1185, %v1159
        %v1188 = vadd.f32 %v1179, %v1186
        %v1189 = vadd.f32 %v1180, %v1187
        %v1190 = vmul.f32 %v1188, %v1163
        %v1191 = vmul.f32 %v1189, %v1167
        %v1192 = vsel %vm807, %v1190, 0.0
        %v1193 = vsel %vm807, %v1191, 0.0
        %v1194 = vadd.f32 %v1192, %v1193
        %v1195 = vrot.slane %v1194, 4
        %v1196 = vadd.f32 %v1194, %v1195
        %v1197 = vrot.slane %v1196, 2
        %v1198 = vadd.f32 %v1196, %v1197
        %v1199 = vrot.slane %v1198, 1
        %v1200 = vadd.f32 %v1198, %v1199
        %v1201 = vmul.f32 %v1144, %v826
        %v1202 = vadd.f32 %v1200, %v1201
        %s1203 = sadd.s32 %s837, 6
        %s1204 = scalar_lea.vmem %s417, %s1203
        %v1205 = vld [vmem:[%s1204] sm:$0x1]
        %s1206 = scalar_lea.vmem [#allocation3], %s1203
        %v1207 = vld [vmem:[%s1206] sm:$0x1]
        %s1208 = smul.u32 %s1203, 16
        %s1209 = scalar_lea.vmem %s446, %s1208
        %v1210 = vld [vmem:[%s1209] sm:$0xff]
        %v1211 = vld [vmem:[%s1209 + $0x8] sm:$0xff]
        %1213 = vset.pattern.permute.xlu0 0
        %1214 = vperm.xlu0 %1213, %v1210
        %v1215 = vpop.permute.xlu0 %1214
        %1218 = vset.pattern.permute.xlu0 0
        %1219 = vperm.xlu0 %1218, %v1211
        %v1220 = vpop.permute.xlu0 %1219
        %1222 = vset.pattern.permute.xlu0 1
        %1223 = vperm.xlu0 %1222, %v1210
        %v1224 = vpop.permute.xlu0 %1223
        %1226 = vset.pattern.permute.xlu0 1
        %1227 = vperm.xlu0 %1226, %v1211
        %v1228 = vpop.permute.xlu0 %1227
        %v1230 = vlaneseq
        %v1231 = vshrl.u32 %v1230, 7
        %v1232 = vsub.s32 0, %v1231
        %v1233 = vrot.slane %v1207, %v1232
        %v1234 = vmul.f32 %v824, %v1233
        %v1235 = vmul.f32 %v825, %v1233
        %v1236 = vmul.f32 %v1234, 1.442695
        %v1237 = vpow.pop %v1236
        %v1238 = vmul.f32 %v1235, 1.442695
        %v1239 = vpow.pop %v1238
        %v1240 = vmul.f32 %v1237, %v1188
        %v1241 = vmul.f32 %v1239, %v1189
        %v1242 = vmul.f32 %v1207, %v1205
        %v1243 = vlaneseq
        %v1244 = vshrl.u32 %v1243, 7
        %v1245 = vsub.s32 0, %v1244
        %v1246 = vrot.slane %v1242, %v1245
        %v1247 = vmul.f32 %v1246, %v1215
        %v1248 = vmul.f32 %v1246, %v1220
        %v1249 = vadd.f32 %v1240, %v1247
        %v1250 = vadd.f32 %v1241, %v1248
        %v1251 = vmul.f32 %v1249, %v1224
        %v1252 = vmul.f32 %v1250, %v1228
        %v1253 = vsel %vm807, %v1251, 0.0
        %v1254 = vsel %vm807, %v1252, 0.0
        %v1255 = vadd.f32 %v1253, %v1254
        %v1256 = vrot.slane %v1255, 4
        %v1257 = vadd.f32 %v1255, %v1256
        %v1258 = vrot.slane %v1257, 2
        %v1259 = vadd.f32 %v1257, %v1258
        %v1260 = vrot.slane %v1259, 1
        %v1261 = vadd.f32 %v1259, %v1260
        %v1262 = vmul.f32 %v1205, %v826
        %v1263 = vadd.f32 %v1261, %v1262
        %s1264 = sadd.s32 %s837, 7
        %s1265 = scalar_lea.vmem %s417, %s1264
        %v1266 = vld [vmem:[%s1265] sm:$0x1]
        %s1267 = scalar_lea.vmem [#allocation3], %s1264
        %v1268 = vld [vmem:[%s1267] sm:$0x1]
        %s1269 = smul.u32 %s1264, 16
        %s1270 = scalar_lea.vmem %s446, %s1269
        %v1271 = vld [vmem:[%s1270] sm:$0xff]
        %v1272 = vld [vmem:[%s1270 + $0x8] sm:$0xff]
        %1274 = vset.pattern.permute.xlu0 0
        %1275 = vperm.xlu0 %1274, %v1271
        %v1276 = vpop.permute.xlu0 %1275
        %1279 = vset.pattern.permute.xlu0 0
        %1280 = vperm.xlu0 %1279, %v1272
        %v1281 = vpop.permute.xlu0 %1280
        %1283 = vset.pattern.permute.xlu0 1
        %1284 = vperm.xlu0 %1283, %v1271
        %v1285 = vpop.permute.xlu0 %1284
        %1287 = vset.pattern.permute.xlu0 1
        %1288 = vperm.xlu0 %1287, %v1272
        %v1289 = vpop.permute.xlu0 %1288
        %v1291 = vlaneseq
        %v1292 = vshrl.u32 %v1291, 7
        %v1293 = vsub.s32 0, %v1292
        %v1294 = vrot.slane %v1268, %v1293
        %v1295 = vmul.f32 %v824, %v1294
        %v1296 = vmul.f32 %v825, %v1294
        %v1297 = vmul.f32 %v1295, 1.442695
        %v1298 = vpow.pop %v1297
        %v1299 = vmul.f32 %v1296, 1.442695
        %v1300 = vpow.pop %v1299
        %v1301 = vmul.f32 %v1298, %v1249
        %v1302 = vmul.f32 %v1300, %v1250
        %v1303 = vmul.f32 %v1268, %v1266
        %v1304 = vlaneseq
        %v1305 = vshrl.u32 %v1304, 7
        %v1306 = vsub.s32 0, %v1305
        %v1307 = vrot.slane %v1303, %v1306
        %v1308 = vmul.f32 %v1307, %v1276
        %v1309 = vmul.f32 %v1307, %v1281
        %v1310 = vadd.f32 %v1301, %v1308
        %v1311 = vadd.f32 %v1302, %v1309
        %v1312 = vmul.f32 %v1310, %v1285
        %v1313 = vmul.f32 %v1311, %v1289
        %v1314 = vsel %vm807, %v1312, 0.0
        %v1315 = vsel %vm807, %v1313, 0.0
        %v1316 = vadd.f32 %v1314, %v1315
        %v1317 = vrot.slane %v1316, 4
        %v1318 = vadd.f32 %v1316, %v1317
        %v1319 = vrot.slane %v1318, 2
        %v1320 = vadd.f32 %v1318, %v1319
        %v1321 = vrot.slane %v1320, 1
        %v1322 = vadd.f32 %v1320, %v1321
        %v1323 = vmul.f32 %v1266, %v826
        %v1324 = vadd.f32 %v1322, %v1323
        %v1326 = vrot.slane %v958, 7
        %v1329 = vrot.slane %v1019, 6
        %v1332 = vrot.slane %v1080, 5
        %v1335 = vrot.slane %v1141, 4
        %v1338 = vrot.slane %v1202, 3
        %v1341 = vrot.slane %v1263, 2
        %v1344 = vrot.slane %v1324, 1
        %vm1346 = vcmask 1040384
        %v1347 = vsel %vm1346, %v897, %v1326
        %vm1348 = vcmask 1041408
        %v1349 = vsel %vm1348, %v1347, %v1329
        %vm1350 = vcmask 1042432
        %v1351 = vsel %vm1350, %v1349, %v1332
        %vm1352 = vcmask 1043456
        %v1353 = vsel %vm1352, %v1351, %v1335
        %vm1354 = vcmask 1044480
        %v1355 = vsel %vm1354, %v1353, %v1338
        %vm1356 = vcmask 1045504
        %v1357 = vsel %vm1356, %v1355, %v1341
        %vm1358 = vcmask 1046528
        %v1359 = vsel %vm1358, %v1357, %v1344
        %s1360 = scalar_lea.vmem %s471, %s837
        %1361 = vst.msk [vmem:[%s1360] sm:$0xff] %vm807, %v1359
      $region53: #{ss2d_local_forward.8} parent=43 // loop_footer
        %s834 = sadd.s32 1, %s830
      $region54: #{ss2d_local_forward.8} parent=43 // loop_footer_branch
        %829 = sbr.rel target = $region50
      $region55: #{ss2d_local_forward.8} parent=43 // loop_exit
        _
      %1362 = vst.msk [vmem:[#allocation2] sm:$0xff] %vm807, %v835
      %1363 = vst.msk [vmem:[#allocation2 + $0x8] sm:$0xff] %vm807, %v836
      %s1364 = smul.u32 16, %s24
      %p1365 = scmp.lt.s32.totalorder %s22, 3
      %s1366 = scalar_select %p1365, %s22, 3
      %p1367 = scmp.lt.s32.totalorder %s23, 1
      %s1368 = scalar_select %p1367, %s23, 1
      %p1369 = scmp.lt.s32.totalorder %s1364, 31
      %s1370 = scalar_select %p1369, %s1364, 31
      %s1371 = smul.addr %s1368, 32
      %s1372 = sadd.s32 %s1370, %s1371
      %s1373 = smul.addr %s1366, 64
      %s1374 = sadd.s32 %s1372, %s1373
      %s1375 = smul.addr %s1374, 8
      %s1376 = scalar_lea.vmem %s6, %s1375
      // Predicated region
      $region56: #{ss2d_local_forward.8} parent=43 // pred_check
        %p1377 = pneg %p226
      $region57: #{ss2d_local_forward.8} parent=43 // pred_check_branch
        %1379 = sbr.rel (%p1377) target = $region59
      $region58: #{ss2d_local_forward.8} parent=43 // pred_region
        %s1380 = smul.u32 16, %s24
      $region59: #{ss2d_local_forward.8} parent=43 // pred_fallthru
        _
    $region44: #{ss2d_local_forward.8} parent=5 // pred_fallthru
      _
    %p1381 = scmp.le.s32.totalorder 2, %s12
    // Predicated region
    $region60: #{ss2d_local_forward.8} parent=5 // pred_check
      %p1382 = pneg %p1381
    $region61: #{ss2d_local_forward.8} parent=5 // pred_check_branch
      %1384 = sbr.rel (%p1382) target = $region63
    $region62: #{ss2d_local_forward.8} parent=5 // pred_region
      %s1385 = ssub.s32 %s12, 2
      // Predicated region
      $region64: #{ss2d_local_forward.8} parent=62 // pred_check
        %p1386 = pneg %p232
      $region65: #{ss2d_local_forward.8} parent=62 // pred_check_branch
        %1388 = sbr.rel (%p1386) target = $region67
      $region66: #{ss2d_local_forward.8} parent=62 // pred_region
        %s1389 = smul.u32 16, %s27
        %p1390 = scmp.lt.s32.totalorder %s25, 3
        %s1391 = scalar_select %p1390, %s25, 3
        %p1392 = scmp.lt.s32.totalorder %s26, 1
        %s1393 = scalar_select %p1392, %s26, 1
        %p1394 = scmp.lt.s32.totalorder %s1389, 31
        %s1395 = scalar_select %p1394, %s1389, 31
        %s1396 = smul.addr %s1393, 32
        %s1397 = sadd.s32 %s1395, %s1396
        %s1398 = smul.addr %s1391, 64
        %s1399 = sadd.s32 %s1397, %s1398
        %s1400 = smul.addr %s1399, 8
        %s1401 = scalar_lea.vmem %s6, %s1400
      $region67: #{ss2d_local_forward.8} parent=62 // pred_fallthru
        _
    $region63: #{ss2d_local_forward.8} parent=5 // pred_fallthru
      _
  $region6: #{ss2d_local_forward.8} parent=0 // loop_footer
    %s16 = sadd.s32 1, %s12
  $region7: #{ss2d_local_forward.8} parent=0 // loop_footer_branch
    %11 = sbr.rel target = $region3
  $region8: #{ss2d_local_forward.8} parent=0 // loop_exit
    _

</llo_original>
